<compile_context>
chip_gen: v6e
topology: v6e:2x2x1
jax: 0.10.0
libtpu: 0.0.40
codegen_flags: <defaults>
</compile_context>

<pallas_src>
import math

import jax
import jax.numpy as jnp
from jax.experimental import pallas as pl
from jax.experimental.pallas import tpu as pltpu

# ----------------------------- synthetic config -----------------------------
VOCAB = 100
MAX_POS = 64
HIDDEN = 128                 # lane-dense synthetic hidden (real module reports 768)
N_HEADS = 2
HEAD_DIM = HIDDEN // N_HEADS
FFN = 256
N_LAYERS = 2
LN_EPS = 1e-12


# ------------------------------ kernel helpers -------------------------------
def _layernorm(x, g, b):
    mu = jnp.mean(x, axis=-1, keepdims=True)
    var = jnp.mean((x - mu) ** 2, axis=-1, keepdims=True)
    return (x - mu) * jax.lax.rsqrt(var + LN_EPS) * g + b


# ------------------------------ fused BERT kernel -----------------------------
def bert_kernel(starts_ref,                                  # scalar-prefetch (SMEM)
                emb_ref, bias_ref, eg_ref, eb_ref,
                wqkv_ref, bqkv_ref, wo_ref, bo_ref, g1_ref, b1_ref,
                wi_ref, bi_ref, wf_ref, bf_ref, g2_ref, b2_ref,
                o_ref,
                ctx_ref, xbuf_ref):                          # VMEM scratch
    b = pl.program_id(0)
    S, H = emb_ref.shape[1], emb_ref.shape[2]
    L = wqkv_ref.shape[0]
    U = o_ref.shape[1]
    NH, DH = N_HEADS, H // N_HEADS

    # ---- embedding sum (precomputed in wrapper) -> LayerNorm, f32 ----
    x = _layernorm(emb_ref[0], eg_ref[...], eb_ref[...])         # (S, H) f32

    # Additive key mask for this batch row: 0 keep / -1e9 pad, shape (1, S).
    bias = bias_ref[0]

    for l in range(L):                                           # static layer loop
        # Fused QKV projection (bf16 MXU inputs, f32 accumulation).
        # 1/sqrt(DH) is pre-folded into the Q columns of wqkv.
        qkv = jnp.dot(x.astype(jnp.bfloat16), wqkv_ref[l],
                      preferred_element_type=jnp.float32) + bqkv_ref[l]   # (S, 3H)

        for h in range(NH):                                      # static head loop
            q = qkv[:, h * DH:(h + 1) * DH].astype(jnp.bfloat16)
            k = qkv[:, H + h * DH:H + (h + 1) * DH].astype(jnp.bfloat16)
            v = qkv[:, 2 * H + h * DH:2 * H + (h + 1) * DH].astype(jnp.bfloat16)
            # q @ k^T without materializing the transpose.
            sc = jax.lax.dot_general(q, k, (((1,), (1,)), ((), ())),
                                     preferred_element_type=jnp.float32) + bias
            sc = sc - jnp.max(sc, axis=-1, keepdims=True)
            p = jnp.exp(sc)
            p = p * pl.reciprocal(jnp.sum(p, axis=-1, keepdims=True), approx=True)
            ctx = jnp.dot(p.astype(jnp.bfloat16), v,
                          preferred_element_type=jnp.float32)    # (S, DH)
            # Write head output at its static lane offset (merged projection).
            ctx_ref[:, h * DH:(h + 1) * DH] = ctx

        # Single (S,H)@(H,H) output projection instead of NH K=64 matmuls.
        attn = jnp.dot(ctx_ref[...].astype(jnp.bfloat16), wo_ref[l],
                       preferred_element_type=jnp.float32) + bo_ref[l]

        h1 = _layernorm(x + attn, g1_ref[l], b1_ref[l])

        ff = jnp.dot(h1.astype(jnp.bfloat16), wi_ref[l],
                     preferred_element_type=jnp.float32) + bi_ref[l]
        # TODO(synk): HF BERT default is exact erf GELU; tanh approximation used here.
        ff = jax.nn.gelu(ff, approximate=True)
        ff = jnp.dot(ff.astype(jnp.bfloat16), wf_ref[l],
                     preferred_element_type=jnp.float32) + bf_ref[l]

        x = _layernorm(h1 + ff, g2_ref[l], b2_ref[l])

    # ---- torch.gather(hidden, -2, starts): SMEM indices + dynamic row reads ----
    xbuf_ref[...] = x
    for u in range(U):
        pos = starts_ref[b, u]
        o_ref[0, pl.ds(u, 1), :] = xbuf_ref[pl.ds(pos, 1), :]


# --------------------------------- forward pass --------------------------------
def bert_forward(params, input_ids, attn_mask, starts):
    B, S = input_ids.shape
    U = starts.shape[1]
    H, L, F = HIDDEN, N_LAYERS, FFN

    # Embedding table lookups + sum stay in XLA glue (one (B,S,H) operand).
    # TODO(synk): token_type_ids assumed all-zero (row 0 of type_emb), as before.
    word = jnp.take(params["word_emb"], input_ids, axis=0)            # (B, S, H)
    emb = (word + params["pos_emb"][:S][None, :, :]
           + params["type_emb"][0][None, None, :]).astype(jnp.float32)

    # Per-batch additive key mask (O(B*S), not O((B*S)^2)): 0 keep, -1e9 pad.
    bias = ((attn_mask.astype(jnp.float32) - 1.0) * 1e9).reshape(B, 1, S)

    starts_i32 = starts.astype(jnp.int32)

    def fullspec(shp):
        return pl.BlockSpec(shp, lambda b, st, n=len(shp): (0,) * n)

    grid_spec = pltpu.PrefetchScalarGridSpec(
        num_scalar_prefetch=1,                     # starts -> SMEM
        grid=(B,),                                 # one batch row per grid step
        in_specs=[
            pl.BlockSpec((1, S, H), lambda b, st: (b, 0, 0)),   # emb
            pl.BlockSpec((1, 1, S), lambda b, st: (b, 0, 0)),   # additive mask
            fullspec((1, H)), fullspec((1, H)),                 # emb LN g / b
            fullspec((L, H, 3 * H)), fullspec((L, 1, 3 * H)),   # wqkv / bqkv
            fullspec((L, H, H)), fullspec((L, 1, H)),           # wo / bo
            fullspec((L, 1, H)), fullspec((L, 1, H)),           # g1 / b1
            fullspec((L, H, F)), fullspec((L, 1, F)),           # wi / bi
            fullspec((L, F, H)), fullspec((L, 1, H)),           # wf / bf
            fullspec((L, 1, H)), fullspec((L, 1, H)),           # g2 / b2
        ],
        out_specs=pl.BlockSpec((1, U, H), lambda b, st: (b, 0, 0)),
        scratch_shapes=[pltpu.VMEM((S, H), jnp.float32),        # merged-head ctx
                        pltpu.VMEM((S, H), jnp.float32)],       # final x for gather
    )

    out = pl.pallas_call(
        bert_kernel,
        out_shape=jax.ShapeDtypeStruct((B, U, H), jnp.float32),
        grid_spec=grid_spec,
        compiler_params=pltpu.CompilerParams(
            dimension_semantics=("parallel",)),     # both TCs on v7x
    )(starts_i32, emb, bias,
      params["emb_ln_g"], params["emb_ln_b"],
      params["wqkv"], params["bqkv"], params["wo"], params["bo"],
      params["g1"], params["b1"], params["wi"], params["bi"],
      params["wf"], params["bf"], params["g2"], params["b2"])

    return out


# ------------------------------- parameter init --------------------------------
def init_params(key):
    def nrm(k, shape):
        return 0.02 * jax.random.normal(k, shape, dtype=jnp.float32)

    ks = jax.random.split(key, 7)
    L, H, F = N_LAYERS, HIDDEN, FFN

    # Fused QKV weight; fold 1/sqrt(HEAD_DIM) into the Q columns once, here.
    wqkv = nrm(ks[3], (L, H, 3 * H))
    wqkv = wqkv.at[:, :, :H].multiply(1.0 / math.sqrt(HEAD_DIM))
    bqkv = jnp.zeros((L, 1, 3 * H), jnp.float32)   # Q part would also be scaled if nonzero

    return {
        "word_emb": nrm(ks[0], (VOCAB, H)),
        "pos_emb": nrm(ks[1], (MAX_POS, H)),
        "type_emb": nrm(ks[2], (2, H)),
        "emb_ln_g": jnp.ones((1, H), jnp.float32),
        "emb_ln_b": jnp.zeros((1, H), jnp.float32),
        # MXU operands stored in bf16 (native MXU input dtype); f32 accumulation.
        "wqkv": wqkv.astype(jnp.bfloat16),
        "bqkv": bqkv,
        # Per-head output projections merged: rows [h*DH:(h+1)*DH] belong to head h.
        "wo": nrm(ks[4], (L, H, H)).astype(jnp.bfloat16),
        "bo": jnp.zeros((L, 1, H), jnp.float32),
        "g1": jnp.ones((L, 1, H), jnp.float32),
        "b1": jnp.zeros((L, 1, H), jnp.float32),
        "wi": nrm(ks[5], (L, H, F)).astype(jnp.bfloat16),
        "bi": jnp.zeros((L, 1, F), jnp.float32),
        "wf": nrm(ks[6], (L, F, H)).astype(jnp.bfloat16),
        "bf": jnp.zeros((L, 1, H), jnp.float32),
        "g2": jnp.ones((L, 1, H), jnp.float32),
        "b2": jnp.zeros((L, 1, H), jnp.float32),
    }


# ------------------------------------ main --------------------------------------
if __name__ == "__main__":
    B, S, U = 2, 8, 4
    key = jax.random.PRNGKey(0)
    k_param, k_ids, k_starts = jax.random.split(key, 3)

    params = init_params(k_param)
    input_ids = jax.random.randint(k_ids, (B, S), 0, VOCAB, dtype=jnp.int32)
    attn_mask = jnp.ones((B, S), dtype=jnp.int32)
    starts = jax.random.randint(k_starts, (B, U), 0, S, dtype=jnp.int32)

    fwd = jax.jit(bert_forward)
    out = fwd(params, input_ids, attn_mask, starts)
    out = jax.block_until_ready(out)
    assert out.shape == (B, U, HIDDEN), out.shape
    assert bool(jnp.all(jnp.isfinite(out)))
    print("KERNEL_OK")
</pallas_src>

<mosaic_0001>
module attributes {stable_mosaic.version = 11 : i64} {
  func.func @bert_kernel(%arg0: i32, %arg1: memref<2x4xi32, #tpu.memory_space<smem>>, %arg2: memref<1x8x128xf32, #tpu.memory_space<vmem>>, %arg3: memref<1x1x8xf32, #tpu.memory_space<vmem>>, %arg4: memref<1x128xf32, #tpu.memory_space<vmem>>, %arg5: memref<1x128xf32, #tpu.memory_space<vmem>>, %arg6: memref<2x128x384xbf16, #tpu.memory_space<vmem>>, %arg7: memref<2x1x384xf32, #tpu.memory_space<vmem>>, %arg8: memref<2x128x128xbf16, #tpu.memory_space<vmem>>, %arg9: memref<2x1x128xf32, #tpu.memory_space<vmem>>, %arg10: memref<2x1x128xf32, #tpu.memory_space<vmem>>, %arg11: memref<2x1x128xf32, #tpu.memory_space<vmem>>, %arg12: memref<2x128x256xbf16, #tpu.memory_space<vmem>>, %arg13: memref<2x1x256xf32, #tpu.memory_space<vmem>>, %arg14: memref<2x256x128xbf16, #tpu.memory_space<vmem>>, %arg15: memref<2x1x128xf32, #tpu.memory_space<vmem>>, %arg16: memref<2x1x128xf32, #tpu.memory_space<vmem>>, %arg17: memref<2x1x128xf32, #tpu.memory_space<vmem>>, %arg18: memref<1x4x128xf32, #tpu.memory_space<vmem>>, %arg19: memref<8x128xf32, #tpu.memory_space<vmem>>, %arg20: memref<8x128xf32, #tpu.memory_space<vmem>>) attributes {dimension_semantics = [#tpu.dimension_semantics<parallel>], iteration_bounds = array<i64: 2>, scalar_prefetch = 1 : i64, scratch_operands = 2 : i64, tpu.core_type = #tpu.core_type<tc>, window_params = [{transform_indices = @transform_0, window_bounds = array<i64: 1, 8, 128>}, {transform_indices = @transform_1, window_bounds = array<i64: 1, 1, 8>}, {pipeline_mode = #tpu.pipeline_mode<synchronous>, transform_indices = @transform_2, window_bounds = array<i64: 1, 128>}, {pipeline_mode = #tpu.pipeline_mode<synchronous>, transform_indices = @transform_3, window_bounds = array<i64: 1, 128>}, {pipeline_mode = #tpu.pipeline_mode<synchronous>, transform_indices = @transform_4, window_bounds = array<i64: 2, 128, 384>}, {pipeline_mode = #tpu.pipeline_mode<synchronous>, transform_indices = @transform_5, window_bounds = array<i64: 2, 1, 384>}, {pipeline_mode = #tpu.pipeline_mode<synchronous>, transform_indices = @transform_6, window_bounds = array<i64: 2, 128, 128>}, {pipeline_mode = #tpu.pipeline_mode<synchronous>, transform_indices = @transform_7, window_bounds = array<i64: 2, 1, 128>}, {pipeline_mode = #tpu.pipeline_mode<synchronous>, transform_indices = @transform_8, window_bounds = array<i64: 2, 1, 128>}, {pipeline_mode = #tpu.pipeline_mode<synchronous>, transform_indices = @transform_9, window_bounds = array<i64: 2, 1, 128>}, {pipeline_mode = #tpu.pipeline_mode<synchronous>, transform_indices = @transform_10, window_bounds = array<i64: 2, 128, 256>}, {pipeline_mode = #tpu.pipeline_mode<synchronous>, transform_indices = @transform_11, window_bounds = array<i64: 2, 1, 256>}, {pipeline_mode = #tpu.pipeline_mode<synchronous>, transform_indices = @transform_12, window_bounds = array<i64: 2, 256, 128>}, {pipeline_mode = #tpu.pipeline_mode<synchronous>, transform_indices = @transform_13, window_bounds = array<i64: 2, 1, 128>}, {pipeline_mode = #tpu.pipeline_mode<synchronous>, transform_indices = @transform_14, window_bounds = array<i64: 2, 1, 128>}, {pipeline_mode = #tpu.pipeline_mode<synchronous>, transform_indices = @transform_15, window_bounds = array<i64: 2, 1, 128>}, {transform_indices = @transform_16, window_bounds = array<i64: 1, 4, 128>}]} {
    %c0 = arith.constant 0 : index
    %c0_0 = arith.constant 0 : index
    %c0_1 = arith.constant 0 : index
    %0 = vector.load %arg2[%c0, %c0_0, %c0_1] : memref<1x8x128xf32, #tpu.memory_space<vmem>>, vector<1x8x128xf32>
    %1 = vector.shape_cast %0 : vector<1x8x128xf32> to vector<8x128xf32>
    %c0_2 = arith.constant 0 : index
    %c0_3 = arith.constant 0 : index
    %2 = vector.load %arg4[%c0_2, %c0_3] : memref<1x128xf32, #tpu.memory_space<vmem>>, vector<1x128xf32>
    %c0_4 = arith.constant 0 : index
    %c0_5 = arith.constant 0 : index
    %3 = vector.load %arg5[%c0_4, %c0_5] : memref<1x128xf32, #tpu.memory_space<vmem>>, vector<1x128xf32>
    %cst = arith.constant dense<0.000000e+00> : vector<8xf32>
    %4 = vector.multi_reduction <add>, %1, %cst [1] : vector<8x128xf32> to vector<8xf32>
    %5 = vector.shape_cast %4 : vector<8xf32> to vector<8x1xf32>
    %cst_6 = arith.constant 1.280000e+02 : f32
    %6 = vector.broadcast %cst_6 : f32 to vector<8x1xf32>
    %7 = arith.divf %5, %6 : vector<8x1xf32>
    %8 = vector.broadcast %7 : vector<8x1xf32> to vector<8x128xf32>
    %9 = arith.subf %1, %8 : vector<8x128xf32>
    %10 = arith.mulf %9, %9 : vector<8x128xf32>
    %cst_7 = arith.constant dense<0.000000e+00> : vector<8xf32>
    %11 = vector.multi_reduction <add>, %10, %cst_7 [1] : vector<8x128xf32> to vector<8xf32>
    %12 = vector.shape_cast %11 : vector<8xf32> to vector<8x1xf32>
    %cst_8 = arith.constant 1.280000e+02 : f32
    %13 = vector.broadcast %cst_8 : f32 to vector<8x1xf32>
    %14 = arith.divf %12, %13 : vector<8x1xf32>
    %15 = vector.broadcast %7 : vector<8x1xf32> to vector<8x128xf32>
    %16 = arith.subf %1, %15 : vector<8x128xf32>
    %cst_9 = arith.constant 9.99999996E-13 : f32
    %17 = vector.broadcast %cst_9 : f32 to vector<8x1xf32>
    %18 = arith.addf %14, %17 : vector<8x1xf32>
    %19 = math.rsqrt %18 : vector<8x1xf32>
    %20 = vector.broadcast %19 : vector<8x1xf32> to vector<8x128xf32>
    %21 = arith.mulf %16, %20 : vector<8x128xf32>
    %22 = vector.broadcast %2 : vector<1x128xf32> to vector<8x128xf32>
    %23 = arith.mulf %21, %22 : vector<8x128xf32>
    %24 = vector.broadcast %3 : vector<1x128xf32> to vector<8x128xf32>
    %25 = arith.addf %23, %24 : vector<8x128xf32>
    %c0_10 = arith.constant 0 : index
    %c0_11 = arith.constant 0 : index
    %c0_12 = arith.constant 0 : index
    %26 = vector.load %arg3[%c0_10, %c0_11, %c0_12] : memref<1x1x8xf32, #tpu.memory_space<vmem>>, vector<1x1x8xf32>
    %27 = vector.shape_cast %26 : vector<1x1x8xf32> to vector<1x8xf32>
    %28 = arith.truncf %25 : vector<8x128xf32> to vector<8x128xbf16>
    %c0_13 = arith.constant 0 : index
    %c0_14 = arith.constant 0 : index
    %c0_15 = arith.constant 0 : index
    %29 = vector.load %arg6[%c0_13, %c0_14, %c0_15] : memref<2x128x384xbf16, #tpu.memory_space<vmem>>, vector<1x128x384xbf16>
    %30 = vector.shape_cast %29 : vector<1x128x384xbf16> to vector<128x384xbf16>
    %cst_16 = arith.constant dense<0.000000e+00> : vector<8x384xf32>
    %31 = tpu.matmul %28, %30, %cst_16 {dimension_numbers = #tpu.dot_dimension_numbers<[1], [0], [0], [1], [0, 0, 1, 1], [], []>} : vector<8x128xbf16>, vector<128x384xbf16>, vector<8x384xf32> -> vector<8x384xf32>
    %c0_17 = arith.constant 0 : index
    %c0_18 = arith.constant 0 : index
    %c0_19 = arith.constant 0 : index
    %32 = vector.load %arg7[%c0_17, %c0_18, %c0_19] : memref<2x1x384xf32, #tpu.memory_space<vmem>>, vector<1x1x384xf32>
    %33 = vector.shape_cast %32 : vector<1x1x384xf32> to vector<1x384xf32>
    %34 = vector.broadcast %33 : vector<1x384xf32> to vector<8x384xf32>
    %35 = arith.addf %31, %34 : vector<8x384xf32>
    %36 = vector.extract_strided_slice %35 {offsets = [0, 0], sizes = [8, 64], strides = [1, 1]} : vector<8x384xf32> to vector<8x64xf32>
    %37 = arith.truncf %36 : vector<8x64xf32> to vector<8x64xbf16>
    %38 = vector.extract_strided_slice %35 {offsets = [0, 128], sizes = [8, 64], strides = [1, 1]} : vector<8x384xf32> to vector<8x64xf32>
    %39 = arith.truncf %38 : vector<8x64xf32> to vector<8x64xbf16>
    %40 = vector.extract_strided_slice %35 {offsets = [0, 256], sizes = [8, 64], strides = [1, 1]} : vector<8x384xf32> to vector<8x64xf32>
    %41 = arith.truncf %40 : vector<8x64xf32> to vector<8x64xbf16>
    %cst_20 = arith.constant dense<0.000000e+00> : vector<8x8xf32>
    %42 = tpu.matmul %37, %39, %cst_20 {dimension_numbers = #tpu.dot_dimension_numbers<[1], [1], [0], [0], [0, 0, 1, 0], [], []>} : vector<8x64xbf16>, vector<8x64xbf16>, vector<8x8xf32> -> vector<8x8xf32>
    %43 = vector.broadcast %27 : vector<1x8xf32> to vector<8x8xf32>
    %44 = arith.addf %42, %43 : vector<8x8xf32>
    %cst_21 = arith.constant dense<0xFF800000> : vector<8xf32>
    %45 = vector.multi_reduction <maximumf>, %44, %cst_21 [1] : vector<8x8xf32> to vector<8xf32>
    %46 = vector.shape_cast %45 : vector<8xf32> to vector<8x1xf32>
    %47 = vector.broadcast %46 : vector<8x1xf32> to vector<8x8xf32>
    %48 = arith.subf %44, %47 : vector<8x8xf32>
    %49 = math.exp %48 : vector<8x8xf32>
    %cst_22 = arith.constant dense<0.000000e+00> : vector<8xf32>
    %50 = vector.multi_reduction <add>, %49, %cst_22 [1] : vector<8x8xf32> to vector<8xf32>
    %51 = vector.shape_cast %50 : vector<8xf32> to vector<8x1xf32>
    %52 = tpu.reciprocal %51 {approx = true} : vector<8x1xf32> -> vector<8x1xf32>
    %53 = vector.broadcast %52 : vector<8x1xf32> to vector<8x8xf32>
    %54 = arith.mulf %49, %53 : vector<8x8xf32>
    %55 = arith.truncf %54 : vector<8x8xf32> to vector<8x8xbf16>
    %cst_23 = arith.constant dense<0.000000e+00> : vector<8x64xf32>
    %56 = tpu.matmul %55, %41, %cst_23 {dimension_numbers = #tpu.dot_dimension_numbers<[1], [0], [0], [1], [0, 0, 1, 1], [], []>} : vector<8x8xbf16>, vector<8x64xbf16>, vector<8x64xf32> -> vector<8x64xf32>
    %c0_24 = arith.constant 0 : index
    %c0_25 = arith.constant 0 : index
    %57 = vector.load %arg19[%c0_24, %c0_25] : memref<8x128xf32, #tpu.memory_space<vmem>>, vector<8x64xf32>
    tpu.vector_store %arg19[%c0_24, %c0_25], %56 {strides = array<i32>} : memref<8x128xf32, #tpu.memory_space<vmem>>, vector<8x64xf32>,
    %58 = vector.extract_strided_slice %35 {offsets = [0, 64], sizes = [8, 64], strides = [1, 1]} : vector<8x384xf32> to vector<8x64xf32>
    %59 = arith.truncf %58 : vector<8x64xf32> to vector<8x64xbf16>
    %60 = vector.extract_strided_slice %35 {offsets = [0, 192], sizes = [8, 64], strides = [1, 1]} : vector<8x384xf32> to vector<8x64xf32>
    %61 = arith.truncf %60 : vector<8x64xf32> to vector<8x64xbf16>
    %62 = vector.extract_strided_slice %35 {offsets = [0, 320], sizes = [8, 64], strides = [1, 1]} : vector<8x384xf32> to vector<8x64xf32>
    %63 = arith.truncf %62 : vector<8x64xf32> to vector<8x64xbf16>
    %cst_26 = arith.constant dense<0.000000e+00> : vector<8x8xf32>
    %64 = tpu.matmul %59, %61, %cst_26 {dimension_numbers = #tpu.dot_dimension_numbers<[1], [1], [0], [0], [0, 0, 1, 0], [], []>} : vector<8x64xbf16>, vector<8x64xbf16>, vector<8x8xf32> -> vector<8x8xf32>
    %65 = vector.broadcast %27 : vector<1x8xf32> to vector<8x8xf32>
    %66 = arith.addf %64, %65 : vector<8x8xf32>
    %cst_27 = arith.constant dense<0xFF800000> : vector<8xf32>
    %67 = vector.multi_reduction <maximumf>, %66, %cst_27 [1] : vector<8x8xf32> to vector<8xf32>
    %68 = vector.shape_cast %67 : vector<8xf32> to vector<8x1xf32>
    %69 = vector.broadcast %68 : vector<8x1xf32> to vector<8x8xf32>
    %70 = arith.subf %66, %69 : vector<8x8xf32>
    %71 = math.exp %70 : vector<8x8xf32>
    %cst_28 = arith.constant dense<0.000000e+00> : vector<8xf32>
    %72 = vector.multi_reduction <add>, %71, %cst_28 [1] : vector<8x8xf32> to vector<8xf32>
    %73 = vector.shape_cast %72 : vector<8xf32> to vector<8x1xf32>
    %74 = tpu.reciprocal %73 {approx = true} : vector<8x1xf32> -> vector<8x1xf32>
    %75 = vector.broadcast %74 : vector<8x1xf32> to vector<8x8xf32>
    %76 = arith.mulf %71, %75 : vector<8x8xf32>
    %77 = arith.truncf %76 : vector<8x8xf32> to vector<8x8xbf16>
    %cst_29 = arith.constant dense<0.000000e+00> : vector<8x64xf32>
    %78 = tpu.matmul %77, %63, %cst_29 {dimension_numbers = #tpu.dot_dimension_numbers<[1], [0], [0], [1], [0, 0, 1, 1], [], []>} : vector<8x8xbf16>, vector<8x64xbf16>, vector<8x64xf32> -> vector<8x64xf32>
    %c0_30 = arith.constant 0 : index
    %c64 = arith.constant 64 : index
    %79 = vector.load %arg19[%c0_30, %c64] : memref<8x128xf32, #tpu.memory_space<vmem>>, vector<8x64xf32>
    tpu.vector_store %arg19[%c0_30, %c64], %78 {strides = array<i32>} : memref<8x128xf32, #tpu.memory_space<vmem>>, vector<8x64xf32>,
    %c0_31 = arith.constant 0 : index
    %c0_32 = arith.constant 0 : index
    %80 = vector.load %arg19[%c0_31, %c0_32] : memref<8x128xf32, #tpu.memory_space<vmem>>, vector<8x128xf32>
    %81 = arith.truncf %80 : vector<8x128xf32> to vector<8x128xbf16>
    %c0_33 = arith.constant 0 : index
    %c0_34 = arith.constant 0 : index
    %c0_35 = arith.constant 0 : index
    %82 = vector.load %arg8[%c0_33, %c0_34, %c0_35] : memref<2x128x128xbf16, #tpu.memory_space<vmem>>, vector<1x128x128xbf16>
    %83 = vector.shape_cast %82 : vector<1x128x128xbf16> to vector<128x128xbf16>
    %cst_36 = arith.constant dense<0.000000e+00> : vector<8x128xf32>
    %84 = tpu.matmul %81, %83, %cst_36 {dimension_numbers = #tpu.dot_dimension_numbers<[1], [0], [0], [1], [0, 0, 1, 1], [], []>} : vector<8x128xbf16>, vector<128x128xbf16>, vector<8x128xf32> -> vector<8x128xf32>
    %c0_37 = arith.constant 0 : index
    %c0_38 = arith.constant 0 : index
    %c0_39 = arith.constant 0 : index
    %85 = vector.load %arg9[%c0_37, %c0_38, %c0_39] : memref<2x1x128xf32, #tpu.memory_space<vmem>>, vector<1x1x128xf32>
    %86 = vector.shape_cast %85 : vector<1x1x128xf32> to vector<1x128xf32>
    %87 = vector.broadcast %86 : vector<1x128xf32> to vector<8x128xf32>
    %88 = arith.addf %84, %87 : vector<8x128xf32>
    %89 = arith.addf %25, %88 : vector<8x128xf32>
    %c0_40 = arith.constant 0 : index
    %c0_41 = arith.constant 0 : index
    %c0_42 = arith.constant 0 : index
    %90 = vector.load %arg10[%c0_40, %c0_41, %c0_42] : memref<2x1x128xf32, #tpu.memory_space<vmem>>, vector<1x1x128xf32>
    %91 = vector.shape_cast %90 : vector<1x1x128xf32> to vector<1x128xf32>
    %c0_43 = arith.constant 0 : index
    %c0_44 = arith.constant 0 : index
    %c0_45 = arith.constant 0 : index
    %92 = vector.load %arg11[%c0_43, %c0_44, %c0_45] : memref<2x1x128xf32, #tpu.memory_space<vmem>>, vector<1x1x128xf32>
    %93 = vector.shape_cast %92 : vector<1x1x128xf32> to vector<1x128xf32>
    %cst_46 = arith.constant dense<0.000000e+00> : vector<8xf32>
    %94 = vector.multi_reduction <add>, %89, %cst_46 [1] : vector<8x128xf32> to vector<8xf32>
    %95 = vector.shape_cast %94 : vector<8xf32> to vector<8x1xf32>
    %cst_47 = arith.constant 1.280000e+02 : f32
    %96 = vector.broadcast %cst_47 : f32 to vector<8x1xf32>
    %97 = arith.divf %95, %96 : vector<8x1xf32>
    %98 = vector.broadcast %97 : vector<8x1xf32> to vector<8x128xf32>
    %99 = arith.subf %89, %98 : vector<8x128xf32>
    %100 = arith.mulf %99, %99 : vector<8x128xf32>
    %cst_48 = arith.constant dense<0.000000e+00> : vector<8xf32>
    %101 = vector.multi_reduction <add>, %100, %cst_48 [1] : vector<8x128xf32> to vector<8xf32>
    %102 = vector.shape_cast %101 : vector<8xf32> to vector<8x1xf32>
    %cst_49 = arith.constant 1.280000e+02 : f32
    %103 = vector.broadcast %cst_49 : f32 to vector<8x1xf32>
    %104 = arith.divf %102, %103 : vector<8x1xf32>
    %105 = vector.broadcast %97 : vector<8x1xf32> to vector<8x128xf32>
    %106 = arith.subf %89, %105 : vector<8x128xf32>
    %cst_50 = arith.constant 9.99999996E-13 : f32
    %107 = vector.broadcast %cst_50 : f32 to vector<8x1xf32>
    %108 = arith.addf %104, %107 : vector<8x1xf32>
    %109 = math.rsqrt %108 : vector<8x1xf32>
    %110 = vector.broadcast %109 : vector<8x1xf32> to vector<8x128xf32>
    %111 = arith.mulf %106, %110 : vector<8x128xf32>
    %112 = vector.broadcast %91 : vector<1x128xf32> to vector<8x128xf32>
    %113 = arith.mulf %111, %112 : vector<8x128xf32>
    %114 = vector.broadcast %93 : vector<1x128xf32> to vector<8x128xf32>
    %115 = arith.addf %113, %114 : vector<8x128xf32>
    %116 = arith.truncf %115 : vector<8x128xf32> to vector<8x128xbf16>
    %c0_51 = arith.constant 0 : index
    %c0_52 = arith.constant 0 : index
    %c0_53 = arith.constant 0 : index
    %117 = vector.load %arg12[%c0_51, %c0_52, %c0_53] : memref<2x128x256xbf16, #tpu.memory_space<vmem>>, vector<1x128x256xbf16>
    %118 = vector.shape_cast %117 : vector<1x128x256xbf16> to vector<128x256xbf16>
    %cst_54 = arith.constant dense<0.000000e+00> : vector<8x256xf32>
    %119 = tpu.matmul %116, %118, %cst_54 {dimension_numbers = #tpu.dot_dimension_numbers<[1], [0], [0], [1], [0, 0, 1, 1], [], []>} : vector<8x128xbf16>, vector<128x256xbf16>, vector<8x256xf32> -> vector<8x256xf32>
    %c0_55 = arith.constant 0 : index
    %c0_56 = arith.constant 0 : index
    %c0_57 = arith.constant 0 : index
    %120 = vector.load %arg13[%c0_55, %c0_56, %c0_57] : memref<2x1x256xf32, #tpu.memory_space<vmem>>, vector<1x1x256xf32>
    %121 = vector.shape_cast %120 : vector<1x1x256xf32> to vector<1x256xf32>
    %122 = vector.broadcast %121 : vector<1x256xf32> to vector<8x256xf32>
    %123 = arith.addf %119, %122 : vector<8x256xf32>
    %124 = arith.mulf %123, %123 : vector<8x256xf32>
    %125 = arith.mulf %123, %124 : vector<8x256xf32>
    %cst_58 = arith.constant 4.471500e-02 : f32
    %126 = vector.broadcast %cst_58 : f32 to vector<8x256xf32>
    %127 = arith.mulf %126, %125 : vector<8x256xf32>
    %128 = arith.addf %123, %127 : vector<8x256xf32>
    %cst_59 = arith.constant 0.797884583 : f32
    %129 = vector.broadcast %cst_59 : f32 to vector<8x256xf32>
    %130 = arith.mulf %129, %128 : vector<8x256xf32>
    %131 = math.tanh %130 : vector<8x256xf32>
    %cst_60 = arith.constant 1.000000e+00 : f32
    %132 = vector.broadcast %cst_60 : f32 to vector<8x256xf32>
    %133 = arith.addf %132, %131 : vector<8x256xf32>
    %cst_61 = arith.constant 5.000000e-01 : f32
    %134 = vector.broadcast %cst_61 : f32 to vector<8x256xf32>
    %135 = arith.mulf %134, %133 : vector<8x256xf32>
    %136 = arith.mulf %123, %135 : vector<8x256xf32>
    %137 = arith.truncf %136 : vector<8x256xf32> to vector<8x256xbf16>
    %c0_62 = arith.constant 0 : index
    %c0_63 = arith.constant 0 : index
    %c0_64 = arith.constant 0 : index
    %138 = vector.load %arg14[%c0_62, %c0_63, %c0_64] : memref<2x256x128xbf16, #tpu.memory_space<vmem>>, vector<1x256x128xbf16>
    %139 = vector.shape_cast %138 : vector<1x256x128xbf16> to vector<256x128xbf16>
    %cst_65 = arith.constant dense<0.000000e+00> : vector<8x128xf32>
    %140 = tpu.matmul %137, %139, %cst_65 {dimension_numbers = #tpu.dot_dimension_numbers<[1], [0], [0], [1], [0, 0, 1, 1], [], []>} : vector<8x256xbf16>, vector<256x128xbf16>, vector<8x128xf32> -> vector<8x128xf32>
    %c0_66 = arith.constant 0 : index
    %c0_67 = arith.constant 0 : index
    %c0_68 = arith.constant 0 : index
    %141 = vector.load %arg15[%c0_66, %c0_67, %c0_68] : memref<2x1x128xf32, #tpu.memory_space<vmem>>, vector<1x1x128xf32>
    %142 = vector.shape_cast %141 : vector<1x1x128xf32> to vector<1x128xf32>
    %143 = vector.broadcast %142 : vector<1x128xf32> to vector<8x128xf32>
    %144 = arith.addf %140, %143 : vector<8x128xf32>
    %145 = arith.addf %115, %144 : vector<8x128xf32>
    %c0_69 = arith.constant 0 : index
    %c0_70 = arith.constant 0 : index
    %c0_71 = arith.constant 0 : index
    %146 = vector.load %arg16[%c0_69, %c0_70, %c0_71] : memref<2x1x128xf32, #tpu.memory_space<vmem>>, vector<1x1x128xf32>
    %147 = vector.shape_cast %146 : vector<1x1x128xf32> to vector<1x128xf32>
    %c0_72 = arith.constant 0 : index
    %c0_73 = arith.constant 0 : index
    %c0_74 = arith.constant 0 : index
    %148 = vector.load %arg17[%c0_72, %c0_73, %c0_74] : memref<2x1x128xf32, #tpu.memory_space<vmem>>, vector<1x1x128xf32>
    %149 = vector.shape_cast %148 : vector<1x1x128xf32> to vector<1x128xf32>
    %cst_75 = arith.constant dense<0.000000e+00> : vector<8xf32>
    %150 = vector.multi_reduction <add>, %145, %cst_75 [1] : vector<8x128xf32> to vector<8xf32>
    %151 = vector.shape_cast %150 : vector<8xf32> to vector<8x1xf32>
    %cst_76 = arith.constant 1.280000e+02 : f32
    %152 = vector.broadcast %cst_76 : f32 to vector<8x1xf32>
    %153 = arith.divf %151, %152 : vector<8x1xf32>
    %154 = vector.broadcast %153 : vector<8x1xf32> to vector<8x128xf32>
    %155 = arith.subf %145, %154 : vector<8x128xf32>
    %156 = arith.mulf %155, %155 : vector<8x128xf32>
    %cst_77 = arith.constant dense<0.000000e+00> : vector<8xf32>
    %157 = vector.multi_reduction <add>, %156, %cst_77 [1] : vector<8x128xf32> to vector<8xf32>
    %158 = vector.shape_cast %157 : vector<8xf32> to vector<8x1xf32>
    %cst_78 = arith.constant 1.280000e+02 : f32
    %159 = vector.broadcast %cst_78 : f32 to vector<8x1xf32>
    %160 = arith.divf %158, %159 : vector<8x1xf32>
    %161 = vector.broadcast %153 : vector<8x1xf32> to vector<8x128xf32>
    %162 = arith.subf %145, %161 : vector<8x128xf32>
    %cst_79 = arith.constant 9.99999996E-13 : f32
    %163 = vector.broadcast %cst_79 : f32 to vector<8x1xf32>
    %164 = arith.addf %160, %163 : vector<8x1xf32>
    %165 = math.rsqrt %164 : vector<8x1xf32>
    %166 = vector.broadcast %165 : vector<8x1xf32> to vector<8x128xf32>
    %167 = arith.mulf %162, %166 : vector<8x128xf32>
    %168 = vector.broadcast %147 : vector<1x128xf32> to vector<8x128xf32>
    %169 = arith.mulf %167, %168 : vector<8x128xf32>
    %170 = vector.broadcast %149 : vector<1x128xf32> to vector<8x128xf32>
    %171 = arith.addf %169, %170 : vector<8x128xf32>
    %172 = arith.truncf %171 : vector<8x128xf32> to vector<8x128xbf16>
    %c1 = arith.constant 1 : index
    %c0_80 = arith.constant 0 : index
    %c0_81 = arith.constant 0 : index
    %173 = vector.load %arg6[%c1, %c0_80, %c0_81] : memref<2x128x384xbf16, #tpu.memory_space<vmem>>, vector<1x128x384xbf16>
    %174 = vector.shape_cast %173 : vector<1x128x384xbf16> to vector<128x384xbf16>
    %cst_82 = arith.constant dense<0.000000e+00> : vector<8x384xf32>
    %175 = tpu.matmul %172, %174, %cst_82 {dimension_numbers = #tpu.dot_dimension_numbers<[1], [0], [0], [1], [0, 0, 1, 1], [], []>} : vector<8x128xbf16>, vector<128x384xbf16>, vector<8x384xf32> -> vector<8x384xf32>
    %c1_83 = arith.constant 1 : index
    %c0_84 = arith.constant 0 : index
    %c0_85 = arith.constant 0 : index
    %176 = vector.load %arg7[%c1_83, %c0_84, %c0_85] : memref<2x1x384xf32, #tpu.memory_space<vmem>>, vector<1x1x384xf32>
    %177 = vector.shape_cast %176 : vector<1x1x384xf32> to vector<1x384xf32>
    %178 = vector.broadcast %177 : vector<1x384xf32> to vector<8x384xf32>
    %179 = arith.addf %175, %178 : vector<8x384xf32>
    %180 = vector.extract_strided_slice %179 {offsets = [0, 0], sizes = [8, 64], strides = [1, 1]} : vector<8x384xf32> to vector<8x64xf32>
    %181 = arith.truncf %180 : vector<8x64xf32> to vector<8x64xbf16>
    %182 = vector.extract_strided_slice %179 {offsets = [0, 128], sizes = [8, 64], strides = [1, 1]} : vector<8x384xf32> to vector<8x64xf32>
    %183 = arith.truncf %182 : vector<8x64xf32> to vector<8x64xbf16>
    %184 = vector.extract_strided_slice %179 {offsets = [0, 256], sizes = [8, 64], strides = [1, 1]} : vector<8x384xf32> to vector<8x64xf32>
    %185 = arith.truncf %184 : vector<8x64xf32> to vector<8x64xbf16>
    %cst_86 = arith.constant dense<0.000000e+00> : vector<8x8xf32>
    %186 = tpu.matmul %181, %183, %cst_86 {dimension_numbers = #tpu.dot_dimension_numbers<[1], [1], [0], [0], [0, 0, 1, 0], [], []>} : vector<8x64xbf16>, vector<8x64xbf16>, vector<8x8xf32> -> vector<8x8xf32>
    %187 = vector.broadcast %27 : vector<1x8xf32> to vector<8x8xf32>
    %188 = arith.addf %186, %187 : vector<8x8xf32>
    %cst_87 = arith.constant dense<0xFF800000> : vector<8xf32>
    %189 = vector.multi_reduction <maximumf>, %188, %cst_87 [1] : vector<8x8xf32> to vector<8xf32>
    %190 = vector.shape_cast %189 : vector<8xf32> to vector<8x1xf32>
    %191 = vector.broadcast %190 : vector<8x1xf32> to vector<8x8xf32>
    %192 = arith.subf %188, %191 : vector<8x8xf32>
    %193 = math.exp %192 : vector<8x8xf32>
    %cst_88 = arith.constant dense<0.000000e+00> : vector<8xf32>
    %194 = vector.multi_reduction <add>, %193, %cst_88 [1] : vector<8x8xf32> to vector<8xf32>
    %195 = vector.shape_cast %194 : vector<8xf32> to vector<8x1xf32>
    %196 = tpu.reciprocal %195 {approx = true} : vector<8x1xf32> -> vector<8x1xf32>
    %197 = vector.broadcast %196 : vector<8x1xf32> to vector<8x8xf32>
    %198 = arith.mulf %193, %197 : vector<8x8xf32>
    %199 = arith.truncf %198 : vector<8x8xf32> to vector<8x8xbf16>
    %cst_89 = arith.constant dense<0.000000e+00> : vector<8x64xf32>
    %200 = tpu.matmul %199, %185, %cst_89 {dimension_numbers = #tpu.dot_dimension_numbers<[1], [0], [0], [1], [0, 0, 1, 1], [], []>} : vector<8x8xbf16>, vector<8x64xbf16>, vector<8x64xf32> -> vector<8x64xf32>
    %c0_90 = arith.constant 0 : index
    %c0_91 = arith.constant 0 : index
    %201 = vector.load %arg19[%c0_90, %c0_91] : memref<8x128xf32, #tpu.memory_space<vmem>>, vector<8x64xf32>
    tpu.vector_store %arg19[%c0_90, %c0_91], %200 {strides = array<i32>} : memref<8x128xf32, #tpu.memory_space<vmem>>, vector<8x64xf32>,
    %202 = vector.extract_strided_slice %179 {offsets = [0, 64], sizes = [8, 64], strides = [1, 1]} : vector<8x384xf32> to vector<8x64xf32>
    %203 = arith.truncf %202 : vector<8x64xf32> to vector<8x64xbf16>
    %204 = vector.extract_strided_slice %179 {offsets = [0, 192], sizes = [8, 64], strides = [1, 1]} : vector<8x384xf32> to vector<8x64xf32>
    %205 = arith.truncf %204 : vector<8x64xf32> to vector<8x64xbf16>
    %206 = vector.extract_strided_slice %179 {offsets = [0, 320], sizes = [8, 64], strides = [1, 1]} : vector<8x384xf32> to vector<8x64xf32>
    %207 = arith.truncf %206 : vector<8x64xf32> to vector<8x64xbf16>
    %cst_92 = arith.constant dense<0.000000e+00> : vector<8x8xf32>
    %208 = tpu.matmul %203, %205, %cst_92 {dimension_numbers = #tpu.dot_dimension_numbers<[1], [1], [0], [0], [0, 0, 1, 0], [], []>} : vector<8x64xbf16>, vector<8x64xbf16>, vector<8x8xf32> -> vector<8x8xf32>
    %209 = vector.broadcast %27 : vector<1x8xf32> to vector<8x8xf32>
    %210 = arith.addf %208, %209 : vector<8x8xf32>
    %cst_93 = arith.constant dense<0xFF800000> : vector<8xf32>
    %211 = vector.multi_reduction <maximumf>, %210, %cst_93 [1] : vector<8x8xf32> to vector<8xf32>
    %212 = vector.shape_cast %211 : vector<8xf32> to vector<8x1xf32>
    %213 = vector.broadcast %212 : vector<8x1xf32> to vector<8x8xf32>
    %214 = arith.subf %210, %213 : vector<8x8xf32>
    %215 = math.exp %214 : vector<8x8xf32>
    %cst_94 = arith.constant dense<0.000000e+00> : vector<8xf32>
    %216 = vector.multi_reduction <add>, %215, %cst_94 [1] : vector<8x8xf32> to vector<8xf32>
    %217 = vector.shape_cast %216 : vector<8xf32> to vector<8x1xf32>
    %218 = tpu.reciprocal %217 {approx = true} : vector<8x1xf32> -> vector<8x1xf32>
    %219 = vector.broadcast %218 : vector<8x1xf32> to vector<8x8xf32>
    %220 = arith.mulf %215, %219 : vector<8x8xf32>
    %221 = arith.truncf %220 : vector<8x8xf32> to vector<8x8xbf16>
    %cst_95 = arith.constant dense<0.000000e+00> : vector<8x64xf32>
    %222 = tpu.matmul %221, %207, %cst_95 {dimension_numbers = #tpu.dot_dimension_numbers<[1], [0], [0], [1], [0, 0, 1, 1], [], []>} : vector<8x8xbf16>, vector<8x64xbf16>, vector<8x64xf32> -> vector<8x64xf32>
    %c0_96 = arith.constant 0 : index
    %c64_97 = arith.constant 64 : index
    %223 = vector.load %arg19[%c0_96, %c64_97] : memref<8x128xf32, #tpu.memory_space<vmem>>, vector<8x64xf32>
    tpu.vector_store %arg19[%c0_96, %c64_97], %222 {strides = array<i32>} : memref<8x128xf32, #tpu.memory_space<vmem>>, vector<8x64xf32>,
    %c0_98 = arith.constant 0 : index
    %c0_99 = arith.constant 0 : index
    %224 = vector.load %arg19[%c0_98, %c0_99] : memref<8x128xf32, #tpu.memory_space<vmem>>, vector<8x128xf32>
    %225 = arith.truncf %224 : vector<8x128xf32> to vector<8x128xbf16>
    %c1_100 = arith.constant 1 : index
    %c0_101 = arith.constant 0 : index
    %c0_102 = arith.constant 0 : index
    %226 = vector.load %arg8[%c1_100, %c0_101, %c0_102] : memref<2x128x128xbf16, #tpu.memory_space<vmem>>, vector<1x128x128xbf16>
    %227 = vector.shape_cast %226 : vector<1x128x128xbf16> to vector<128x128xbf16>
    %cst_103 = arith.constant dense<0.000000e+00> : vector<8x128xf32>
    %228 = tpu.matmul %225, %227, %cst_103 {dimension_numbers = #tpu.dot_dimension_numbers<[1], [0], [0], [1], [0, 0, 1, 1], [], []>} : vector<8x128xbf16>, vector<128x128xbf16>, vector<8x128xf32> -> vector<8x128xf32>
    %c1_104 = arith.constant 1 : index
    %c0_105 = arith.constant 0 : index
    %c0_106 = arith.constant 0 : index
    %229 = vector.load %arg9[%c1_104, %c0_105, %c0_106] : memref<2x1x128xf32, #tpu.memory_space<vmem>>, vector<1x1x128xf32>
    %230 = vector.shape_cast %229 : vector<1x1x128xf32> to vector<1x128xf32>
    %231 = vector.broadcast %230 : vector<1x128xf32> to vector<8x128xf32>
    %232 = arith.addf %228, %231 : vector<8x128xf32>
    %233 = arith.addf %171, %232 : vector<8x128xf32>
    %c1_107 = arith.constant 1 : index
    %c0_108 = arith.constant 0 : index
    %c0_109 = arith.constant 0 : index
    %234 = vector.load %arg10[%c1_107, %c0_108, %c0_109] : memref<2x1x128xf32, #tpu.memory_space<vmem>>, vector<1x1x128xf32>
    %235 = vector.shape_cast %234 : vector<1x1x128xf32> to vector<1x128xf32>
    %c1_110 = arith.constant 1 : index
    %c0_111 = arith.constant 0 : index
    %c0_112 = arith.constant 0 : index
    %236 = vector.load %arg11[%c1_110, %c0_111, %c0_112] : memref<2x1x128xf32, #tpu.memory_space<vmem>>, vector<1x1x128xf32>
    %237 = vector.shape_cast %236 : vector<1x1x128xf32> to vector<1x128xf32>
    %cst_113 = arith.constant dense<0.000000e+00> : vector<8xf32>
    %238 = vector.multi_reduction <add>, %233, %cst_113 [1] : vector<8x128xf32> to vector<8xf32>
    %239 = vector.shape_cast %238 : vector<8xf32> to vector<8x1xf32>
    %cst_114 = arith.constant 1.280000e+02 : f32
    %240 = vector.broadcast %cst_114 : f32 to vector<8x1xf32>
    %241 = arith.divf %239, %240 : vector<8x1xf32>
    %242 = vector.broadcast %241 : vector<8x1xf32> to vector<8x128xf32>
    %243 = arith.subf %233, %242 : vector<8x128xf32>
    %244 = arith.mulf %243, %243 : vector<8x128xf32>
    %cst_115 = arith.constant dense<0.000000e+00> : vector<8xf32>
    %245 = vector.multi_reduction <add>, %244, %cst_115 [1] : vector<8x128xf32> to vector<8xf32>
    %246 = vector.shape_cast %245 : vector<8xf32> to vector<8x1xf32>
    %cst_116 = arith.constant 1.280000e+02 : f32
    %247 = vector.broadcast %cst_116 : f32 to vector<8x1xf32>
    %248 = arith.divf %246, %247 : vector<8x1xf32>
    %249 = vector.broadcast %241 : vector<8x1xf32> to vector<8x128xf32>
    %250 = arith.subf %233, %249 : vector<8x128xf32>
    %cst_117 = arith.constant 9.99999996E-13 : f32
    %251 = vector.broadcast %cst_117 : f32 to vector<8x1xf32>
    %252 = arith.addf %248, %251 : vector<8x1xf32>
    %253 = math.rsqrt %252 : vector<8x1xf32>
    %254 = vector.broadcast %253 : vector<8x1xf32> to vector<8x128xf32>
    %255 = arith.mulf %250, %254 : vector<8x128xf32>
    %256 = vector.broadcast %235 : vector<1x128xf32> to vector<8x128xf32>
    %257 = arith.mulf %255, %256 : vector<8x128xf32>
    %258 = vector.broadcast %237 : vector<1x128xf32> to vector<8x128xf32>
    %259 = arith.addf %257, %258 : vector<8x128xf32>
    %260 = arith.truncf %259 : vector<8x128xf32> to vector<8x128xbf16>
    %c1_118 = arith.constant 1 : index
    %c0_119 = arith.constant 0 : index
    %c0_120 = arith.constant 0 : index
    %261 = vector.load %arg12[%c1_118, %c0_119, %c0_120] : memref<2x128x256xbf16, #tpu.memory_space<vmem>>, vector<1x128x256xbf16>
    %262 = vector.shape_cast %261 : vector<1x128x256xbf16> to vector<128x256xbf16>
    %cst_121 = arith.constant dense<0.000000e+00> : vector<8x256xf32>
    %263 = tpu.matmul %260, %262, %cst_121 {dimension_numbers = #tpu.dot_dimension_numbers<[1], [0], [0], [1], [0, 0, 1, 1], [], []>} : vector<8x128xbf16>, vector<128x256xbf16>, vector<8x256xf32> -> vector<8x256xf32>
    %c1_122 = arith.constant 1 : index
    %c0_123 = arith.constant 0 : index
    %c0_124 = arith.constant 0 : index
    %264 = vector.load %arg13[%c1_122, %c0_123, %c0_124] : memref<2x1x256xf32, #tpu.memory_space<vmem>>, vector<1x1x256xf32>
    %265 = vector.shape_cast %264 : vector<1x1x256xf32> to vector<1x256xf32>
    %266 = vector.broadcast %265 : vector<1x256xf32> to vector<8x256xf32>
    %267 = arith.addf %263, %266 : vector<8x256xf32>
    %268 = arith.mulf %267, %267 : vector<8x256xf32>
    %269 = arith.mulf %267, %268 : vector<8x256xf32>
    %cst_125 = arith.constant 4.471500e-02 : f32
    %270 = vector.broadcast %cst_125 : f32 to vector<8x256xf32>
    %271 = arith.mulf %270, %269 : vector<8x256xf32>
    %272 = arith.addf %267, %271 : vector<8x256xf32>
    %cst_126 = arith.constant 0.797884583 : f32
    %273 = vector.broadcast %cst_126 : f32 to vector<8x256xf32>
    %274 = arith.mulf %273, %272 : vector<8x256xf32>
    %275 = math.tanh %274 : vector<8x256xf32>
    %cst_127 = arith.constant 1.000000e+00 : f32
    %276 = vector.broadcast %cst_127 : f32 to vector<8x256xf32>
    %277 = arith.addf %276, %275 : vector<8x256xf32>
    %cst_128 = arith.constant 5.000000e-01 : f32
    %278 = vector.broadcast %cst_128 : f32 to vector<8x256xf32>
    %279 = arith.mulf %278, %277 : vector<8x256xf32>
    %280 = arith.mulf %267, %279 : vector<8x256xf32>
    %281 = arith.truncf %280 : vector<8x256xf32> to vector<8x256xbf16>
    %c1_129 = arith.constant 1 : index
    %c0_130 = arith.constant 0 : index
    %c0_131 = arith.constant 0 : index
    %282 = vector.load %arg14[%c1_129, %c0_130, %c0_131] : memref<2x256x128xbf16, #tpu.memory_space<vmem>>, vector<1x256x128xbf16>
    %283 = vector.shape_cast %282 : vector<1x256x128xbf16> to vector<256x128xbf16>
    %cst_132 = arith.constant dense<0.000000e+00> : vector<8x128xf32>
    %284 = tpu.matmul %281, %283, %cst_132 {dimension_numbers = #tpu.dot_dimension_numbers<[1], [0], [0], [1], [0, 0, 1, 1], [], []>} : vector<8x256xbf16>, vector<256x128xbf16>, vector<8x128xf32> -> vector<8x128xf32>
    %c1_133 = arith.constant 1 : index
    %c0_134 = arith.constant 0 : index
    %c0_135 = arith.constant 0 : index
    %285 = vector.load %arg15[%c1_133, %c0_134, %c0_135] : memref<2x1x128xf32, #tpu.memory_space<vmem>>, vector<1x1x128xf32>
    %286 = vector.shape_cast %285 : vector<1x1x128xf32> to vector<1x128xf32>
    %287 = vector.broadcast %286 : vector<1x128xf32> to vector<8x128xf32>
    %288 = arith.addf %284, %287 : vector<8x128xf32>
    %289 = arith.addf %259, %288 : vector<8x128xf32>
    %c1_136 = arith.constant 1 : index
    %c0_137 = arith.constant 0 : index
    %c0_138 = arith.constant 0 : index
    %290 = vector.load %arg16[%c1_136, %c0_137, %c0_138] : memref<2x1x128xf32, #tpu.memory_space<vmem>>, vector<1x1x128xf32>
    %291 = vector.shape_cast %290 : vector<1x1x128xf32> to vector<1x128xf32>
    %c1_139 = arith.constant 1 : index
    %c0_140 = arith.constant 0 : index
    %c0_141 = arith.constant 0 : index
    %292 = vector.load %arg17[%c1_139, %c0_140, %c0_141] : memref<2x1x128xf32, #tpu.memory_space<vmem>>, vector<1x1x128xf32>
    %293 = vector.shape_cast %292 : vector<1x1x128xf32> to vector<1x128xf32>
    %cst_142 = arith.constant dense<0.000000e+00> : vector<8xf32>
    %294 = vector.multi_reduction <add>, %289, %cst_142 [1] : vector<8x128xf32> to vector<8xf32>
    %295 = vector.shape_cast %294 : vector<8xf32> to vector<8x1xf32>
    %cst_143 = arith.constant 1.280000e+02 : f32
    %296 = vector.broadcast %cst_143 : f32 to vector<8x1xf32>
    %297 = arith.divf %295, %296 : vector<8x1xf32>
    %298 = vector.broadcast %297 : vector<8x1xf32> to vector<8x128xf32>
    %299 = arith.subf %289, %298 : vector<8x128xf32>
    %300 = arith.mulf %299, %299 : vector<8x128xf32>
    %cst_144 = arith.constant dense<0.000000e+00> : vector<8xf32>
    %301 = vector.multi_reduction <add>, %300, %cst_144 [1] : vector<8x128xf32> to vector<8xf32>
    %302 = vector.shape_cast %301 : vector<8xf32> to vector<8x1xf32>
    %cst_145 = arith.constant 1.280000e+02 : f32
    %303 = vector.broadcast %cst_145 : f32 to vector<8x1xf32>
    %304 = arith.divf %302, %303 : vector<8x1xf32>
    %305 = vector.broadcast %297 : vector<8x1xf32> to vector<8x128xf32>
    %306 = arith.subf %289, %305 : vector<8x128xf32>
    %cst_146 = arith.constant 9.99999996E-13 : f32
    %307 = vector.broadcast %cst_146 : f32 to vector<8x1xf32>
    %308 = arith.addf %304, %307 : vector<8x1xf32>
    %309 = math.rsqrt %308 : vector<8x1xf32>
    %310 = vector.broadcast %309 : vector<8x1xf32> to vector<8x128xf32>
    %311 = arith.mulf %306, %310 : vector<8x128xf32>
    %312 = vector.broadcast %291 : vector<1x128xf32> to vector<8x128xf32>
    %313 = arith.mulf %311, %312 : vector<8x128xf32>
    %314 = vector.broadcast %293 : vector<1x128xf32> to vector<8x128xf32>
    %315 = arith.addf %313, %314 : vector<8x128xf32>
    %c0_147 = arith.constant 0 : index
    %c0_148 = arith.constant 0 : index
    %316 = vector.load %arg20[%c0_147, %c0_148] : memref<8x128xf32, #tpu.memory_space<vmem>>, vector<8x128xf32>
    tpu.vector_store %arg20[%c0_147, %c0_148], %315 {strides = array<i32>} : memref<8x128xf32, #tpu.memory_space<vmem>>, vector<8x128xf32>,
    %317 = arith.index_cast %arg0 : i32 to index
    %c0_149 = arith.constant 0 : index
    %318 = memref.load %arg1[%317, %c0_149] : memref<2x4xi32, #tpu.memory_space<smem>>
    %319 = arith.index_cast %318 : i32 to index
    %c0_150 = arith.constant 0 : index
    %320 = vector.load %arg20[%319, %c0_150] : memref<8x128xf32, #tpu.memory_space<vmem>>, vector<1x128xf32>
    %c0_151 = arith.constant 0 : index
    %c0_152 = arith.constant 0 : index
    %c0_153 = arith.constant 0 : index
    %321 = vector.load %arg18[%c0_151, %c0_152, %c0_153] : memref<1x4x128xf32, #tpu.memory_space<vmem>>, vector<1x1x128xf32>
    %322 = vector.shape_cast %321 : vector<1x1x128xf32> to vector<1x128xf32>
    %323 = vector.shape_cast %320 : vector<1x128xf32> to vector<1x1x128xf32>
    tpu.vector_store %arg18[%c0_151, %c0_152, %c0_153], %323 {strides = array<i32>} : memref<1x4x128xf32, #tpu.memory_space<vmem>>, vector<1x1x128xf32>,
    %324 = arith.index_cast %arg0 : i32 to index
    %c1_154 = arith.constant 1 : index
    %325 = memref.load %arg1[%324, %c1_154] : memref<2x4xi32, #tpu.memory_space<smem>>
    %326 = arith.index_cast %325 : i32 to index
    %c0_155 = arith.constant 0 : index
    %327 = vector.load %arg20[%326, %c0_155] : memref<8x128xf32, #tpu.memory_space<vmem>>, vector<1x128xf32>
    %c0_156 = arith.constant 0 : index
    %c1_157 = arith.constant 1 : index
    %c0_158 = arith.constant 0 : index
    %328 = vector.load %arg18[%c0_156, %c1_157, %c0_158] : memref<1x4x128xf32, #tpu.memory_space<vmem>>, vector<1x1x128xf32>
    %329 = vector.shape_cast %328 : vector<1x1x128xf32> to vector<1x128xf32>
    %330 = vector.shape_cast %327 : vector<1x128xf32> to vector<1x1x128xf32>
    tpu.vector_store %arg18[%c0_156, %c1_157, %c0_158], %330 {strides = array<i32>} : memref<1x4x128xf32, #tpu.memory_space<vmem>>, vector<1x1x128xf32>,
    %331 = arith.index_cast %arg0 : i32 to index
    %c2 = arith.constant 2 : index
    %332 = memref.load %arg1[%331, %c2] : memref<2x4xi32, #tpu.memory_space<smem>>
    %333 = arith.index_cast %332 : i32 to index
    %c0_159 = arith.constant 0 : index
    %334 = vector.load %arg20[%333, %c0_159] : memref<8x128xf32, #tpu.memory_space<vmem>>, vector<1x128xf32>
    %c0_160 = arith.constant 0 : index
    %c2_161 = arith.constant 2 : index
    %c0_162 = arith.constant 0 : index
    %335 = vector.load %arg18[%c0_160, %c2_161, %c0_162] : memref<1x4x128xf32, #tpu.memory_space<vmem>>, vector<1x1x128xf32>
    %336 = vector.shape_cast %335 : vector<1x1x128xf32> to vector<1x128xf32>
    %337 = vector.shape_cast %334 : vector<1x128xf32> to vector<1x1x128xf32>
    tpu.vector_store %arg18[%c0_160, %c2_161, %c0_162], %337 {strides = array<i32>} : memref<1x4x128xf32, #tpu.memory_space<vmem>>, vector<1x1x128xf32>,
    %338 = arith.index_cast %arg0 : i32 to index
    %c3 = arith.constant 3 : index
    %339 = memref.load %arg1[%338, %c3] : memref<2x4xi32, #tpu.memory_space<smem>>
    %340 = arith.index_cast %339 : i32 to index
    %c0_163 = arith.constant 0 : index
    %341 = vector.load %arg20[%340, %c0_163] : memref<8x128xf32, #tpu.memory_space<vmem>>, vector<1x128xf32>
    %c0_164 = arith.constant 0 : index
    %c3_165 = arith.constant 3 : index
    %c0_166 = arith.constant 0 : index
    %342 = vector.load %arg18[%c0_164, %c3_165, %c0_166] : memref<1x4x128xf32, #tpu.memory_space<vmem>>, vector<1x1x128xf32>
    %343 = vector.shape_cast %342 : vector<1x1x128xf32> to vector<1x128xf32>
    %344 = vector.shape_cast %341 : vector<1x128xf32> to vector<1x1x128xf32>
    tpu.vector_store %arg18[%c0_164, %c3_165, %c0_166], %344 {strides = array<i32>} : memref<1x4x128xf32, #tpu.memory_space<vmem>>, vector<1x1x128xf32>,
    return
  }
  func.func @transform_0(%arg0: i32, %arg1: memref<2x4xi32, #tpu.memory_space<smem>>) -> (i32, i32, i32) {
    %c0_i32 = arith.constant 0 : i32
    %c0_i32_0 = arith.constant 0 : i32
    %c0_i32_1 = arith.constant 0 : i32
    return %arg0, %c0_i32, %c0_i32_0 : i32, i32, i32
  }
  func.func @transform_1(%arg0: i32, %arg1: memref<2x4xi32, #tpu.memory_space<smem>>) -> (i32, i32, i32) {
    %c0_i32 = arith.constant 0 : i32
    %c0_i32_0 = arith.constant 0 : i32
    %c0_i32_1 = arith.constant 0 : i32
    return %arg0, %c0_i32, %c0_i32_0 : i32, i32, i32
  }
  func.func @transform_2(%arg0: i32, %arg1: memref<2x4xi32, #tpu.memory_space<smem>>) -> (i32, i32) {
    %c0_i32 = arith.constant 0 : i32
    %c0_i32_0 = arith.constant 0 : i32
    %c0_i32_1 = arith.constant 0 : i32
    return %c0_i32, %c0_i32_0 : i32, i32
  }
  func.func @transform_3(%arg0: i32, %arg1: memref<2x4xi32, #tpu.memory_space<smem>>) -> (i32, i32) {
    %c0_i32 = arith.constant 0 : i32
    %c0_i32_0 = arith.constant 0 : i32
    %c0_i32_1 = arith.constant 0 : i32
    return %c0_i32, %c0_i32_0 : i32, i32
  }
  func.func @transform_4(%arg0: i32, %arg1: memref<2x4xi32, #tpu.memory_space<smem>>) -> (i32, i32, i32) {
    %c0_i32 = arith.constant 0 : i32
    %c0_i32_0 = arith.constant 0 : i32
    %c0_i32_1 = arith.constant 0 : i32
    %c0_i32_2 = arith.constant 0 : i32
    return %c0_i32, %c0_i32_0, %c0_i32_1 : i32, i32, i32
  }
  func.func @transform_5(%arg0: i32, %arg1: memref<2x4xi32, #tpu.memory_space<smem>>) -> (i32, i32, i32) {
    %c0_i32 = arith.constant 0 : i32
    %c0_i32_0 = arith.constant 0 : i32
    %c0_i32_1 = arith.constant 0 : i32
    %c0_i32_2 = arith.constant 0 : i32
    return %c0_i32, %c0_i32_0, %c0_i32_1 : i32, i32, i32
  }
  func.func @transform_6(%arg0: i32, %arg1: memref<2x4xi32, #tpu.memory_space<smem>>) -> (i32, i32, i32) {
    %c0_i32 = arith.constant 0 : i32
    %c0_i32_0 = arith.constant 0 : i32
    %c0_i32_1 = arith.constant 0 : i32
    %c0_i32_2 = arith.constant 0 : i32
    return %c0_i32, %c0_i32_0, %c0_i32_1 : i32, i32, i32
  }
  func.func @transform_7(%arg0: i32, %arg1: memref<2x4xi32, #tpu.memory_space<smem>>) -> (i32, i32, i32) {
    %c0_i32 = arith.constant 0 : i32
    %c0_i32_0 = arith.constant 0 : i32
    %c0_i32_1 = arith.constant 0 : i32
    %c0_i32_2 = arith.constant 0 : i32
    return %c0_i32, %c0_i32_0, %c0_i32_1 : i32, i32, i32
  }
  func.func @transform_8(%arg0: i32, %arg1: memref<2x4xi32, #tpu.memory_space<smem>>) -> (i32, i32, i32) {
    %c0_i32 = arith.constant 0 : i32
    %c0_i32_0 = arith.constant 0 : i32
    %c0_i32_1 = arith.constant 0 : i32
    %c0_i32_2 = arith.constant 0 : i32
    return %c0_i32, %c0_i32_0, %c0_i32_1 : i32, i32, i32
  }
  func.func @transform_9(%arg0: i32, %arg1: memref<2x4xi32, #tpu.memory_space<smem>>) -> (i32, i32, i32) {
    %c0_i32 = arith.constant 0 : i32
    %c0_i32_0 = arith.constant 0 : i32
    %c0_i32_1 = arith.constant 0 : i32
    %c0_i32_2 = arith.constant 0 : i32
    return %c0_i32, %c0_i32_0, %c0_i32_1 : i32, i32, i32
  }
  func.func @transform_10(%arg0: i32, %arg1: memref<2x4xi32, #tpu.memory_space<smem>>) -> (i32, i32, i32) {
    %c0_i32 = arith.constant 0 : i32
    %c0_i32_0 = arith.constant 0 : i32
    %c0_i32_1 = arith.constant 0 : i32
    %c0_i32_2 = arith.constant 0 : i32
    return %c0_i32, %c0_i32_0, %c0_i32_1 : i32, i32, i32
  }
  func.func @transform_11(%arg0: i32, %arg1: memref<2x4xi32, #tpu.memory_space<smem>>) -> (i32, i32, i32) {
    %c0_i32 = arith.constant 0 : i32
    %c0_i32_0 = arith.constant 0 : i32
    %c0_i32_1 = arith.constant 0 : i32
    %c0_i32_2 = arith.constant 0 : i32
    return %c0_i32, %c0_i32_0, %c0_i32_1 : i32, i32, i32
  }
  func.func @transform_12(%arg0: i32, %arg1: memref<2x4xi32, #tpu.memory_space<smem>>) -> (i32, i32, i32) {
    %c0_i32 = arith.constant 0 : i32
    %c0_i32_0 = arith.constant 0 : i32
    %c0_i32_1 = arith.constant 0 : i32
    %c0_i32_2 = arith.constant 0 : i32
    return %c0_i32, %c0_i32_0, %c0_i32_1 : i32, i32, i32
  }
  func.func @transform_13(%arg0: i32, %arg1: memref<2x4xi32, #tpu.memory_space<smem>>) -> (i32, i32, i32) {
    %c0_i32 = arith.constant 0 : i32
    %c0_i32_0 = arith.constant 0 : i32
    %c0_i32_1 = arith.constant 0 : i32
    %c0_i32_2 = arith.constant 0 : i32
    return %c0_i32, %c0_i32_0, %c0_i32_1 : i32, i32, i32
  }
  func.func @transform_14(%arg0: i32, %arg1: memref<2x4xi32, #tpu.memory_space<smem>>) -> (i32, i32, i32) {
    %c0_i32 = arith.constant 0 : i32
    %c0_i32_0 = arith.constant 0 : i32
    %c0_i32_1 = arith.constant 0 : i32
    %c0_i32_2 = arith.constant 0 : i32
    return %c0_i32, %c0_i32_0, %c0_i32_1 : i32, i32, i32
  }
  func.func @transform_15(%arg0: i32, %arg1: memref<2x4xi32, #tpu.memory_space<smem>>) -> (i32, i32, i32) {
    %c0_i32 = arith.constant 0 : i32
    %c0_i32_0 = arith.constant 0 : i32
    %c0_i32_1 = arith.constant 0 : i32
    %c0_i32_2 = arith.constant 0 : i32
    return %c0_i32, %c0_i32_0, %c0_i32_1 : i32, i32, i32
  }
  func.func @transform_16(%arg0: i32, %arg1: memref<2x4xi32, #tpu.memory_space<smem>>) -> (i32, i32, i32) {
    %c0_i32 = arith.constant 0 : i32
    %c0_i32_0 = arith.constant 0 : i32
    %c0_i32_1 = arith.constant 0 : i32
    return %arg0, %c0_i32, %c0_i32_0 : i32, i32, i32
  }
}

</mosaic_0001>

<llo_original>
// kernel: bert_forward.1
$region0: #{bert_forward.1}
  #allocation0 [shape = 'u32[]', space=smem, size = 0x4, offset = 0x4, fixed_abs, tag = 'smem constant byte address 0x4 - core index']
  #allocation1 [shape = 'u32[144,128]{1,0:T(1,128)}', space=vmem, size = 0x12000, scoped, tag = 'internal scratch']
  #allocation2 [shape = 'f32[8,128]{1,0:T(8,128)}', space=vmem, size = 0x1000, scoped, tag = 'scratch operand']
  #allocation3 [shape = 'f32[8,128]{1,0:T(8,128)}', space=vmem, size = 0x1000, scoped, tag = 'scratch operand']
  #allocation4 [shape = 's32[1]{0}', space=sflag, size = 0x4, scoped, tag = 'scoped memory for bert_forward.1']
  #allocation5 [shape = 'u8[1024]{0}', space=smem, size = 0x400, scoped, tag = 'prefetched SMEM operand 0']
  %s0 = inlined_call_operand.vmem [shape: s32[2,4], index: 0, kind: input, shape index: {}]
  %s1 = inlined_call_operand.vmem [shape: f32[2,8,128], index: 1, kind: input, shape index: {}]
  %s2 = inlined_call_operand.vmem [shape: f32[2,1,8], index: 2, kind: input, shape index: {}]
  %s3 = inlined_call_operand.vmem [shape: f32[1,128], index: 3, kind: input, shape index: {}]
  %s4 = inlined_call_operand.vmem [shape: f32[1,128], index: 4, kind: input, shape index: {}]
  %s5 = inlined_call_operand.hbm [shape: bf16[2,128,384], index: 5, kind: input, shape index: {}]
  %s6 = inlined_call_operand.vmem [shape: f32[2,1,384], index: 6, kind: input, shape index: {}]
  %s7 = inlined_call_operand.vmem [shape: bf16[2,128,128], index: 7, kind: input, shape index: {}]
  %s8 = inlined_call_operand.vmem [shape: f32[2,1,128], index: 8, kind: input, shape index: {}]
  %s9 = inlined_call_operand.vmem [shape: f32[2,1,128], index: 9, kind: input, shape index: {}]
  %s10 = inlined_call_operand.vmem [shape: f32[2,1,128], index: 10, kind: input, shape index: {}]
  %s11 = inlined_call_operand.hbm [shape: bf16[2,128,256], index: 11, kind: input, shape index: {}]
  %s12 = inlined_call_operand.vmem [shape: f32[2,1,256], index: 12, kind: input, shape index: {}]
  %s13 = inlined_call_operand.hbm [shape: bf16[2,256,128], index: 13, kind: input, shape index: {}]
  %s14 = inlined_call_operand.vmem [shape: f32[2,1,128], index: 14, kind: input, shape index: {}]
  %s15 = inlined_call_operand.vmem [shape: f32[2,1,128], index: 15, kind: input, shape index: {}]
  %s16 = inlined_call_operand.vmem [shape: f32[2,1,128], index: 16, kind: input, shape index: {}]
  %s17 = inlined_call_operand.hbm [shape: f32[2,4,128], index: 17, kind: output, shape index: {}]
  %s18 = sld [smem:[#allocation0]]
  $region109: #{bert_forward.1} parent=0
    _
  %s20 = ssub.s32 1, %s18
  %s21 = scalar_select 0, %s20, %s18
  %s22 = sshll.u32 %s0, 4
  %s23 = int_to_ptr.vmem [resolvable:$true] %s22
  %25 = dma.vmem_to_smem %s23, 32, [#allocation5], [#allocation4]
  %26 = dma.done [#allocation4], 32
  %27 = sfence
  $region1: #{bert_forward.1} parent=0
    #allocation6 [shape = 'u8[196608]{0}', space=vmem, size = 0x30000, scoped, tag = 'input window, operand 5, single buffered']
    #allocation7 [shape = 's32[2]{0}', space=sflag, size = 0x8, scoped, tag = 'scoped memory for bert_forward.1']
    #allocation8 [shape = 's32[2]{0}', space=sflag, size = 0x8, scoped, tag = 'scoped memory for bert_forward.1']
    #allocation9 [shape = 'u8[131072]{0}', space=vmem, size = 0x20000, scoped, tag = 'input window, operand 11, single buffered']
    #allocation10 [shape = 's32[1]{0}', space=sflag, size = 0x4, scoped, tag = 'scoped memory for bert_forward.1']
    #allocation11 [shape = 'u8[131072]{0}', space=vmem, size = 0x20000, scoped, tag = 'input window, operand 13, single buffered']
    #allocation12 [shape = 'u8[4096]{0}', space=vmem, size = 0x1000, scoped, tag = 'output window, operand 0']
    %28 = vsyncpa [#allocation7], 0
    %29 = vsyncpa [#allocation10], 0
    %30 = vsyncpa [#allocation8], 0
    %s31 = scalar_lea.sflag [#allocation8], 1
    %32 = vsyncpa %s31, 0
    loop: start=0, step=1, limit=4
    $region2: #{bert_forward.1} parent=1 // loop_pre_header
      _
    $region3: #{bert_forward.1} parent=1 // loop_header
      %s34 = sphi 0, %s38
      %p35 = scmp.ge.s32.totalorder %s34, 4
      %s44 = sphi 0, %s46
      %s47 = sphi 0, %s44
      %s48 = sphi 0, %s47
      %s64 = sphi 0, %s48
      %s70 = sphi 0, %s72
      %s73 = sphi 0, %s70
      %s74 = sphi 0, %s73
      %s90 = sphi 0, %s74
      %s94 = sphi 0, %s94
      %s96 = sphi 0, %s94
      %s97 = sphi 0, %s96
      %s111 = sphi 0, %s97
      %s115 = sphi 0, %s115
      %s117 = sphi 0, %s115
      %s118 = sphi 0, %s117
      %s132 = sphi 0, %s118
      %s136 = sphi 0, %s136
      %s138 = sphi 0, %s136
      %s139 = sphi 0, %s138
      %s153 = sphi 0, %s139
      %s157 = sphi 0, %s157
      %s159 = sphi 0, %s157
      %s160 = sphi 0, %s159
      %s174 = sphi 0, %s160
      %s178 = sphi 0, %s178
      %s180 = sphi 0, %s178
      %s181 = sphi 0, %s180
      %s195 = sphi 0, %s181
      %s199 = sphi 0, %s199
      %s201 = sphi 0, %s199
      %s202 = sphi 0, %s201
      %s216 = sphi 0, %s202
      %s220 = sphi 0, %s220
      %s222 = sphi 0, %s220
      %s223 = sphi 0, %s222
      %s237 = sphi 0, %s223
      %s241 = sphi 0, %s241
      %s243 = sphi 0, %s241
      %s244 = sphi 0, %s243
      %s258 = sphi 0, %s244
      %s262 = sphi 0, %s262
      %s264 = sphi 0, %s262
      %s265 = sphi 0, %s264
      %s279 = sphi 0, %s265
      %s283 = sphi 0, %s283
      %s285 = sphi 0, %s283
      %s286 = sphi 0, %s285
      %s300 = sphi 0, %s286
      %s304 = sphi 0, %s304
      %s306 = sphi 0, %s304
      %s307 = sphi 0, %s306
      %s321 = sphi 0, %s307
      %s325 = sphi 0, %s325
      %s327 = sphi 0, %s325
      %s328 = sphi 0, %s327
      %s342 = sphi 0, %s328
      %s346 = sphi 0, %s346
      %s348 = sphi 0, %s346
      %s349 = sphi 0, %s348
      %s363 = sphi 0, %s349
      %s367 = sphi 0, %s367
      %s369 = sphi 0, %s367
      %s370 = sphi 0, %s369
      %s384 = sphi 0, %s370
      %s390 = sphi 0, %s392
      %s393 = sphi 0, %s390
      %s394 = sphi 0, %s393
      %s410 = sphi 0, %s394
    $region4: #{bert_forward.1} parent=1 // loop_header_branch
      %37 = sbr.rel (%p35) target = $region8
    $region5: #{bert_forward.1} parent=1 // loop_body
      %s39 = ssub.s32 %s34, 1
      %s40 = ssub.s32 %s34, 2
      %s41 = sadd.s32 %s34, 1
      %s42 = ssub.s32 %s34, %s41
      %p43 = scmp.eq.s32.totalorder %s42, 0
      %s45 = sadd.s32 %s44, 1
      %s46 = scalar_select %p43, %s44, %s45
      %p49 = pneg %p43
      %p50 = scmp.eq.s32.totalorder %s34, 1
      %p51 = por %p49, %p50
      %p52 = scmp.ne.s32.totalorder %s44, %s47
      %p53 = scmp.eq.s32.totalorder %s34, 0
      %p54 = por %p52, %p53
      %p55 = scmp.ne.s32.totalorder %s44, %s47
      %p56 = scmp.eq.s32.totalorder %s39, 1
      %p57 = por %p55, %p56
      %p58 = scmp.ne.s32.totalorder %s47, %s48
      %p59 = scmp.eq.s32.totalorder %s39, 0
      %p60 = por %p58, %p59
      %p61 = scmp.ne.s32.totalorder %s47, %s48
      %p62 = scmp.eq.s32.totalorder %s40, 1
      %p63 = por %p61, %p62
      %p65 = scmp.ne.s32.totalorder %s48, %s64
      %p66 = scmp.eq.s32.totalorder %s40, 0
      %p67 = por %p65, %p66
      %s68 = ssub.s32 %s34, %s41
      %p69 = scmp.eq.s32.totalorder %s68, 0
      %s71 = sadd.s32 %s70, 1
      %s72 = scalar_select %p69, %s70, %s71
      %p75 = pneg %p69
      %p76 = scmp.eq.s32.totalorder %s34, 1
      %p77 = por %p75, %p76
      %p78 = scmp.ne.s32.totalorder %s70, %s73
      %p79 = scmp.eq.s32.totalorder %s34, 0
      %p80 = por %p78, %p79
      %p81 = scmp.ne.s32.totalorder %s70, %s73
      %p82 = scmp.eq.s32.totalorder %s39, 1
      %p83 = por %p81, %p82
      %p84 = scmp.ne.s32.totalorder %s73, %s74
      %p85 = scmp.eq.s32.totalorder %s39, 0
      %p86 = por %p84, %p85
      %p87 = scmp.ne.s32.totalorder %s73, %s74
      %p88 = scmp.eq.s32.totalorder %s40, 1
      %p89 = por %p87, %p88
      %p91 = scmp.ne.s32.totalorder %s74, %s90
      %p92 = scmp.eq.s32.totalorder %s40, 0
      %p93 = por %p91, %p92
      %s95 = sadd.s32 %s94, 1
      %p98 = scmp.eq.s32.totalorder %s34, 1
      %p99 = scmp.ne.s32.totalorder %s94, %s96
      %p100 = scmp.eq.s32.totalorder %s34, 0
      %p101 = por %p99, %p100
      %p102 = scmp.ne.s32.totalorder %s94, %s96
      %p103 = scmp.eq.s32.totalorder %s39, 1
      %p104 = por %p102, %p103
      %p105 = scmp.ne.s32.totalorder %s96, %s97
      %p106 = scmp.eq.s32.totalorder %s39, 0
      %p107 = por %p105, %p106
      %p108 = scmp.ne.s32.totalorder %s96, %s97
      %p109 = scmp.eq.s32.totalorder %s40, 1
      %p110 = por %p108, %p109
      %p112 = scmp.ne.s32.totalorder %s97, %s111
      %p113 = scmp.eq.s32.totalorder %s40, 0
      %p114 = por %p112, %p113
      %s116 = sadd.s32 %s115, 1
      %p119 = scmp.eq.s32.totalorder %s34, 1
      %p120 = scmp.ne.s32.totalorder %s115, %s117
      %p121 = scmp.eq.s32.totalorder %s34, 0
      %p122 = por %p120, %p121
      %p123 = scmp.ne.s32.totalorder %s115, %s117
      %p124 = scmp.eq.s32.totalorder %s39, 1
      %p125 = por %p123, %p124
      %p126 = scmp.ne.s32.totalorder %s117, %s118
      %p127 = scmp.eq.s32.totalorder %s39, 0
      %p128 = por %p126, %p127
      %p129 = scmp.ne.s32.totalorder %s117, %s118
      %p130 = scmp.eq.s32.totalorder %s40, 1
      %p131 = por %p129, %p130
      %p133 = scmp.ne.s32.totalorder %s118, %s132
      %p134 = scmp.eq.s32.totalorder %s40, 0
      %p135 = por %p133, %p134
      %s137 = sadd.s32 %s136, 1
      %p140 = scmp.eq.s32.totalorder %s34, 1
      %p141 = scmp.ne.s32.totalorder %s136, %s138
      %p142 = scmp.eq.s32.totalorder %s34, 0
      %p143 = por %p141, %p142
      %p144 = scmp.ne.s32.totalorder %s136, %s138
      %p145 = scmp.eq.s32.totalorder %s39, 1
      %p146 = por %p144, %p145
      %p147 = scmp.ne.s32.totalorder %s138, %s139
      %p148 = scmp.eq.s32.totalorder %s39, 0
      %p149 = por %p147, %p148
      %p150 = scmp.ne.s32.totalorder %s138, %s139
      %p151 = scmp.eq.s32.totalorder %s40, 1
      %p152 = por %p150, %p151
      %p154 = scmp.ne.s32.totalorder %s139, %s153
      %p155 = scmp.eq.s32.totalorder %s40, 0
      %p156 = por %p154, %p155
      %s158 = sadd.s32 %s157, 1
      %p161 = scmp.eq.s32.totalorder %s34, 1
      %p162 = scmp.ne.s32.totalorder %s157, %s159
      %p163 = scmp.eq.s32.totalorder %s34, 0
      %p164 = por %p162, %p163
      %p165 = scmp.ne.s32.totalorder %s157, %s159
      %p166 = scmp.eq.s32.totalorder %s39, 1
      %p167 = por %p165, %p166
      %p168 = scmp.ne.s32.totalorder %s159, %s160
      %p169 = scmp.eq.s32.totalorder %s39, 0
      %p170 = por %p168, %p169
      %p171 = scmp.ne.s32.totalorder %s159, %s160
      %p172 = scmp.eq.s32.totalorder %s40, 1
      %p173 = por %p171, %p172
      %p175 = scmp.ne.s32.totalorder %s160, %s174
      %p176 = scmp.eq.s32.totalorder %s40, 0
      %p177 = por %p175, %p176
      %s179 = sadd.s32 %s178, 1
      %p182 = scmp.eq.s32.totalorder %s34, 1
      %p183 = scmp.ne.s32.totalorder %s178, %s180
      %p184 = scmp.eq.s32.totalorder %s34, 0
      %p185 = por %p183, %p184
      %p186 = scmp.ne.s32.totalorder %s178, %s180
      %p187 = scmp.eq.s32.totalorder %s39, 1
      %p188 = por %p186, %p187
      %p189 = scmp.ne.s32.totalorder %s180, %s181
      %p190 = scmp.eq.s32.totalorder %s39, 0
      %p191 = por %p189, %p190
      %p192 = scmp.ne.s32.totalorder %s180, %s181
      %p193 = scmp.eq.s32.totalorder %s40, 1
      %p194 = por %p192, %p193
      %p196 = scmp.ne.s32.totalorder %s181, %s195
      %p197 = scmp.eq.s32.totalorder %s40, 0
      %p198 = por %p196, %p197
      %s200 = sadd.s32 %s199, 1
      %p203 = scmp.eq.s32.totalorder %s34, 1
      %p204 = scmp.ne.s32.totalorder %s199, %s201
      %p205 = scmp.eq.s32.totalorder %s34, 0
      %p206 = por %p204, %p205
      %p207 = scmp.ne.s32.totalorder %s199, %s201
      %p208 = scmp.eq.s32.totalorder %s39, 1
      %p209 = por %p207, %p208
      %p210 = scmp.ne.s32.totalorder %s201, %s202
      %p211 = scmp.eq.s32.totalorder %s39, 0
      %p212 = por %p210, %p211
      %p213 = scmp.ne.s32.totalorder %s201, %s202
      %p214 = scmp.eq.s32.totalorder %s40, 1
      %p215 = por %p213, %p214
      %p217 = scmp.ne.s32.totalorder %s202, %s216
      %p218 = scmp.eq.s32.totalorder %s40, 0
      %p219 = por %p217, %p218
      %s221 = sadd.s32 %s220, 1
      %p224 = scmp.eq.s32.totalorder %s34, 1
      %p225 = scmp.ne.s32.totalorder %s220, %s222
      %p226 = scmp.eq.s32.totalorder %s34, 0
      %p227 = por %p225, %p226
      %p228 = scmp.ne.s32.totalorder %s220, %s222
      %p229 = scmp.eq.s32.totalorder %s39, 1
      %p230 = por %p228, %p229
      %p231 = scmp.ne.s32.totalorder %s222, %s223
      %p232 = scmp.eq.s32.totalorder %s39, 0
      %p233 = por %p231, %p232
      %p234 = scmp.ne.s32.totalorder %s222, %s223
      %p235 = scmp.eq.s32.totalorder %s40, 1
      %p236 = por %p234, %p235
      %p238 = scmp.ne.s32.totalorder %s223, %s237
      %p239 = scmp.eq.s32.totalorder %s40, 0
      %p240 = por %p238, %p239
      %s242 = sadd.s32 %s241, 1
      %p245 = scmp.eq.s32.totalorder %s34, 1
      %p246 = scmp.ne.s32.totalorder %s241, %s243
      %p247 = scmp.eq.s32.totalorder %s34, 0
      %p248 = por %p246, %p247
      %p249 = scmp.ne.s32.totalorder %s241, %s243
      %p250 = scmp.eq.s32.totalorder %s39, 1
      %p251 = por %p249, %p250
      %p252 = scmp.ne.s32.totalorder %s243, %s244
      %p253 = scmp.eq.s32.totalorder %s39, 0
      %p254 = por %p252, %p253
      %p255 = scmp.ne.s32.totalorder %s243, %s244
      %p256 = scmp.eq.s32.totalorder %s40, 1
      %p257 = por %p255, %p256
      %p259 = scmp.ne.s32.totalorder %s244, %s258
      %p260 = scmp.eq.s32.totalorder %s40, 0
      %p261 = por %p259, %p260
      %s263 = sadd.s32 %s262, 1
      %p266 = scmp.eq.s32.totalorder %s34, 1
      %p267 = scmp.ne.s32.totalorder %s262, %s264
      %p268 = scmp.eq.s32.totalorder %s34, 0
      %p269 = por %p267, %p268
      %p270 = scmp.ne.s32.totalorder %s262, %s264
      %p271 = scmp.eq.s32.totalorder %s39, 1
      %p272 = por %p270, %p271
      %p273 = scmp.ne.s32.totalorder %s264, %s265
      %p274 = scmp.eq.s32.totalorder %s39, 0
      %p275 = por %p273, %p274
      %p276 = scmp.ne.s32.totalorder %s264, %s265
      %p277 = scmp.eq.s32.totalorder %s40, 1
      %p278 = por %p276, %p277
      %p280 = scmp.ne.s32.totalorder %s265, %s279
      %p281 = scmp.eq.s32.totalorder %s40, 0
      %p282 = por %p280, %p281
      %s284 = sadd.s32 %s283, 1
      %p287 = scmp.eq.s32.totalorder %s34, 1
      %p288 = scmp.ne.s32.totalorder %s283, %s285
      %p289 = scmp.eq.s32.totalorder %s34, 0
      %p290 = por %p288, %p289
      %p291 = scmp.ne.s32.totalorder %s283, %s285
      %p292 = scmp.eq.s32.totalorder %s39, 1
      %p293 = por %p291, %p292
      %p294 = scmp.ne.s32.totalorder %s285, %s286
      %p295 = scmp.eq.s32.totalorder %s39, 0
      %p296 = por %p294, %p295
      %p297 = scmp.ne.s32.totalorder %s285, %s286
      %p298 = scmp.eq.s32.totalorder %s40, 1
      %p299 = por %p297, %p298
      %p301 = scmp.ne.s32.totalorder %s286, %s300
      %p302 = scmp.eq.s32.totalorder %s40, 0
      %p303 = por %p301, %p302
      %s305 = sadd.s32 %s304, 1
      %p308 = scmp.eq.s32.totalorder %s34, 1
      %p309 = scmp.ne.s32.totalorder %s304, %s306
      %p310 = scmp.eq.s32.totalorder %s34, 0
      %p311 = por %p309, %p310
      %p312 = scmp.ne.s32.totalorder %s304, %s306
      %p313 = scmp.eq.s32.totalorder %s39, 1
      %p314 = por %p312, %p313
      %p315 = scmp.ne.s32.totalorder %s306, %s307
      %p316 = scmp.eq.s32.totalorder %s39, 0
      %p317 = por %p315, %p316
      %p318 = scmp.ne.s32.totalorder %s306, %s307
      %p319 = scmp.eq.s32.totalorder %s40, 1
      %p320 = por %p318, %p319
      %p322 = scmp.ne.s32.totalorder %s307, %s321
      %p323 = scmp.eq.s32.totalorder %s40, 0
      %p324 = por %p322, %p323
      %s326 = sadd.s32 %s325, 1
      %p329 = scmp.eq.s32.totalorder %s34, 1
      %p330 = scmp.ne.s32.totalorder %s325, %s327
      %p331 = scmp.eq.s32.totalorder %s34, 0
      %p332 = por %p330, %p331
      %p333 = scmp.ne.s32.totalorder %s325, %s327
      %p334 = scmp.eq.s32.totalorder %s39, 1
      %p335 = por %p333, %p334
      %p336 = scmp.ne.s32.totalorder %s327, %s328
      %p337 = scmp.eq.s32.totalorder %s39, 0
      %p338 = por %p336, %p337
      %p339 = scmp.ne.s32.totalorder %s327, %s328
      %p340 = scmp.eq.s32.totalorder %s40, 1
      %p341 = por %p339, %p340
      %p343 = scmp.ne.s32.totalorder %s328, %s342
      %p344 = scmp.eq.s32.totalorder %s40, 0
      %p345 = por %p343, %p344
      %s347 = sadd.s32 %s346, 1
      %p350 = scmp.eq.s32.totalorder %s34, 1
      %p351 = scmp.ne.s32.totalorder %s346, %s348
      %p352 = scmp.eq.s32.totalorder %s34, 0
      %p353 = por %p351, %p352
      %p354 = scmp.ne.s32.totalorder %s346, %s348
      %p355 = scmp.eq.s32.totalorder %s39, 1
      %p356 = por %p354, %p355
      %p357 = scmp.ne.s32.totalorder %s348, %s349
      %p358 = scmp.eq.s32.totalorder %s39, 0
      %p359 = por %p357, %p358
      %p360 = scmp.ne.s32.totalorder %s348, %s349
      %p361 = scmp.eq.s32.totalorder %s40, 1
      %p362 = por %p360, %p361
      %p364 = scmp.ne.s32.totalorder %s349, %s363
      %p365 = scmp.eq.s32.totalorder %s40, 0
      %p366 = por %p364, %p365
      %s368 = sadd.s32 %s367, 1
      %p371 = scmp.eq.s32.totalorder %s34, 1
      %p372 = scmp.ne.s32.totalorder %s367, %s369
      %p373 = scmp.eq.s32.totalorder %s34, 0
      %p374 = por %p372, %p373
      %p375 = scmp.ne.s32.totalorder %s367, %s369
      %p376 = scmp.eq.s32.totalorder %s39, 1
      %p377 = por %p375, %p376
      %p378 = scmp.ne.s32.totalorder %s369, %s370
      %p379 = scmp.eq.s32.totalorder %s39, 0
      %p380 = por %p378, %p379
      %p381 = scmp.ne.s32.totalorder %s369, %s370
      %p382 = scmp.eq.s32.totalorder %s40, 1
      %p383 = por %p381, %p382
      %p385 = scmp.ne.s32.totalorder %s370, %s384
      %p386 = scmp.eq.s32.totalorder %s40, 0
      %p387 = por %p385, %p386
      %s388 = ssub.s32 %s34, %s41
      %p389 = scmp.eq.s32.totalorder %s388, 0
      %s391 = sadd.s32 %s390, 1
      %s392 = scalar_select %p389, %s390, %s391
      %p395 = pneg %p389
      %p396 = scmp.eq.s32.totalorder %s34, 1
      %p397 = por %p395, %p396
      %p398 = scmp.ne.s32.totalorder %s390, %s393
      %p399 = scmp.eq.s32.totalorder %s34, 0
      %p400 = por %p398, %p399
      %p401 = scmp.ne.s32.totalorder %s390, %s393
      %p402 = scmp.eq.s32.totalorder %s39, 1
      %p403 = por %p401, %p402
      %p404 = scmp.ne.s32.totalorder %s393, %s394
      %p405 = scmp.eq.s32.totalorder %s39, 0
      %p406 = por %p404, %p405
      %p407 = scmp.ne.s32.totalorder %s393, %s394
      %p408 = scmp.eq.s32.totalorder %s40, 1
      %p409 = por %p407, %p408
      %p411 = scmp.ne.s32.totalorder %s394, %s410
      %p412 = scmp.eq.s32.totalorder %s40, 0
      %p413 = por %p411, %p412
      %p414 = scmp.le.s32.totalorder 1, %s34
      %p415 = scmp.lt.s32.totalorder %s34, 3
      %p416 = pnand %p414, %p415
      %p417 = pneg %p416
      // Predicated region
      $region9: #{bert_forward.1} parent=5 // pred_check
        _
      $region10: #{bert_forward.1} parent=5 // pred_check_branch
        %419 = sbr.rel (%p416) target = $region12
      $region11: #{bert_forward.1} parent=5 // pred_region
        %s420 = ssub.s32 %s34, 1
        // Predicated region
        $region13: #{bert_forward.1} parent=11 // pred_check
          %p421 = pneg %p107
        $region14: #{bert_forward.1} parent=11 // pred_check_branch
          %423 = sbr.rel (%p421) target = $region16
        $region15: #{bert_forward.1} parent=11 // pred_region
          _
        $region16: #{bert_forward.1} parent=11 // pred_fallthru
          _
        // Predicated region
        $region17: #{bert_forward.1} parent=11 // pred_check
          %p424 = pneg %p128
        $region18: #{bert_forward.1} parent=11 // pred_check_branch
          %426 = sbr.rel (%p424) target = $region20
        $region19: #{bert_forward.1} parent=11 // pred_region
          _
        $region20: #{bert_forward.1} parent=11 // pred_fallthru
          _
        // Predicated region
        $region21: #{bert_forward.1} parent=11 // pred_check
          %p427 = pneg %p149
        $region22: #{bert_forward.1} parent=11 // pred_check_branch
          %429 = sbr.rel (%p427) target = $region24
        $region23: #{bert_forward.1} parent=11 // pred_region
          %s431 = ssub.s32 6144, 6144
          %432 = vsyncadd [#allocation7], %s431
          %s433 = sshll.u32 [#allocation6], 4
          %s434 = int_to_ptr.vmem [resolvable:$true] %s433
          %439 = dma.hbm_to_vmem [thread:$0]  %s5, 6144, %s434, [#allocation7], 192, 192, 12
        $region24: #{bert_forward.1} parent=11 // pred_fallthru
          _
        // Predicated region
        $region25: #{bert_forward.1} parent=11 // pred_check
          %p440 = pneg %p170
        $region26: #{bert_forward.1} parent=11 // pred_check_branch
          %442 = sbr.rel (%p440) target = $region28
        $region27: #{bert_forward.1} parent=11 // pred_region
          _
        $region28: #{bert_forward.1} parent=11 // pred_fallthru
          _
        // Predicated region
        $region29: #{bert_forward.1} parent=11 // pred_check
          %p443 = pneg %p191
        $region30: #{bert_forward.1} parent=11 // pred_check_branch
          %445 = sbr.rel (%p443) target = $region32
        $region31: #{bert_forward.1} parent=11 // pred_region
          _
        $region32: #{bert_forward.1} parent=11 // pred_fallthru
          _
        // Predicated region
        $region33: #{bert_forward.1} parent=11 // pred_check
          %p446 = pneg %p212
        $region34: #{bert_forward.1} parent=11 // pred_check_branch
          %448 = sbr.rel (%p446) target = $region36
        $region35: #{bert_forward.1} parent=11 // pred_region
          _
        $region36: #{bert_forward.1} parent=11 // pred_fallthru
          _
        // Predicated region
        $region37: #{bert_forward.1} parent=11 // pred_check
          %p449 = pneg %p233
        $region38: #{bert_forward.1} parent=11 // pred_check_branch
          %451 = sbr.rel (%p449) target = $region40
        $region39: #{bert_forward.1} parent=11 // pred_region
          _
        $region40: #{bert_forward.1} parent=11 // pred_fallthru
          _
        // Predicated region
        $region41: #{bert_forward.1} parent=11 // pred_check
          %p452 = pneg %p254
        $region42: #{bert_forward.1} parent=11 // pred_check_branch
          %454 = sbr.rel (%p452) target = $region44
        $region43: #{bert_forward.1} parent=11 // pred_region
          _
        $region44: #{bert_forward.1} parent=11 // pred_fallthru
          _
        // Predicated region
        $region45: #{bert_forward.1} parent=11 // pred_check
          %p455 = pneg %p275
        $region46: #{bert_forward.1} parent=11 // pred_check_branch
          %457 = sbr.rel (%p455) target = $region48
        $region47: #{bert_forward.1} parent=11 // pred_region
          %s459 = ssub.s32 4096, 4096
          %460 = vsyncadd [#allocation10], %s459
          %s461 = sshll.u32 [#allocation9], 4
          %s462 = int_to_ptr.vmem [resolvable:$true] %s461
          %467 = dma.hbm_to_vmem [thread:$0]  %s11, 4096, %s462, [#allocation10], 128, 128, 8
        $region48: #{bert_forward.1} parent=11 // pred_fallthru
          _
        // Predicated region
        $region49: #{bert_forward.1} parent=11 // pred_check
          %p468 = pneg %p296
        $region50: #{bert_forward.1} parent=11 // pred_check_branch
          %470 = sbr.rel (%p468) target = $region52
        $region51: #{bert_forward.1} parent=11 // pred_region
          _
        $region52: #{bert_forward.1} parent=11 // pred_fallthru
          _
        // Predicated region
        $region53: #{bert_forward.1} parent=11 // pred_check
          %p471 = pneg %p317
        $region54: #{bert_forward.1} parent=11 // pred_check_branch
          %473 = sbr.rel (%p471) target = $region56
        $region55: #{bert_forward.1} parent=11 // pred_region
          %s475 = ssub.s32 4096, 4096
          %476 = vsyncadd [#allocation10], %s475
          %s477 = sshll.u32 [#allocation11], 4
          %s478 = int_to_ptr.vmem [resolvable:$true] %s477
          %483 = dma.hbm_to_vmem [thread:$0]  %s13, 4096, %s478, [#allocation10], 64, 64, 4
        $region56: #{bert_forward.1} parent=11 // pred_fallthru
          _
        // Predicated region
        $region57: #{bert_forward.1} parent=11 // pred_check
          %p484 = pneg %p338
        $region58: #{bert_forward.1} parent=11 // pred_check_branch
          %486 = sbr.rel (%p484) target = $region60
        $region59: #{bert_forward.1} parent=11 // pred_region
          _
        $region60: #{bert_forward.1} parent=11 // pred_fallthru
          _
        // Predicated region
        $region61: #{bert_forward.1} parent=11 // pred_check
          %p487 = pneg %p359
        $region62: #{bert_forward.1} parent=11 // pred_check_branch
          %489 = sbr.rel (%p487) target = $region64
        $region63: #{bert_forward.1} parent=11 // pred_region
          _
        $region64: #{bert_forward.1} parent=11 // pred_fallthru
          _
        // Predicated region
        $region65: #{bert_forward.1} parent=11 // pred_check
          %p490 = pneg %p380
        $region66: #{bert_forward.1} parent=11 // pred_check_branch
          %492 = sbr.rel (%p490) target = $region68
        $region67: #{bert_forward.1} parent=11 // pred_region
          _
        $region68: #{bert_forward.1} parent=11 // pred_fallthru
          _
      $region12: #{bert_forward.1} parent=5 // pred_fallthru
        _
      %p493 = scmp.lt.s32.totalorder %s34, 2
      // Predicated region
      $region69: #{bert_forward.1} parent=5 // pred_check
        %p494 = pneg %p493
      $region70: #{bert_forward.1} parent=5 // pred_check_branch
        %496 = sbr.rel (%p494) target = $region72
      $region71: #{bert_forward.1} parent=5 // pred_region
        // Predicated region
        $region73: #{bert_forward.1} parent=71 // pred_check
          %p497 = pneg %p54
        $region74: #{bert_forward.1} parent=71 // pred_check_branch
          %499 = sbr.rel (%p497) target = $region76
        $region75: #{bert_forward.1} parent=71 // pred_region
          %p500 = scmp.lt.s32.totalorder %s34, 1
          %s501 = scalar_select %p500, %s34, 1
          %s502 = smul.addr %s501, 8
          %s503 = scalar_lea.vmem %s1, %s502
        $region76: #{bert_forward.1} parent=71 // pred_fallthru
          _
        // Predicated region
        $region77: #{bert_forward.1} parent=71 // pred_check
          %p504 = pneg %p80
        $region78: #{bert_forward.1} parent=71 // pred_check_branch
          %506 = sbr.rel (%p504) target = $region80
        $region79: #{bert_forward.1} parent=71 // pred_region
          %p507 = scmp.lt.s32.totalorder %s34, 1
          %s508 = scalar_select %p507, %s34, 1
          %s509 = scalar_lea.vmem %s2, %s508
        $region80: #{bert_forward.1} parent=71 // pred_fallthru
          _
      $region72: #{bert_forward.1} parent=5 // pred_fallthru
        _
      %p510 = scmp.le.s32.totalorder 1, %s34
      %p511 = scmp.lt.s32.totalorder %s34, 3
      %p512 = pnand %p510, %p511
      %p513 = pneg %p512
      // Predicated region
      $region81: #{bert_forward.1} parent=5 // pred_check
        _
      $region82: #{bert_forward.1} parent=5 // pred_check_branch
        %515 = sbr.rel (%p512) target = $region84
      $region83: #{bert_forward.1} parent=5 // pred_region
        %s516 = ssub.s32 %s34, 1
        // Predicated region
        $region85: #{bert_forward.1} parent=83 // pred_check
          %p517 = pneg %p149
        $region86: #{bert_forward.1} parent=83 // pred_check_branch
          %519 = sbr.rel (%p517) target = $region88
        $region87: #{bert_forward.1} parent=83 // pred_region
          %520 = dma.done [#allocation7], 6144
        $region88: #{bert_forward.1} parent=83 // pred_fallthru
          _
        // Predicated region
        $region89: #{bert_forward.1} parent=83 // pred_check
          %p521 = pneg %p275
        $region90: #{bert_forward.1} parent=83 // pred_check_branch
          %523 = sbr.rel (%p521) target = $region92
        $region91: #{bert_forward.1} parent=83 // pred_region
          %524 = dma.done [#allocation10], 4096
        $region92: #{bert_forward.1} parent=83 // pred_fallthru
          _
        // Predicated region
        $region93: #{bert_forward.1} parent=83 // pred_check
          %p525 = pneg %p317
        $region94: #{bert_forward.1} parent=83 // pred_check_branch
          %527 = sbr.rel (%p525) target = $region96
        $region95: #{bert_forward.1} parent=83 // pred_region
          %528 = dma.done [#allocation10], 4096
        $region96: #{bert_forward.1} parent=83 // pred_fallthru
          _
        %p529 = scmp.lt.s32.totalorder %s39, 1
        %s530 = scalar_select %p529, %s39, 1
        %s531 = smul.addr %s530, 8
        %s532 = scalar_lea.vmem %s1, %s531
        %p533 = pneg %p60
        %p534 = pneg %p57
        %p535 = scmp.lt.s32.totalorder %s39, 1
        %s536 = scalar_select %p535, %s39, 1
        %s537 = scalar_lea.vmem %s2, %s536
        %p538 = pneg %p86
        %p539 = pneg %p83
        %p540 = pneg %p107
        %p541 = pneg %p104
        %p542 = pneg %p128
        %p543 = pneg %p125
        %p544 = pneg %p149
        %p545 = pneg %p146
        %p546 = pneg %p170
        %p547 = pneg %p167
        %p548 = pneg %p191
        %p549 = pneg %p188
        %p550 = pneg %p212
        %p551 = pneg %p209
        %p552 = pneg %p233
        %p553 = pneg %p230
        %p554 = pneg %p254
        %p555 = pneg %p251
        %p556 = pneg %p275
        %p557 = pneg %p272
        %p558 = pneg %p296
        %p559 = pneg %p293
        %p560 = pneg %p317
        %p561 = pneg %p314
        %p562 = pneg %p338
        %p563 = pneg %p335
        %p564 = pneg %p359
        %p565 = pneg %p356
        %p566 = pneg %p380
        %p567 = pneg %p377
        %p568 = pneg %p406
        %p569 = pneg %p403
        %s570 = sand.u32 %s393, 1
        %s571 = scalar_lea.sflag [#allocation8], %s570
        %s572 = sand.u32 %s393, 1
        %s573 = smul.addr %s572, 4
        %s574 = scalar_lea.vmem [#allocation12], %s573
        %p575 = scmp.lt.s32.totalorder %s39, 1
        %s576 = scalar_select %p575, %s39, 1
        %s577 = smul.addr %s576, 8
        %s578 = scalar_lea.vmem %s1, %s577
        %p579 = scmp.lt.s32.totalorder %s39, 1
        %s580 = scalar_select %p579, %s39, 1
        %s581 = scalar_lea.vmem %s2, %s580
        %v583 = vld [vmem:[%s578] sm:$0xff]
        %v584 = vld [vmem:[%s3] sm:$0x1]
        %v585 = vld [vmem:[%s4] sm:$0x1]
        %586 = vadd.xlane.f32.xlu0 %v583
        %v587 = vpop.xlane.xlu0 %586
        %v588 = vrcp.pop 128.0
        %v589 = vmul.f32 %v587, %v588
        %v590 = vsub.f32 %v583, %v589
        %v591 = vmul.f32 %v590, %v590
        %592 = vadd.xlane.f32.xlu0 %v591
        %v593 = vpop.xlane.xlu0 %592
        %v594 = vmul.f32 %v593, %v588
        %v595 = vadd.f32 %v594, 1e-12
        %v596 = vrsqrt.pop %v595
        %v597 = vmul.f32 %v590, %v596
        %v599 = vlaneseq
        %v600 = vshrl.u32 %v599, 7
        %v601 = vsub.s32 0, %v600
        %v602 = vrot.slane %v584, %v601
        %v604 = vmul.f32 %v597, %v602
        %v606 = vlaneseq
        %v607 = vshrl.u32 %v606, 7
        %v608 = vsub.s32 0, %v607
        %v609 = vrot.slane %v585, %v608
        %v611 = vadd.f32 %v604, %v609
        %v612 = vld [vmem:[%s581] sm:$0x1]
        %v613 = vpack.c.bf16 %v611, %v611
        %v614 = vld [vmem:[#allocation6] sm:$0xff]
        %v615 = vld [vmem:[#allocation6 + $0x8] sm:$0xf]
        %v616 = vld [vmem:[#allocation6 + $0xc] sm:$0xff]
        %v617 = vld [vmem:[#allocation6 + $0x14] sm:$0xf]
        %v618 = vld [vmem:[#allocation6 + $0x18] sm:$0xff]
        %v619 = vld [vmem:[#allocation6 + $0x20] sm:$0xf]
        %v620 = vld [vmem:[#allocation6 + $0x24] sm:$0xff]
        %v621 = vld [vmem:[#allocation6 + $0x2c] sm:$0xf]
        %v622 = vld [vmem:[#allocation6 + $0x30] sm:$0xff]
        %v623 = vld [vmem:[#allocation6 + $0x38] sm:$0xf]
        %v624 = vld [vmem:[#allocation6 + $0x3c] sm:$0xff]
        %v625 = vld [vmem:[#allocation6 + $0x44] sm:$0xf]
        %v626 = vld [vmem:[#allocation6 + $0x48] sm:$0xff]
        %v627 = vld [vmem:[#allocation6 + $0x50] sm:$0xf]
        %v628 = vld [vmem:[#allocation6 + $0x54] sm:$0xff]
        %v629 = vld [vmem:[#allocation6 + $0x5c] sm:$0xf]
        %v630 = vld [vmem:[#allocation6 + $0x60] sm:$0xff]
        %v631 = vld [vmem:[#allocation6 + $0x68] sm:$0xf]
        %v632 = vld [vmem:[#allocation6 + $0x6c] sm:$0xff]
        %v633 = vld [vmem:[#allocation6 + $0x74] sm:$0xf]
        %v634 = vld [vmem:[#allocation6 + $0x78] sm:$0xff]
        %v635 = vld [vmem:[#allocation6 + $0x80] sm:$0xf]
        %v636 = vld [vmem:[#allocation6 + $0x84] sm:$0xff]
        %v637 = vld [vmem:[#allocation6 + $0x8c] sm:$0xf]
        %v638 = vld [vmem:[#allocation6 + $0x90] sm:$0xff]
        %v639 = vld [vmem:[#allocation6 + $0x98] sm:$0xf]
        %v640 = vld [vmem:[#allocation6 + $0x9c] sm:$0xff]
        %v641 = vld [vmem:[#allocation6 + $0xa4] sm:$0xf]
        %v642 = vld [vmem:[#allocation6 + $0xa8] sm:$0xff]
        %v643 = vld [vmem:[#allocation6 + $0xb0] sm:$0xf]
        %v644 = vld [vmem:[#allocation6 + $0xb4] sm:$0xff]
        %v645 = vld [vmem:[#allocation6 + $0xbc] sm:$0xf]
        %v646 = vld [vmem:[%s6] sm:$0x7]
        %v648 = vlaneseq
        %v649 = vshrl.u32 %v648, 7
        %v650 = vsub.s32 0, %v649
        %v651 = vrot.slane %v646, %v650
        %v652 = vlaneseq
        %v653 = vshrl.u32 %v652, 7
        %v654 = vsub.s32 1, %v653
        %v655 = vrot.slane %v646, %v654
        %v656 = vlaneseq
        %v657 = vshrl.u32 %v656, 7
        %v658 = vsub.s32 2, %v657
        %v659 = vrot.slane %v646, %v658
        %v695 = vunpack.c.l.b16 %v614
        %v696 = vunpack.c.h.b16 %v614
        %v697 = vunpack.c.l.b16 %v615
        %v698 = vunpack.c.l.b16 %v616
        %v699 = vunpack.c.h.b16 %v616
        %v700 = vunpack.c.l.b16 %v617
        %v701 = vunpack.c.l.b16 %v618
        %v702 = vunpack.c.h.b16 %v618
        %v703 = vunpack.c.l.b16 %v619
        %v704 = vunpack.c.l.b16 %v620
        %v705 = vunpack.c.h.b16 %v620
        %v706 = vunpack.c.l.b16 %v621
        %v707 = vunpack.c.l.b16 %v622
        %v708 = vunpack.c.h.b16 %v622
        %v709 = vunpack.c.l.b16 %v623
        %v710 = vunpack.c.l.b16 %v624
        %v711 = vunpack.c.h.b16 %v624
        %v712 = vunpack.c.l.b16 %v625
        %v713 = vunpack.c.l.b16 %v626
        %v714 = vunpack.c.h.b16 %v626
        %v715 = vunpack.c.l.b16 %v627
        %v716 = vunpack.c.l.b16 %v628
        %v717 = vunpack.c.h.b16 %v628
        %v718 = vunpack.c.l.b16 %v629
        %v719 = vunpack.c.l.b16 %v630
        %v720 = vunpack.c.h.b16 %v630
        %v721 = vunpack.c.l.b16 %v631
        %v722 = vunpack.c.l.b16 %v632
        %v723 = vunpack.c.h.b16 %v632
        %v724 = vunpack.c.l.b16 %v633
        %v725 = vunpack.c.l.b16 %v634
        %v726 = vunpack.c.h.b16 %v634
        %v727 = vunpack.c.l.b16 %v635
        %v728 = vunpack.c.l.b16 %v636
        %v729 = vunpack.c.h.b16 %v636
        %v730 = vunpack.c.l.b16 %v637
        %v731 = vunpack.c.l.b16 %v638
        %v732 = vunpack.c.h.b16 %v638
        %v733 = vunpack.c.l.b16 %v639
        %v734 = vunpack.c.l.b16 %v640
        %v735 = vunpack.c.h.b16 %v640
        %v736 = vunpack.c.l.b16 %v641
        %v737 = vunpack.c.l.b16 %v642
        %v738 = vunpack.c.h.b16 %v642
        %v739 = vunpack.c.l.b16 %v643
        %v740 = vunpack.c.l.b16 %v644
        %v741 = vunpack.c.h.b16 %v644
        %v742 = vunpack.c.l.b16 %v645
        %v743 = vpack.c.b16 %v698, %v695
        %v744 = vpack.c.b16 %v699, %v696
        %v745 = vpack.c.b16 %v700, %v697
        %v746 = vpack.c.b16 %v704, %v701
        %v747 = vpack.c.b16 %v705, %v702
        %v748 = vpack.c.b16 %v706, %v703
        %v749 = vpack.c.b16 %v710, %v707
        %v750 = vpack.c.b16 %v711, %v708
        %v751 = vpack.c.b16 %v712, %v709
        %v752 = vpack.c.b16 %v716, %v713
        %v753 = vpack.c.b16 %v717, %v714
        %v754 = vpack.c.b16 %v718, %v715
        %v755 = vpack.c.b16 %v722, %v719
        %v756 = vpack.c.b16 %v723, %v720
        %v757 = vpack.c.b16 %v724, %v721
        %v758 = vpack.c.b16 %v728, %v725
        %v759 = vpack.c.b16 %v729, %v726
        %v760 = vpack.c.b16 %v730, %v727
        %v761 = vpack.c.b16 %v734, %v731
        %v762 = vpack.c.b16 %v735, %v732
        %v763 = vpack.c.b16 %v736, %v733
        %v764 = vpack.c.b16 %v740, %v737
        %v765 = vpack.c.b16 %v741, %v738
        %v766 = vpack.c.b16 %v742, %v739
        %791 = vmatprep.subr.bf16.mxu0 %v765
        %792 = vmatpush1.bf16.msra.mxu0 %v764
        %793 = vmatprep.subr.bf16.mxu0 %v762
        %794 = vmatpush1.bf16.msra.mxu0 %v761
        %795 = vmatprep.subr.bf16.mxu0 %v759
        %796 = vmatpush1.bf16.msra.mxu0 %v758
        %797 = vmatprep.subr.bf16.mxu0 %v756
        %798 = vmatpush1.bf16.msra.mxu0 %v755
        %799 = vmatprep.subr.bf16.mxu0 %v753
        %800 = vmatpush1.bf16.msra.mxu0 %v752
        %801 = vmatprep.subr.bf16.mxu0 %v750
        %802 = vmatpush1.bf16.msra.mxu0 %v749
        %803 = vmatprep.subr.bf16.mxu0 %v747
        %804 = vmatpush1.bf16.msra.mxu0 %v746
        %805 = vmatprep.subr.bf16.mxu0 %v744
        %806 = vmatpush1.bf16.msra.mxu0 %v743
        %807 = vmatprep.subr.bf16.mxu0 0
        %808 = vmatpush2.bf16.msra.mxu0 0
        %809 = vmatprep.subr.bf16.mxu0 0
        %810 = vmatpush2.bf16.msra.mxu0 0
        %811 = vmatprep.subr.bf16.mxu0 0
        %812 = vmatpush2.bf16.msra.mxu0 0
        %813 = vmatprep.subr.bf16.mxu0 0
        %814 = vmatpush2.bf16.msra.mxu0 0
        %815 = vmatprep.subr.bf16.mxu0 0
        %816 = vmatpush2.bf16.msra.mxu0 0
        %817 = vmatprep.subr.bf16.mxu0 0
        %818 = vmatpush2.bf16.msra.mxu0 0
        %819 = vmatprep.subr.bf16.mxu0 0
        %820 = vmatpush2.bf16.msra.mxu0 0
        %821 = vmatprep.subr.bf16.mxu0 0
        %822 = vmatpush2.bf16.msra.mxu0 0
        %823 = vmatprep.mubr.bf16.mxu0 0
        %824 = vmatmul.mubr.bf16.gmra.mxu0 %v613
        %v825 = vpop.f32.mrf.mxu0
        %v826 = vadd.f32 %v651, %v825
        %v827 = vpop.f32.mrf.mxu0
        %v828 = vadd.f32 %v655, %v827
        %v829 = vpop.f32.mrf.mxu0
        %v830 = vpop.f32.mrf.mxu0
        %831 = vdwg.mxu0
        %832 = vmatprep.subr.bf16.mxu0 0
        %833 = vmatpush1.bf16.msra.mxu0 %v766
        %834 = vmatprep.subr.bf16.mxu0 0
        %835 = vmatpush1.bf16.msra.mxu0 %v763
        %836 = vmatprep.subr.bf16.mxu0 0
        %837 = vmatpush1.bf16.msra.mxu0 %v760
        %838 = vmatprep.subr.bf16.mxu0 0
        %839 = vmatpush1.bf16.msra.mxu0 %v757
        %840 = vmatprep.subr.bf16.mxu0 0
        %841 = vmatpush1.bf16.msra.mxu0 %v754
        %842 = vmatprep.subr.bf16.mxu0 0
        %843 = vmatpush1.bf16.msra.mxu0 %v751
        %844 = vmatprep.subr.bf16.mxu0 0
        %845 = vmatpush1.bf16.msra.mxu0 %v748
        %846 = vmatprep.subr.bf16.mxu0 0
        %847 = vmatpush1.bf16.msra.mxu0 %v745
        %848 = vmatprep.subr.bf16.mxu0 0
        %849 = vmatpush2.bf16.msra.mxu0 0
        %850 = vmatprep.subr.bf16.mxu0 0
        %851 = vmatpush2.bf16.msra.mxu0 0
        %852 = vmatprep.subr.bf16.mxu0 0
        %853 = vmatpush2.bf16.msra.mxu0 0
        %854 = vmatprep.subr.bf16.mxu0 0
        %855 = vmatpush2.bf16.msra.mxu0 0
        %856 = vmatprep.subr.bf16.mxu0 0
        %857 = vmatpush2.bf16.msra.mxu0 0
        %858 = vmatprep.subr.bf16.mxu0 0
        %859 = vmatpush2.bf16.msra.mxu0 0
        %860 = vmatprep.subr.bf16.mxu0 0
        %861 = vmatpush2.bf16.msra.mxu0 0
        %862 = vmatprep.subr.bf16.mxu0 0
        %863 = vmatpush2.bf16.msra.mxu0 0
        %864 = vmatprep.mubr.bf16.mxu0 0
        %865 = vmatmul.mubr.bf16.gmra.mxu0 %v613
        %v866 = vpop.f32.mrf.mxu0
        %v867 = vadd.f32 %v659, %v866
        %v868 = vpop.f32.mrf.mxu0
        %v869 = vpop.f32.mrf.mxu0
        %v870 = vpop.f32.mrf.mxu0
        %871 = vdwg.mxu0
        %v872 = vpack.c.bf16 %v826, %v826
        %v873 = vpack.c.bf16 %v828, %v828
        %v874 = vpack.c.bf16 %v867, %v867
        %v876 = vlaneseq
        %v877 = vshrl.u32 %v876, 7
        %v878 = vsub.s32 0, %v877
        %v879 = vrot.slane %v612, %v878
        %vm881 = vcmask 523264
        %v883 = vsel %vm881, %v872, 0
        %v886 = vsel %vm881, %v873, 0
        %888 = vmatprep.subr.bf16.mxu0 0
        %889 = vmatpush1.bf16.xpose.msra.mxu0 0
        %890 = vmatprep.subr.bf16.mxu0 0
        %891 = vmatpush1.bf16.xpose.msra.mxu0 0
        %892 = vmatprep.subr.bf16.mxu0 0
        %893 = vmatpush1.bf16.xpose.msra.mxu0 0
        %894 = vmatprep.subr.bf16.mxu0 0
        %895 = vmatpush1.bf16.xpose.msra.mxu0 0
        %896 = vmatprep.subr.bf16.mxu0 0
        %897 = vmatpush1.bf16.xpose.msra.mxu0 0
        %898 = vmatprep.subr.bf16.mxu0 0
        %899 = vmatpush1.bf16.xpose.msra.mxu0 0
        %900 = vmatprep.subr.bf16.mxu0 0
        %901 = vmatpush1.bf16.xpose.msra.mxu0 0
        %902 = vmatprep.subr.bf16.mxu0 0
        %903 = vmatpush1.bf16.xpose.msra.mxu0 %v886
        %904 = vmatprep.subr.bf16.mxu0 0
        %905 = vmatpush2.bf16.xpose.msra.mxu0 0
        %906 = vmatprep.subr.bf16.mxu0 0
        %907 = vmatpush2.bf16.xpose.msra.mxu0 0
        %908 = vmatprep.subr.bf16.mxu0 0
        %909 = vmatpush2.bf16.xpose.msra.mxu0 0
        %910 = vmatprep.subr.bf16.mxu0 0
        %911 = vmatpush2.bf16.xpose.msra.mxu0 0
        %912 = vmatprep.subr.bf16.mxu0 0
        %913 = vmatpush2.bf16.xpose.msra.mxu0 0
        %914 = vmatprep.subr.bf16.mxu0 0
        %915 = vmatpush2.bf16.xpose.msra.mxu0 0
        %916 = vmatprep.subr.bf16.mxu0 0
        %917 = vmatpush2.bf16.xpose.msra.mxu0 0
        %918 = vmatprep.subr.bf16.mxu0 0
        %919 = vmatpush2.bf16.xpose.msra.mxu0 0
        %920 = vmatprep.mubr.bf16.mxu0 0
        %921 = vmatmul.mubr.bf16.gmra.mxu0 %v883
        %v922 = vpop.f32.mrf.mxu0
        %v923 = vadd.f32 %v879, %v922
        %v924 = vpop.f32.mrf.mxu0
        %v925 = vpop.f32.mrf.mxu0
        %v926 = vpop.f32.mrf.mxu0
        %927 = vdwg.mxu0
        %vm928 = vcmask 64512
        %v929 = vsel %vm928, %v923, -inf
        %930 = vmax.xlane.f32.xlu0 %v929
        %v931 = vpop.xlane.xlu0 %930
        %v932 = vsub.f32 %v923, %v931
        %v933 = vmul.f32 %v932, 1.442695
        %v934 = vpow.pop %v933
        %v935 = vsel %vm928, %v934, 0.0
        %936 = vadd.xlane.f32.xlu0 %v935
        %v937 = vpop.xlane.xlu0 %936
        %v938 = vrcp.pop %v937
        %v939 = vmul.f32 %v934, %v938
        %v940 = vpack.c.bf16 %v939, %v939
        %v942 = vsel %vm928, %v940, 0
        %vm944 = vcmask 1043456
        %v946 = vsel %vm944, %v874, 0
        %948 = vmatprep.subr.bf16.mxu0 0
        %949 = vmatpush1.bf16.msra.mxu0 0
        %950 = vmatprep.subr.bf16.mxu0 0
        %951 = vmatpush1.bf16.msra.mxu0 0
        %952 = vmatprep.subr.bf16.mxu0 0
        %953 = vmatpush1.bf16.msra.mxu0 0
        %954 = vmatprep.subr.bf16.mxu0 0
        %955 = vmatpush1.bf16.msra.mxu0 0
        %956 = vmatprep.subr.bf16.mxu0 0
        %957 = vmatpush1.bf16.msra.mxu0 0
        %958 = vmatprep.subr.bf16.mxu0 0
        %959 = vmatpush1.bf16.msra.mxu0 0
        %960 = vmatprep.subr.bf16.mxu0 0
        %961 = vmatpush1.bf16.msra.mxu0 0
        %962 = vmatprep.subr.bf16.mxu0 0
        %963 = vmatpush1.bf16.msra.mxu0 %v946
        %964 = vmatprep.subr.bf16.mxu0 0
        %965 = vmatpush2.bf16.msra.mxu0 0
        %966 = vmatprep.subr.bf16.mxu0 0
        %967 = vmatpush2.bf16.msra.mxu0 0
        %968 = vmatprep.subr.bf16.mxu0 0
        %969 = vmatpush2.bf16.msra.mxu0 0
        %970 = vmatprep.subr.bf16.mxu0 0
        %971 = vmatpush2.bf16.msra.mxu0 0
        %972 = vmatprep.subr.bf16.mxu0 0
        %973 = vmatpush2.bf16.msra.mxu0 0
        %974 = vmatprep.subr.bf16.mxu0 0
        %975 = vmatpush2.bf16.msra.mxu0 0
        %976 = vmatprep.subr.bf16.mxu0 0
        %977 = vmatpush2.bf16.msra.mxu0 0
        %978 = vmatprep.subr.bf16.mxu0 0
        %979 = vmatpush2.bf16.msra.mxu0 0
        %980 = vmatprep.mubr.bf16.mxu0 0
        %981 = vmatmul.mubr.bf16.gmra.mxu0 %v942
        %v982 = vpop.f32.mrf.mxu0
        %v983 = vadd.f32 0.0, %v982
        %v984 = vpop.f32.mrf.mxu0
        %v985 = vpop.f32.mrf.mxu0
        %v986 = vpop.f32.mrf.mxu0
        %987 = vdwg.mxu0
        %988 = vst.msk [vmem:[#allocation2] sm:$0xff] %vm881, %v983
        %990 = vrot.lane.b32.xlu0 %v872, 64
        %v991 = vpop.permute.xlu0 %990
        %993 = vrot.lane.b32.xlu0 %v873, 64
        %v994 = vpop.permute.xlu0 %993
        %v996 = vsel %vm881, %v991, 0
        %v999 = vsel %vm881, %v994, 0
        %1001 = vmatprep.subr.bf16.mxu0 0
        %1002 = vmatpush1.bf16.xpose.msra.mxu0 0
        %1003 = vmatprep.subr.bf16.mxu0 0
        %1004 = vmatpush1.bf16.xpose.msra.mxu0 0
        %1005 = vmatprep.subr.bf16.mxu0 0
        %1006 = vmatpush1.bf16.xpose.msra.mxu0 0
        %1007 = vmatprep.subr.bf16.mxu0 0
        %1008 = vmatpush1.bf16.xpose.msra.mxu0 0
        %1009 = vmatprep.subr.bf16.mxu0 0
        %1010 = vmatpush1.bf16.xpose.msra.mxu0 0
        %1011 = vmatprep.subr.bf16.mxu0 0
        %1012 = vmatpush1.bf16.xpose.msra.mxu0 0
        %1013 = vmatprep.subr.bf16.mxu0 0
        %1014 = vmatpush1.bf16.xpose.msra.mxu0 0
        %1015 = vmatprep.subr.bf16.mxu0 0
        %1016 = vmatpush1.bf16.xpose.msra.mxu0 %v999
        %1017 = vmatprep.subr.bf16.mxu0 0
        %1018 = vmatpush2.bf16.xpose.msra.mxu0 0
        %1019 = vmatprep.subr.bf16.mxu0 0
        %1020 = vmatpush2.bf16.xpose.msra.mxu0 0
        %1021 = vmatprep.subr.bf16.mxu0 0
        %1022 = vmatpush2.bf16.xpose.msra.mxu0 0
        %1023 = vmatprep.subr.bf16.mxu0 0
        %1024 = vmatpush2.bf16.xpose.msra.mxu0 0
        %1025 = vmatprep.subr.bf16.mxu0 0
        %1026 = vmatpush2.bf16.xpose.msra.mxu0 0
        %1027 = vmatprep.subr.bf16.mxu0 0
        %1028 = vmatpush2.bf16.xpose.msra.mxu0 0
        %1029 = vmatprep.subr.bf16.mxu0 0
        %1030 = vmatpush2.bf16.xpose.msra.mxu0 0
        %1031 = vmatprep.subr.bf16.mxu0 0
        %1032 = vmatpush2.bf16.xpose.msra.mxu0 0
        %1033 = vmatprep.mubr.bf16.mxu0 0
        %1034 = vmatmul.mubr.bf16.gmra.mxu0 %v996
        %v1035 = vpop.f32.mrf.mxu0
        %v1036 = vadd.f32 %v879, %v1035
        %v1037 = vpop.f32.mrf.mxu0
        %v1038 = vpop.f32.mrf.mxu0
        %v1039 = vpop.f32.mrf.mxu0
        %1040 = vdwg.mxu0
        %v1041 = vsel %vm928, %v1036, -inf
        %1042 = vmax.xlane.f32.xlu0 %v1041
        %v1043 = vpop.xlane.xlu0 %1042
        %v1044 = vsub.f32 %v1036, %v1043
        %v1045 = vmul.f32 %v1044, 1.442695
        %v1046 = vpow.pop %v1045
        %v1047 = vsel %vm928, %v1046, 0.0
        %1048 = vadd.xlane.f32.xlu0 %v1047
        %v1049 = vpop.xlane.xlu0 %1048
        %v1050 = vrcp.pop %v1049
        %v1051 = vmul.f32 %v1046, %v1050
        %v1052 = vpack.c.bf16 %v1051, %v1051
        %1054 = vrot.lane.b32.xlu0 %v874, 64
        %v1055 = vpop.permute.xlu0 %1054
        %v1057 = vsel %vm928, %v1052, 0
        %v1060 = vsel %vm944, %v1055, 0
        %1062 = vmatprep.subr.bf16.mxu0 0
        %1063 = vmatpush1.bf16.msra.mxu0 0
        %1064 = vmatprep.subr.bf16.mxu0 0
        %1065 = vmatpush1.bf16.msra.mxu0 0
        %1066 = vmatprep.subr.bf16.mxu0 0
        %1067 = vmatpush1.bf16.msra.mxu0 0
        %1068 = vmatprep.subr.bf16.mxu0 0
        %1069 = vmatpush1.bf16.msra.mxu0 0
        %1070 = vmatprep.subr.bf16.mxu0 0
        %1071 = vmatpush1.bf16.msra.mxu0 0
        %1072 = vmatprep.subr.bf16.mxu0 0
        %1073 = vmatpush1.bf16.msra.mxu0 0
        %1074 = vmatprep.subr.bf16.mxu0 0
        %1075 = vmatpush1.bf16.msra.mxu0 0
        %1076 = vmatprep.subr.bf16.mxu0 0
        %1077 = vmatpush1.bf16.msra.mxu0 %v1060
        %1078 = vmatprep.subr.bf16.mxu0 0
        %1079 = vmatpush2.bf16.msra.mxu0 0
        %1080 = vmatprep.subr.bf16.mxu0 0
        %1081 = vmatpush2.bf16.msra.mxu0 0
        %1082 = vmatprep.subr.bf16.mxu0 0
        %1083 = vmatpush2.bf16.msra.mxu0 0
        %1084 = vmatprep.subr.bf16.mxu0 0
        %1085 = vmatpush2.bf16.msra.mxu0 0
        %1086 = vmatprep.subr.bf16.mxu0 0
        %1087 = vmatpush2.bf16.msra.mxu0 0
        %1088 = vmatprep.subr.bf16.mxu0 0
        %1089 = vmatpush2.bf16.msra.mxu0 0
        %1090 = vmatprep.subr.bf16.mxu0 0
        %1091 = vmatpush2.bf16.msra.mxu0 0
        %1092 = vmatprep.subr.bf16.mxu0 0
        %1093 = vmatpush2.bf16.msra.mxu0 0
        %1094 = vmatprep.mubr.bf16.mxu0 0
        %1095 = vmatmul.mubr.bf16.gmra.mxu0 %v1057
        %v1096 = vpop.f32.mrf.mxu0
        %v1097 = vadd.f32 0.0, %v1096
        %v1098 = vpop.f32.mrf.mxu0
        %v1099 = vpop.f32.mrf.mxu0
        %v1100 = vpop.f32.mrf.mxu0
        %1101 = vdwg.mxu0
        %1103 = vrot.lane.b32.xlu0 %v1097, 64
        %v1104 = vpop.permute.xlu0 %1103
        %vm1106 = vcmask 1048064
        %1107 = vst.msk [vmem:[#allocation2] sm:$0xff] %vm1106, %v1104
        %v1108 = vld [vmem:[#allocation2] sm:$0xff]
        %v1109 = vpack.c.bf16 %v1108, %v1108
        %v1110 = vld [vmem:[%s7] sm:$0xf]
        %v1111 = vld [vmem:[%s7 + $0x4] sm:$0xf]
        %v1112 = vld [vmem:[%s7 + $0x8] sm:$0xf]
        %v1113 = vld [vmem:[%s7 + $0xc] sm:$0xf]
        %v1114 = vld [vmem:[%s7 + $0x10] sm:$0xf]
        %v1115 = vld [vmem:[%s7 + $0x14] sm:$0xf]
        %v1116 = vld [vmem:[%s7 + $0x18] sm:$0xf]
        %v1117 = vld [vmem:[%s7 + $0x1c] sm:$0xf]
        %v1118 = vld [vmem:[%s7 + $0x20] sm:$0xf]
        %v1119 = vld [vmem:[%s7 + $0x24] sm:$0xf]
        %v1120 = vld [vmem:[%s7 + $0x28] sm:$0xf]
        %v1121 = vld [vmem:[%s7 + $0x2c] sm:$0xf]
        %v1122 = vld [vmem:[%s7 + $0x30] sm:$0xf]
        %v1123 = vld [vmem:[%s7 + $0x34] sm:$0xf]
        %v1124 = vld [vmem:[%s7 + $0x38] sm:$0xf]
        %v1125 = vld [vmem:[%s7 + $0x3c] sm:$0xf]
        %v1126 = vld [vmem:[%s8] sm:$0x1]
        %v1128 = vlaneseq
        %v1129 = vshrl.u32 %v1128, 7
        %v1130 = vsub.s32 0, %v1129
        %v1131 = vrot.slane %v1126, %v1130
        %v1149 = vunpack.c.l.b16 %v1110
        %v1150 = vunpack.c.l.b16 %v1111
        %v1151 = vunpack.c.l.b16 %v1112
        %v1152 = vunpack.c.l.b16 %v1113
        %v1153 = vunpack.c.l.b16 %v1114
        %v1154 = vunpack.c.l.b16 %v1115
        %v1155 = vunpack.c.l.b16 %v1116
        %v1156 = vunpack.c.l.b16 %v1117
        %v1157 = vunpack.c.l.b16 %v1118
        %v1158 = vunpack.c.l.b16 %v1119
        %v1159 = vunpack.c.l.b16 %v1120
        %v1160 = vunpack.c.l.b16 %v1121
        %v1161 = vunpack.c.l.b16 %v1122
        %v1162 = vunpack.c.l.b16 %v1123
        %v1163 = vunpack.c.l.b16 %v1124
        %v1164 = vunpack.c.l.b16 %v1125
        %v1165 = vpack.c.b16 %v1150, %v1149
        %v1166 = vpack.c.b16 %v1152, %v1151
        %v1167 = vpack.c.b16 %v1154, %v1153
        %v1168 = vpack.c.b16 %v1156, %v1155
        %v1169 = vpack.c.b16 %v1158, %v1157
        %v1170 = vpack.c.b16 %v1160, %v1159
        %v1171 = vpack.c.b16 %v1162, %v1161
        %v1172 = vpack.c.b16 %v1164, %v1163
        %1181 = vmatprep.subr.bf16.mxu0 0
        %1182 = vmatpush1.bf16.msra.mxu0 %v1172
        %1183 = vmatprep.subr.bf16.mxu0 0
        %1184 = vmatpush1.bf16.msra.mxu0 %v1171
        %1185 = vmatprep.subr.bf16.mxu0 0
        %1186 = vmatpush1.bf16.msra.mxu0 %v1170
        %1187 = vmatprep.subr.bf16.mxu0 0
        %1188 = vmatpush1.bf16.msra.mxu0 %v1169
        %1189 = vmatprep.subr.bf16.mxu0 0
        %1190 = vmatpush1.bf16.msra.mxu0 %v1168
        %1191 = vmatprep.subr.bf16.mxu0 0
        %1192 = vmatpush1.bf16.msra.mxu0 %v1167
        %1193 = vmatprep.subr.bf16.mxu0 0
        %1194 = vmatpush1.bf16.msra.mxu0 %v1166
        %1195 = vmatprep.subr.bf16.mxu0 0
        %1196 = vmatpush1.bf16.msra.mxu0 %v1165
        %1197 = vmatprep.subr.bf16.mxu0 0
        %1198 = vmatpush2.bf16.msra.mxu0 0
        %1199 = vmatprep.subr.bf16.mxu0 0
        %1200 = vmatpush2.bf16.msra.mxu0 0
        %1201 = vmatprep.subr.bf16.mxu0 0
        %1202 = vmatpush2.bf16.msra.mxu0 0
        %1203 = vmatprep.subr.bf16.mxu0 0
        %1204 = vmatpush2.bf16.msra.mxu0 0
        %1205 = vmatprep.subr.bf16.mxu0 0
        %1206 = vmatpush2.bf16.msra.mxu0 0
        %1207 = vmatprep.subr.bf16.mxu0 0
        %1208 = vmatpush2.bf16.msra.mxu0 0
        %1209 = vmatprep.subr.bf16.mxu0 0
        %1210 = vmatpush2.bf16.msra.mxu0 0
        %1211 = vmatprep.subr.bf16.mxu0 0
        %1212 = vmatpush2.bf16.msra.mxu0 0
        %1213 = vmatprep.mubr.bf16.mxu0 0
        %1214 = vmatmul.mubr.bf16.gmra.mxu0 %v1109
        %v1215 = vpop.f32.mrf.mxu0
        %v1216 = vadd.f32 %v1131, %v1215
        %v1217 = vpop.f32.mrf.mxu0
        %v1218 = vpop.f32.mrf.mxu0
        %v1219 = vpop.f32.mrf.mxu0
        %1220 = vdwg.mxu0
        %v1221 = vadd.f32 %v611, %v1216
        %v1222 = vld [vmem:[%s9] sm:$0x1]
        %v1223 = vld [vmem:[%s10] sm:$0x1]
        %1224 = vadd.xlane.f32.xlu0 %v1221
        %v1225 = vpop.xlane.xlu0 %1224
        %v1226 = vmul.f32 %v1225, %v588
        %v1227 = vsub.f32 %v1221, %v1226
        %v1228 = vmul.f32 %v1227, %v1227
        %1229 = vadd.xlane.f32.xlu0 %v1228
        %v1230 = vpop.xlane.xlu0 %1229
        %v1231 = vmul.f32 %v1230, %v588
        %v1232 = vadd.f32 %v1231, 1e-12
        %v1233 = vrsqrt.pop %v1232
        %v1234 = vmul.f32 %v1227, %v1233
        %v1236 = vlaneseq
        %v1237 = vshrl.u32 %v1236, 7
        %v1238 = vsub.s32 0, %v1237
        %v1239 = vrot.slane %v1222, %v1238
        %v1241 = vmul.f32 %v1234, %v1239
        %v1243 = vlaneseq
        %v1244 = vshrl.u32 %v1243, 7
        %v1245 = vsub.s32 0, %v1244
        %v1246 = vrot.slane %v1223, %v1245
        %v1248 = vadd.f32 %v1241, %v1246
        %v1249 = vpack.c.bf16 %v1248, %v1248
        %v1250 = vld [vmem:[#allocation9] sm:$0xff]
        %v1251 = vld [vmem:[#allocation9 + $0x8] sm:$0xff]
        %v1252 = vld [vmem:[#allocation9 + $0x10] sm:$0xff]
        %v1253 = vld [vmem:[#allocation9 + $0x18] sm:$0xff]
        %v1254 = vld [vmem:[#allocation9 + $0x20] sm:$0xff]
        %v1255 = vld [vmem:[#allocation9 + $0x28] sm:$0xff]
        %v1256 = vld [vmem:[#allocation9 + $0x30] sm:$0xff]
        %v1257 = vld [vmem:[#allocation9 + $0x38] sm:$0xff]
        %v1258 = vld [vmem:[#allocation9 + $0x40] sm:$0xff]
        %v1259 = vld [vmem:[#allocation9 + $0x48] sm:$0xff]
        %v1260 = vld [vmem:[#allocation9 + $0x50] sm:$0xff]
        %v1261 = vld [vmem:[#allocation9 + $0x58] sm:$0xff]
        %v1262 = vld [vmem:[#allocation9 + $0x60] sm:$0xff]
        %v1263 = vld [vmem:[#allocation9 + $0x68] sm:$0xff]
        %v1264 = vld [vmem:[#allocation9 + $0x70] sm:$0xff]
        %v1265 = vld [vmem:[#allocation9 + $0x78] sm:$0xff]
        %v1266 = vld [vmem:[%s12] sm:$0x3]
        %v1268 = vlaneseq
        %v1269 = vshrl.u32 %v1268, 7
        %v1270 = vsub.s32 0, %v1269
        %v1271 = vrot.slane %v1266, %v1270
        %v1272 = vlaneseq
        %v1273 = vshrl.u32 %v1272, 7
        %v1274 = vsub.s32 1, %v1273
        %v1275 = vrot.slane %v1266, %v1274
        %v1294 = vunpack.c.l.b16 %v1250
        %v1295 = vunpack.c.h.b16 %v1250
        %v1296 = vunpack.c.l.b16 %v1251
        %v1297 = vunpack.c.h.b16 %v1251
        %v1298 = vunpack.c.l.b16 %v1252
        %v1299 = vunpack.c.h.b16 %v1252
        %v1300 = vunpack.c.l.b16 %v1253
        %v1301 = vunpack.c.h.b16 %v1253
        %v1302 = vunpack.c.l.b16 %v1254
        %v1303 = vunpack.c.h.b16 %v1254
        %v1304 = vunpack.c.l.b16 %v1255
        %v1305 = vunpack.c.h.b16 %v1255
        %v1306 = vunpack.c.l.b16 %v1256
        %v1307 = vunpack.c.h.b16 %v1256
        %v1308 = vunpack.c.l.b16 %v1257
        %v1309 = vunpack.c.h.b16 %v1257
        %v1310 = vunpack.c.l.b16 %v1258
        %v1311 = vunpack.c.h.b16 %v1258
        %v1312 = vunpack.c.l.b16 %v1259
        %v1313 = vunpack.c.h.b16 %v1259
        %v1314 = vunpack.c.l.b16 %v1260
        %v1315 = vunpack.c.h.b16 %v1260
        %v1316 = vunpack.c.l.b16 %v1261
        %v1317 = vunpack.c.h.b16 %v1261
        %v1318 = vunpack.c.l.b16 %v1262
        %v1319 = vunpack.c.h.b16 %v1262
        %v1320 = vunpack.c.l.b16 %v1263
        %v1321 = vunpack.c.h.b16 %v1263
        %v1322 = vunpack.c.l.b16 %v1264
        %v1323 = vunpack.c.h.b16 %v1264
        %v1324 = vunpack.c.l.b16 %v1265
        %v1325 = vunpack.c.h.b16 %v1265
        %v1326 = vpack.c.b16 %v1296, %v1294
        %v1327 = vpack.c.b16 %v1297, %v1295
        %v1328 = vpack.c.b16 %v1300, %v1298
        %v1329 = vpack.c.b16 %v1301, %v1299
        %v1330 = vpack.c.b16 %v1304, %v1302
        %v1331 = vpack.c.b16 %v1305, %v1303
        %v1332 = vpack.c.b16 %v1308, %v1306
        %v1333 = vpack.c.b16 %v1309, %v1307
        %v1334 = vpack.c.b16 %v1312, %v1310
        %v1335 = vpack.c.b16 %v1313, %v1311
        %v1336 = vpack.c.b16 %v1316, %v1314
        %v1337 = vpack.c.b16 %v1317, %v1315
        %v1338 = vpack.c.b16 %v1320, %v1318
        %v1339 = vpack.c.b16 %v1321, %v1319
        %v1340 = vpack.c.b16 %v1324, %v1322
        %v1341 = vpack.c.b16 %v1325, %v1323
        %1358 = vmatprep.subr.bf16.mxu0 %v1341
        %1359 = vmatpush1.bf16.msra.mxu0 %v1340
        %1360 = vmatprep.subr.bf16.mxu0 %v1339
        %1361 = vmatpush1.bf16.msra.mxu0 %v1338
        %1362 = vmatprep.subr.bf16.mxu0 %v1337
        %1363 = vmatpush1.bf16.msra.mxu0 %v1336
        %1364 = vmatprep.subr.bf16.mxu0 %v1335
        %1365 = vmatpush1.bf16.msra.mxu0 %v1334
        %1366 = vmatprep.subr.bf16.mxu0 %v1333
        %1367 = vmatpush1.bf16.msra.mxu0 %v1332
        %1368 = vmatprep.subr.bf16.mxu0 %v1331
        %1369 = vmatpush1.bf16.msra.mxu0 %v1330
        %1370 = vmatprep.subr.bf16.mxu0 %v1329
        %1371 = vmatpush1.bf16.msra.mxu0 %v1328
        %1372 = vmatprep.subr.bf16.mxu0 %v1327
        %1373 = vmatpush1.bf16.msra.mxu0 %v1326
        %1374 = vmatprep.subr.bf16.mxu0 0
        %1375 = vmatpush2.bf16.msra.mxu0 0
        %1376 = vmatprep.subr.bf16.mxu0 0
        %1377 = vmatpush2.bf16.msra.mxu0 0
        %1378 = vmatprep.subr.bf16.mxu0 0
        %1379 = vmatpush2.bf16.msra.mxu0 0
        %1380 = vmatprep.subr.bf16.mxu0 0
        %1381 = vmatpush2.bf16.msra.mxu0 0
        %1382 = vmatprep.subr.bf16.mxu0 0
        %1383 = vmatpush2.bf16.msra.mxu0 0
        %1384 = vmatprep.subr.bf16.mxu0 0
        %1385 = vmatpush2.bf16.msra.mxu0 0
        %1386 = vmatprep.subr.bf16.mxu0 0
        %1387 = vmatpush2.bf16.msra.mxu0 0
        %1388 = vmatprep.subr.bf16.mxu0 0
        %1389 = vmatpush2.bf16.msra.mxu0 0
        %1390 = vmatprep.mubr.bf16.mxu0 0
        %1391 = vmatmul.mubr.bf16.gmra.mxu0 %v1249
        %v1392 = vpop.f32.mrf.mxu0
        %v1393 = vadd.f32 %v1271, %v1392
        %v1394 = vpop.f32.mrf.mxu0
        %v1395 = vadd.f32 %v1275, %v1394
        %v1396 = vpop.f32.mrf.mxu0
        %v1397 = vpop.f32.mrf.mxu0
        %1398 = vdwg.mxu0
        %v1399 = vmul.f32 %v1393, %v1393
        %v1400 = vmul.f32 %v1395, %v1395
        %v1401 = vmul.f32 %v1393, %v1399
        %v1402 = vmul.f32 %v1395, %v1400
        %v1403 = vmul.f32 %v1401, 0.044715
        %v1404 = vmul.f32 %v1402, 0.044715
        %v1405 = vadd.f32 %v1393, %v1403
        %v1406 = vadd.f32 %v1395, %v1404
        %v1407 = vmul.f32 %v1405, 0.7978846
        %v1408 = vmul.f32 %v1406, 0.7978846
        %v1409 = vtanh.pop %v1407
        %v1410 = vtanh.pop %v1408
        %v1411 = vadd.f32 %v1409, 1.0
        %v1412 = vadd.f32 %v1410, 1.0
        %v1413 = vmul.f32 %v1411, 0.5
        %v1414 = vmul.f32 %v1412, 0.5
        %v1415 = vmul.f32 %v1393, %v1413
        %v1416 = vmul.f32 %v1395, %v1414
        %v1417 = vpack.c.bf16 %v1415, %v1415
        %v1418 = vpack.c.bf16 %v1416, %v1416
        %v1419 = vld [vmem:[#allocation11] sm:$0xf]
        %v1420 = vld [vmem:[#allocation11 + $0x4] sm:$0xf]
        %v1421 = vld [vmem:[#allocation11 + $0x8] sm:$0xf]
        %v1422 = vld [vmem:[#allocation11 + $0xc] sm:$0xf]
        %v1423 = vld [vmem:[#allocation11 + $0x10] sm:$0xf]
        %v1424 = vld [vmem:[#allocation11 + $0x14] sm:$0xf]
        %v1425 = vld [vmem:[#allocation11 + $0x18] sm:$0xf]
        %v1426 = vld [vmem:[#allocation11 + $0x1c] sm:$0xf]
        %v1427 = vld [vmem:[#allocation11 + $0x20] sm:$0xf]
        %v1428 = vld [vmem:[#allocation11 + $0x24] sm:$0xf]
        %v1429 = vld [vmem:[#allocation11 + $0x28] sm:$0xf]
        %v1430 = vld [vmem:[#allocation11 + $0x2c] sm:$0xf]
        %v1431 = vld [vmem:[#allocation11 + $0x30] sm:$0xf]
        %v1432 = vld [vmem:[#allocation11 + $0x34] sm:$0xf]
        %v1433 = vld [vmem:[#allocation11 + $0x38] sm:$0xf]
        %v1434 = vld [vmem:[#allocation11 + $0x3c] sm:$0xf]
        %v1435 = vld [vmem:[#allocation11 + $0x40] sm:$0xf]
        %v1436 = vld [vmem:[#allocation11 + $0x44] sm:$0xf]
        %v1437 = vld [vmem:[#allocation11 + $0x48] sm:$0xf]
        %v1438 = vld [vmem:[#allocation11 + $0x4c] sm:$0xf]
        %v1439 = vld [vmem:[#allocation11 + $0x50] sm:$0xf]
        %v1440 = vld [vmem:[#allocation11 + $0x54] sm:$0xf]
        %v1441 = vld [vmem:[#allocation11 + $0x58] sm:$0xf]
        %v1442 = vld [vmem:[#allocation11 + $0x5c] sm:$0xf]
        %v1443 = vld [vmem:[#allocation11 + $0x60] sm:$0xf]
        %v1444 = vld [vmem:[#allocation11 + $0x64] sm:$0xf]
        %v1445 = vld [vmem:[#allocation11 + $0x68] sm:$0xf]
        %v1446 = vld [vmem:[#allocation11 + $0x6c] sm:$0xf]
        %v1447 = vld [vmem:[#allocation11 + $0x70] sm:$0xf]
        %v1448 = vld [vmem:[#allocation11 + $0x74] sm:$0xf]
        %v1449 = vld [vmem:[#allocation11 + $0x78] sm:$0xf]
        %v1450 = vld [vmem:[#allocation11 + $0x7c] sm:$0xf]
        %v1451 = vld [vmem:[%s14] sm:$0x1]
        %v1453 = vlaneseq
        %v1454 = vshrl.u32 %v1453, 7
        %v1455 = vsub.s32 0, %v1454
        %v1456 = vrot.slane %v1451, %v1455
        %v1490 = vunpack.c.l.b16 %v1419
        %v1491 = vunpack.c.l.b16 %v1420
        %v1492 = vunpack.c.l.b16 %v1421
        %v1493 = vunpack.c.l.b16 %v1422
        %v1494 = vunpack.c.l.b16 %v1423
        %v1495 = vunpack.c.l.b16 %v1424
        %v1496 = vunpack.c.l.b16 %v1425
        %v1497 = vunpack.c.l.b16 %v1426
        %v1498 = vunpack.c.l.b16 %v1427
        %v1499 = vunpack.c.l.b16 %v1428
        %v1500 = vunpack.c.l.b16 %v1429
        %v1501 = vunpack.c.l.b16 %v1430
        %v1502 = vunpack.c.l.b16 %v1431
        %v1503 = vunpack.c.l.b16 %v1432
        %v1504 = vunpack.c.l.b16 %v1433
        %v1505 = vunpack.c.l.b16 %v1434
        %v1506 = vunpack.c.l.b16 %v1435
        %v1507 = vunpack.c.l.b16 %v1436
        %v1508 = vunpack.c.l.b16 %v1437
        %v1509 = vunpack.c.l.b16 %v1438
        %v1510 = vunpack.c.l.b16 %v1439
        %v1511 = vunpack.c.l.b16 %v1440
        %v1512 = vunpack.c.l.b16 %v1441
        %v1513 = vunpack.c.l.b16 %v1442
        %v1514 = vunpack.c.l.b16 %v1443
        %v1515 = vunpack.c.l.b16 %v1444
        %v1516 = vunpack.c.l.b16 %v1445
        %v1517 = vunpack.c.l.b16 %v1446
        %v1518 = vunpack.c.l.b16 %v1447
        %v1519 = vunpack.c.l.b16 %v1448
        %v1520 = vunpack.c.l.b16 %v1449
        %v1521 = vunpack.c.l.b16 %v1450
        %v1522 = vpack.c.b16 %v1491, %v1490
        %v1523 = vpack.c.b16 %v1493, %v1492
        %v1524 = vpack.c.b16 %v1495, %v1494
        %v1525 = vpack.c.b16 %v1497, %v1496
        %v1526 = vpack.c.b16 %v1499, %v1498
        %v1527 = vpack.c.b16 %v1501, %v1500
        %v1528 = vpack.c.b16 %v1503, %v1502
        %v1529 = vpack.c.b16 %v1505, %v1504
        %v1530 = vpack.c.b16 %v1507, %v1506
        %v1531 = vpack.c.b16 %v1509, %v1508
        %v1532 = vpack.c.b16 %v1511, %v1510
        %v1533 = vpack.c.b16 %v1513, %v1512
        %v1534 = vpack.c.b16 %v1515, %v1514
        %v1535 = vpack.c.b16 %v1517, %v1516
        %v1536 = vpack.c.b16 %v1519, %v1518
        %v1537 = vpack.c.b16 %v1521, %v1520
        %1554 = vmatprep.subr.bf16.mxu0 0
        %1555 = vmatpush1.bf16.msra.mxu0 %v1529
        %1556 = vmatprep.subr.bf16.mxu0 0
        %1557 = vmatpush1.bf16.msra.mxu0 %v1528
        %1558 = vmatprep.subr.bf16.mxu0 0
        %1559 = vmatpush1.bf16.msra.mxu0 %v1527
        %1560 = vmatprep.subr.bf16.mxu0 0
        %1561 = vmatpush1.bf16.msra.mxu0 %v1526
        %1562 = vmatprep.subr.bf16.mxu0 0
        %1563 = vmatpush1.bf16.msra.mxu0 %v1525
        %1564 = vmatprep.subr.bf16.mxu0 0
        %1565 = vmatpush1.bf16.msra.mxu0 %v1524
        %1566 = vmatprep.subr.bf16.mxu0 0
        %1567 = vmatpush1.bf16.msra.mxu0 %v1523
        %1568 = vmatprep.subr.bf16.mxu0 0
        %1569 = vmatpush1.bf16.msra.mxu0 %v1522
        %1570 = vmatprep.subr.bf16.mxu0 0
        %1571 = vmatpush2.bf16.msra.mxu0 %v1537
        %1572 = vmatprep.subr.bf16.mxu0 0
        %1573 = vmatpush2.bf16.msra.mxu0 %v1536
        %1574 = vmatprep.subr.bf16.mxu0 0
        %1575 = vmatpush2.bf16.msra.mxu0 %v1535
        %1576 = vmatprep.subr.bf16.mxu0 0
        %1577 = vmatpush2.bf16.msra.mxu0 %v1534
        %1578 = vmatprep.subr.bf16.mxu0 0
        %1579 = vmatpush2.bf16.msra.mxu0 %v1533
        %1580 = vmatprep.subr.bf16.mxu0 0
        %1581 = vmatpush2.bf16.msra.mxu0 %v1532
        %1582 = vmatprep.subr.bf16.mxu0 0
        %1583 = vmatpush2.bf16.msra.mxu0 %v1531
        %1584 = vmatprep.subr.bf16.mxu0 0
        %1585 = vmatpush2.bf16.msra.mxu0 %v1530
        %1586 = vmatprep.mubr.bf16.mxu0 %v1418
        %1587 = vmatmul.mubr.bf16.gmra.mxu0 %v1417
        %v1588 = vpop.f32.mrf.mxu0
        %v1589 = vadd.f32 %v1456, %v1588
        %v1590 = vpop.f32.mrf.mxu0
        %v1591 = vpop.f32.mrf.mxu0
        %v1592 = vpop.f32.mrf.mxu0
        %1593 = vdwg.mxu0
        %v1594 = vadd.f32 %v1248, %v1589
        %v1595 = vld [vmem:[%s15] sm:$0x1]
        %v1596 = vld [vmem:[%s16] sm:$0x1]
        %1597 = vadd.xlane.f32.xlu0 %v1594
        %v1598 = vpop.xlane.xlu0 %1597
        %v1599 = vmul.f32 %v1598, %v588
        %v1600 = vsub.f32 %v1594, %v1599
        %v1601 = vmul.f32 %v1600, %v1600
        %1602 = vadd.xlane.f32.xlu0 %v1601
        %v1603 = vpop.xlane.xlu0 %1602
        %v1604 = vmul.f32 %v1603, %v588
        %v1605 = vadd.f32 %v1604, 1e-12
        %v1606 = vrsqrt.pop %v1605
        %v1607 = vmul.f32 %v1600, %v1606
        %v1609 = vlaneseq
        %v1610 = vshrl.u32 %v1609, 7
        %v1611 = vsub.s32 0, %v1610
        %v1612 = vrot.slane %v1595, %v1611
        %v1614 = vmul.f32 %v1607, %v1612
        %v1616 = vlaneseq
        %v1617 = vshrl.u32 %v1616, 7
        %v1618 = vsub.s32 0, %v1617
        %v1619 = vrot.slane %v1596, %v1618
        %v1621 = vadd.f32 %v1614, %v1619
        %v1622 = vpack.c.bf16 %v1621, %v1621
        %s1623 = scalar_lea.vmem [#allocation6], 192
        %v1624 = vld [vmem:[%s1623] sm:$0xff]
        %v1625 = vld [vmem:[%s1623 + $0x8] sm:$0xf]
        %v1626 = vld [vmem:[%s1623 + $0xc] sm:$0xff]
        %v1627 = vld [vmem:[%s1623 + $0x14] sm:$0xf]
        %v1628 = vld [vmem:[%s1623 + $0x18] sm:$0xff]
        %v1629 = vld [vmem:[%s1623 + $0x20] sm:$0xf]
        %v1630 = vld [vmem:[%s1623 + $0x24] sm:$0xff]
        %v1631 = vld [vmem:[%s1623 + $0x2c] sm:$0xf]
        %v1632 = vld [vmem:[%s1623 + $0x30] sm:$0xff]
        %v1633 = vld [vmem:[%s1623 + $0x38] sm:$0xf]
        %v1634 = vld [vmem:[%s1623 + $0x3c] sm:$0xff]
        %v1635 = vld [vmem:[%s1623 + $0x44] sm:$0xf]
        %v1636 = vld [vmem:[%s1623 + $0x48] sm:$0xff]
        %v1637 = vld [vmem:[%s1623 + $0x50] sm:$0xf]
        %v1638 = vld [vmem:[%s1623 + $0x54] sm:$0xff]
        %v1639 = vld [vmem:[%s1623 + $0x5c] sm:$0xf]
        %v1640 = vld [vmem:[%s1623 + $0x60] sm:$0xff]
        %v1641 = vld [vmem:[%s1623 + $0x68] sm:$0xf]
        %v1642 = vld [vmem:[%s1623 + $0x6c] sm:$0xff]
        %v1643 = vld [vmem:[%s1623 + $0x74] sm:$0xf]
        %v1644 = vld [vmem:[%s1623 + $0x78] sm:$0xff]
        %v1645 = vld [vmem:[%s1623 + $0x80] sm:$0xf]
        %v1646 = vld [vmem:[%s1623 + $0x84] sm:$0xff]
        %v1647 = vld [vmem:[%s1623 + $0x8c] sm:$0xf]
        %v1648 = vld [vmem:[%s1623 + $0x90] sm:$0xff]
        %v1649 = vld [vmem:[%s1623 + $0x98] sm:$0xf]
        %v1650 = vld [vmem:[%s1623 + $0x9c] sm:$0xff]
        %v1651 = vld [vmem:[%s1623 + $0xa4] sm:$0xf]
        %v1652 = vld [vmem:[%s1623 + $0xa8] sm:$0xff]
        %v1653 = vld [vmem:[%s1623 + $0xb0] sm:$0xf]
        %v1654 = vld [vmem:[%s1623 + $0xb4] sm:$0xff]
        %v1655 = vld [vmem:[%s1623 + $0xbc] sm:$0xf]
        %s1656 = scalar_lea.vmem %s6, 3
        %v1657 = vld [vmem:[%s1656] sm:$0x7]
        %v1659 = vlaneseq
        %v1660 = vshrl.u32 %v1659, 7
        %v1661 = vsub.s32 0, %v1660
        %v1662 = vrot.slane %v1657, %v1661
        %v1663 = vlaneseq
        %v1664 = vshrl.u32 %v1663, 7
        %v1665 = vsub.s32 1, %v1664
        %v1666 = vrot.slane %v1657, %v1665
        %v1667 = vlaneseq
        %v1668 = vshrl.u32 %v1667, 7
        %v1669 = vsub.s32 2, %v1668
        %v1670 = vrot.slane %v1657, %v1669
        %v1706 = vunpack.c.l.b16 %v1624
        %v1707 = vunpack.c.h.b16 %v1624
        %v1708 = vunpack.c.l.b16 %v1625
        %v1709 = vunpack.c.l.b16 %v1626
        %v1710 = vunpack.c.h.b16 %v1626
        %v1711 = vunpack.c.l.b16 %v1627
        %v1712 = vunpack.c.l.b16 %v1628
        %v1713 = vunpack.c.h.b16 %v1628
        %v1714 = vunpack.c.l.b16 %v1629
        %v1715 = vunpack.c.l.b16 %v1630
        %v1716 = vunpack.c.h.b16 %v1630
        %v1717 = vunpack.c.l.b16 %v1631
        %v1718 = vunpack.c.l.b16 %v1632
        %v1719 = vunpack.c.h.b16 %v1632
        %v1720 = vunpack.c.l.b16 %v1633
        %v1721 = vunpack.c.l.b16 %v1634
        %v1722 = vunpack.c.h.b16 %v1634
        %v1723 = vunpack.c.l.b16 %v1635
        %v1724 = vunpack.c.l.b16 %v1636
        %v1725 = vunpack.c.h.b16 %v1636
        %v1726 = vunpack.c.l.b16 %v1637
        %v1727 = vunpack.c.l.b16 %v1638
        %v1728 = vunpack.c.h.b16 %v1638
        %v1729 = vunpack.c.l.b16 %v1639
        %v1730 = vunpack.c.l.b16 %v1640
        %v1731 = vunpack.c.h.b16 %v1640
        %v1732 = vunpack.c.l.b16 %v1641
        %v1733 = vunpack.c.l.b16 %v1642
        %v1734 = vunpack.c.h.b16 %v1642
        %v1735 = vunpack.c.l.b16 %v1643
        %v1736 = vunpack.c.l.b16 %v1644
        %v1737 = vunpack.c.h.b16 %v1644
        %v1738 = vunpack.c.l.b16 %v1645
        %v1739 = vunpack.c.l.b16 %v1646
        %v1740 = vunpack.c.h.b16 %v1646
        %v1741 = vunpack.c.l.b16 %v1647
        %v1742 = vunpack.c.l.b16 %v1648
        %v1743 = vunpack.c.h.b16 %v1648
        %v1744 = vunpack.c.l.b16 %v1649
        %v1745 = vunpack.c.l.b16 %v1650
        %v1746 = vunpack.c.h.b16 %v1650
        %v1747 = vunpack.c.l.b16 %v1651
        %v1748 = vunpack.c.l.b16 %v1652
        %v1749 = vunpack.c.h.b16 %v1652
        %v1750 = vunpack.c.l.b16 %v1653
        %v1751 = vunpack.c.l.b16 %v1654
        %v1752 = vunpack.c.h.b16 %v1654
        %v1753 = vunpack.c.l.b16 %v1655
        %v1754 = vpack.c.b16 %v1709, %v1706
        %v1755 = vpack.c.b16 %v1710, %v1707
        %v1756 = vpack.c.b16 %v1711, %v1708
        %v1757 = vpack.c.b16 %v1715, %v1712
        %v1758 = vpack.c.b16 %v1716, %v1713
        %v1759 = vpack.c.b16 %v1717, %v1714
        %v1760 = vpack.c.b16 %v1721, %v1718
        %v1761 = vpack.c.b16 %v1722, %v1719
        %v1762 = vpack.c.b16 %v1723, %v1720
        %v1763 = vpack.c.b16 %v1727, %v1724
        %v1764 = vpack.c.b16 %v1728, %v1725
        %v1765 = vpack.c.b16 %v1729, %v1726
        %v1766 = vpack.c.b16 %v1733, %v1730
        %v1767 = vpack.c.b16 %v1734, %v1731
        %v1768 = vpack.c.b16 %v1735, %v1732
        %v1769 = vpack.c.b16 %v1739, %v1736
        %v1770 = vpack.c.b16 %v1740, %v1737
        %v1771 = vpack.c.b16 %v1741, %v1738
        %v1772 = vpack.c.b16 %v1745, %v1742
        %v1773 = vpack.c.b16 %v1746, %v1743
        %v1774 = vpack.c.b16 %v1747, %v1744
        %v1775 = vpack.c.b16 %v1751, %v1748
        %v1776 = vpack.c.b16 %v1752, %v1749
        %v1777 = vpack.c.b16 %v1753, %v1750
        %1802 = vmatprep.subr.bf16.mxu0 %v1776
        %1803 = vmatpush1.bf16.msra.mxu0 %v1775
        %1804 = vmatprep.subr.bf16.mxu0 %v1773
        %1805 = vmatpush1.bf16.msra.mxu0 %v1772
        %1806 = vmatprep.subr.bf16.mxu0 %v1770
        %1807 = vmatpush1.bf16.msra.mxu0 %v1769
        %1808 = vmatprep.subr.bf16.mxu0 %v1767
        %1809 = vmatpush1.bf16.msra.mxu0 %v1766
        %1810 = vmatprep.subr.bf16.mxu0 %v1764
        %1811 = vmatpush1.bf16.msra.mxu0 %v1763
        %1812 = vmatprep.subr.bf16.mxu0 %v1761
        %1813 = vmatpush1.bf16.msra.mxu0 %v1760
        %1814 = vmatprep.subr.bf16.mxu0 %v1758
        %1815 = vmatpush1.bf16.msra.mxu0 %v1757
        %1816 = vmatprep.subr.bf16.mxu0 %v1755
        %1817 = vmatpush1.bf16.msra.mxu0 %v1754
        %1818 = vmatprep.subr.bf16.mxu0 0
        %1819 = vmatpush2.bf16.msra.mxu0 0
        %1820 = vmatprep.subr.bf16.mxu0 0
        %1821 = vmatpush2.bf16.msra.mxu0 0
        %1822 = vmatprep.subr.bf16.mxu0 0
        %1823 = vmatpush2.bf16.msra.mxu0 0
        %1824 = vmatprep.subr.bf16.mxu0 0
        %1825 = vmatpush2.bf16.msra.mxu0 0
        %1826 = vmatprep.subr.bf16.mxu0 0
        %1827 = vmatpush2.bf16.msra.mxu0 0
        %1828 = vmatprep.subr.bf16.mxu0 0
        %1829 = vmatpush2.bf16.msra.mxu0 0
        %1830 = vmatprep.subr.bf16.mxu0 0
        %1831 = vmatpush2.bf16.msra.mxu0 0
        %1832 = vmatprep.subr.bf16.mxu0 0
        %1833 = vmatpush2.bf16.msra.mxu0 0
        %1834 = vmatprep.mubr.bf16.mxu0 0
        %1835 = vmatmul.mubr.bf16.gmra.mxu0 %v1622
        %v1836 = vpop.f32.mrf.mxu0
        %v1837 = vadd.f32 %v1662, %v1836
        %v1838 = vpop.f32.mrf.mxu0
        %v1839 = vadd.f32 %v1666, %v1838
        %v1840 = vpop.f32.mrf.mxu0
        %v1841 = vpop.f32.mrf.mxu0
        %1842 = vdwg.mxu0
        %1843 = vmatprep.subr.bf16.mxu0 0
        %1844 = vmatpush1.bf16.msra.mxu0 %v1777
        %1845 = vmatprep.subr.bf16.mxu0 0
        %1846 = vmatpush1.bf16.msra.mxu0 %v1774
        %1847 = vmatprep.subr.bf16.mxu0 0
        %1848 = vmatpush1.bf16.msra.mxu0 %v1771
        %1849 = vmatprep.subr.bf16.mxu0 0
        %1850 = vmatpush1.bf16.msra.mxu0 %v1768
        %1851 = vmatprep.subr.bf16.mxu0 0
        %1852 = vmatpush1.bf16.msra.mxu0 %v1765
        %1853 = vmatprep.subr.bf16.mxu0 0
        %1854 = vmatpush1.bf16.msra.mxu0 %v1762
        %1855 = vmatprep.subr.bf16.mxu0 0
        %1856 = vmatpush1.bf16.msra.mxu0 %v1759
        %1857 = vmatprep.subr.bf16.mxu0 0
        %1858 = vmatpush1.bf16.msra.mxu0 %v1756
        %1859 = vmatprep.subr.bf16.mxu0 0
        %1860 = vmatpush2.bf16.msra.mxu0 0
        %1861 = vmatprep.subr.bf16.mxu0 0
        %1862 = vmatpush2.bf16.msra.mxu0 0
        %1863 = vmatprep.subr.bf16.mxu0 0
        %1864 = vmatpush2.bf16.msra.mxu0 0
        %1865 = vmatprep.subr.bf16.mxu0 0
        %1866 = vmatpush2.bf16.msra.mxu0 0
        %1867 = vmatprep.subr.bf16.mxu0 0
        %1868 = vmatpush2.bf16.msra.mxu0 0
        %1869 = vmatprep.subr.bf16.mxu0 0
        %1870 = vmatpush2.bf16.msra.mxu0 0
        %1871 = vmatprep.subr.bf16.mxu0 0
        %1872 = vmatpush2.bf16.msra.mxu0 0
        %1873 = vmatprep.subr.bf16.mxu0 0
        %1874 = vmatpush2.bf16.msra.mxu0 0
        %1875 = vmatprep.mubr.bf16.mxu0 0
        %1876 = vmatmul.mubr.bf16.gmra.mxu0 %v1622
        %v1877 = vpop.f32.mrf.mxu0
        %v1878 = vadd.f32 %v1670, %v1877
        %v1879 = vpop.f32.mrf.mxu0
        %v1880 = vpop.f32.mrf.mxu0
        %v1881 = vpop.f32.mrf.mxu0
        %1882 = vdwg.mxu0
        %v1883 = vpack.c.bf16 %v1837, %v1837
        %v1884 = vpack.c.bf16 %v1839, %v1839
        %v1885 = vpack.c.bf16 %v1878, %v1878
        %v1887 = vsel %vm881, %v1883, 0
        %v1890 = vsel %vm881, %v1884, 0
        %1892 = vmatprep.subr.bf16.mxu0 0
        %1893 = vmatpush1.bf16.xpose.msra.mxu0 0
        %1894 = vmatprep.subr.bf16.mxu0 0
        %1895 = vmatpush1.bf16.xpose.msra.mxu0 0
        %1896 = vmatprep.subr.bf16.mxu0 0
        %1897 = vmatpush1.bf16.xpose.msra.mxu0 0
        %1898 = vmatprep.subr.bf16.mxu0 0
        %1899 = vmatpush1.bf16.xpose.msra.mxu0 0
        %1900 = vmatprep.subr.bf16.mxu0 0
        %1901 = vmatpush1.bf16.xpose.msra.mxu0 0
        %1902 = vmatprep.subr.bf16.mxu0 0
        %1903 = vmatpush1.bf16.xpose.msra.mxu0 0
        %1904 = vmatprep.subr.bf16.mxu0 0
        %1905 = vmatpush1.bf16.xpose.msra.mxu0 0
        %1906 = vmatprep.subr.bf16.mxu0 0
        %1907 = vmatpush1.bf16.xpose.msra.mxu0 %v1890
        %1908 = vmatprep.subr.bf16.mxu0 0
        %1909 = vmatpush2.bf16.xpose.msra.mxu0 0
        %1910 = vmatprep.subr.bf16.mxu0 0
        %1911 = vmatpush2.bf16.xpose.msra.mxu0 0
        %1912 = vmatprep.subr.bf16.mxu0 0
        %1913 = vmatpush2.bf16.xpose.msra.mxu0 0
        %1914 = vmatprep.subr.bf16.mxu0 0
        %1915 = vmatpush2.bf16.xpose.msra.mxu0 0
        %1916 = vmatprep.subr.bf16.mxu0 0
        %1917 = vmatpush2.bf16.xpose.msra.mxu0 0
        %1918 = vmatprep.subr.bf16.mxu0 0
        %1919 = vmatpush2.bf16.xpose.msra.mxu0 0
        %1920 = vmatprep.subr.bf16.mxu0 0
        %1921 = vmatpush2.bf16.xpose.msra.mxu0 0
        %1922 = vmatprep.subr.bf16.mxu0 0
        %1923 = vmatpush2.bf16.xpose.msra.mxu0 0
        %1924 = vmatprep.mubr.bf16.mxu0 0
        %1925 = vmatmul.mubr.bf16.gmra.mxu0 %v1887
        %v1926 = vpop.f32.mrf.mxu0
        %v1927 = vadd.f32 %v879, %v1926
        %v1928 = vpop.f32.mrf.mxu0
        %v1929 = vpop.f32.mrf.mxu0
        %v1930 = vpop.f32.mrf.mxu0
        %1931 = vdwg.mxu0
        %v1932 = vsel %vm928, %v1927, -inf
        %1933 = vmax.xlane.f32.xlu0 %v1932
        %v1934 = vpop.xlane.xlu0 %1933
        %v1935 = vsub.f32 %v1927, %v1934
        %v1936 = vmul.f32 %v1935, 1.442695
        %v1937 = vpow.pop %v1936
        %v1938 = vsel %vm928, %v1937, 0.0
        %1939 = vadd.xlane.f32.xlu0 %v1938
        %v1940 = vpop.xlane.xlu0 %1939
        %v1941 = vrcp.pop %v1940
        %v1942 = vmul.f32 %v1937, %v1941
        %v1943 = vpack.c.bf16 %v1942, %v1942
        %v1945 = vsel %vm928, %v1943, 0
        %v1948 = vsel %vm944, %v1885, 0
        %1950 = vmatprep.subr.bf16.mxu0 0
        %1951 = vmatpush1.bf16.msra.mxu0 0
        %1952 = vmatprep.subr.bf16.mxu0 0
        %1953 = vmatpush1.bf16.msra.mxu0 0
        %1954 = vmatprep.subr.bf16.mxu0 0
        %1955 = vmatpush1.bf16.msra.mxu0 0
        %1956 = vmatprep.subr.bf16.mxu0 0
        %1957 = vmatpush1.bf16.msra.mxu0 0
        %1958 = vmatprep.subr.bf16.mxu0 0
        %1959 = vmatpush1.bf16.msra.mxu0 0
        %1960 = vmatprep.subr.bf16.mxu0 0
        %1961 = vmatpush1.bf16.msra.mxu0 0
        %1962 = vmatprep.subr.bf16.mxu0 0
        %1963 = vmatpush1.bf16.msra.mxu0 0
        %1964 = vmatprep.subr.bf16.mxu0 0
        %1965 = vmatpush1.bf16.msra.mxu0 %v1948
        %1966 = vmatprep.subr.bf16.mxu0 0
        %1967 = vmatpush2.bf16.msra.mxu0 0
        %1968 = vmatprep.subr.bf16.mxu0 0
        %1969 = vmatpush2.bf16.msra.mxu0 0
        %1970 = vmatprep.subr.bf16.mxu0 0
        %1971 = vmatpush2.bf16.msra.mxu0 0
        %1972 = vmatprep.subr.bf16.mxu0 0
        %1973 = vmatpush2.bf16.msra.mxu0 0
        %1974 = vmatprep.subr.bf16.mxu0 0
        %1975 = vmatpush2.bf16.msra.mxu0 0
        %1976 = vmatprep.subr.bf16.mxu0 0
        %1977 = vmatpush2.bf16.msra.mxu0 0
        %1978 = vmatprep.subr.bf16.mxu0 0
        %1979 = vmatpush2.bf16.msra.mxu0 0
        %1980 = vmatprep.subr.bf16.mxu0 0
        %1981 = vmatpush2.bf16.msra.mxu0 0
        %1982 = vmatprep.mubr.bf16.mxu0 0
        %1983 = vmatmul.mubr.bf16.gmra.mxu0 %v1945
        %v1984 = vpop.f32.mrf.mxu0
        %v1985 = vadd.f32 0.0, %v1984
        %v1986 = vpop.f32.mrf.mxu0
        %v1987 = vpop.f32.mrf.mxu0
        %v1988 = vpop.f32.mrf.mxu0
        %1989 = vdwg.mxu0
        %1990 = vst.msk [vmem:[#allocation2] sm:$0xff] %vm881, %v1985
        %1992 = vrot.lane.b32.xlu0 %v1883, 64
        %v1993 = vpop.permute.xlu0 %1992
        %1995 = vrot.lane.b32.xlu0 %v1884, 64
        %v1996 = vpop.permute.xlu0 %1995
        %v1998 = vsel %vm881, %v1993, 0
        %v2001 = vsel %vm881, %v1996, 0
        %2003 = vmatprep.subr.bf16.mxu0 0
        %2004 = vmatpush1.bf16.xpose.msra.mxu0 0
        %2005 = vmatprep.subr.bf16.mxu0 0
        %2006 = vmatpush1.bf16.xpose.msra.mxu0 0
        %2007 = vmatprep.subr.bf16.mxu0 0
        %2008 = vmatpush1.bf16.xpose.msra.mxu0 0
        %2009 = vmatprep.subr.bf16.mxu0 0
        %2010 = vmatpush1.bf16.xpose.msra.mxu0 0
        %2011 = vmatprep.subr.bf16.mxu0 0
        %2012 = vmatpush1.bf16.xpose.msra.mxu0 0
        %2013 = vmatprep.subr.bf16.mxu0 0
        %2014 = vmatpush1.bf16.xpose.msra.mxu0 0
        %2015 = vmatprep.subr.bf16.mxu0 0
        %2016 = vmatpush1.bf16.xpose.msra.mxu0 0
        %2017 = vmatprep.subr.bf16.mxu0 0
        %2018 = vmatpush1.bf16.xpose.msra.mxu0 %v2001
        %2019 = vmatprep.subr.bf16.mxu0 0
        %2020 = vmatpush2.bf16.xpose.msra.mxu0 0
        %2021 = vmatprep.subr.bf16.mxu0 0
        %2022 = vmatpush2.bf16.xpose.msra.mxu0 0
        %2023 = vmatprep.subr.bf16.mxu0 0
        %2024 = vmatpush2.bf16.xpose.msra.mxu0 0
        %2025 = vmatprep.subr.bf16.mxu0 0
        %2026 = vmatpush2.bf16.xpose.msra.mxu0 0
        %2027 = vmatprep.subr.bf16.mxu0 0
        %2028 = vmatpush2.bf16.xpose.msra.mxu0 0
        %2029 = vmatprep.subr.bf16.mxu0 0
        %2030 = vmatpush2.bf16.xpose.msra.mxu0 0
        %2031 = vmatprep.subr.bf16.mxu0 0
        %2032 = vmatpush2.bf16.xpose.msra.mxu0 0
        %2033 = vmatprep.subr.bf16.mxu0 0
        %2034 = vmatpush2.bf16.xpose.msra.mxu0 0
        %2035 = vmatprep.mubr.bf16.mxu0 0
        %2036 = vmatmul.mubr.bf16.gmra.mxu0 %v1998
        %v2037 = vpop.f32.mrf.mxu0
        %v2038 = vadd.f32 %v879, %v2037
        %v2039 = vpop.f32.mrf.mxu0
        %v2040 = vpop.f32.mrf.mxu0
        %v2041 = vpop.f32.mrf.mxu0
        %2042 = vdwg.mxu0
        %v2043 = vsel %vm928, %v2038, -inf
        %2044 = vmax.xlane.f32.xlu0 %v2043
        %v2045 = vpop.xlane.xlu0 %2044
        %v2046 = vsub.f32 %v2038, %v2045
        %v2047 = vmul.f32 %v2046, 1.442695
        %v2048 = vpow.pop %v2047
        %v2049 = vsel %vm928, %v2048, 0.0
        %2050 = vadd.xlane.f32.xlu0 %v2049
        %v2051 = vpop.xlane.xlu0 %2050
        %v2052 = vrcp.pop %v2051
        %v2053 = vmul.f32 %v2048, %v2052
        %v2054 = vpack.c.bf16 %v2053, %v2053
        %2056 = vrot.lane.b32.xlu0 %v1885, 64
        %v2057 = vpop.permute.xlu0 %2056
        %v2059 = vsel %vm928, %v2054, 0
        %v2062 = vsel %vm944, %v2057, 0
        %2064 = vmatprep.subr.bf16.mxu0 0
        %2065 = vmatpush1.bf16.msra.mxu0 0
        %2066 = vmatprep.subr.bf16.mxu0 0
        %2067 = vmatpush1.bf16.msra.mxu0 0
        %2068 = vmatprep.subr.bf16.mxu0 0
        %2069 = vmatpush1.bf16.msra.mxu0 0
        %2070 = vmatprep.subr.bf16.mxu0 0
        %2071 = vmatpush1.bf16.msra.mxu0 0
        %2072 = vmatprep.subr.bf16.mxu0 0
        %2073 = vmatpush1.bf16.msra.mxu0 0
        %2074 = vmatprep.subr.bf16.mxu0 0
        %2075 = vmatpush1.bf16.msra.mxu0 0
        %2076 = vmatprep.subr.bf16.mxu0 0
        %2077 = vmatpush1.bf16.msra.mxu0 0
        %2078 = vmatprep.subr.bf16.mxu0 0
        %2079 = vmatpush1.bf16.msra.mxu0 %v2062
        %2080 = vmatprep.subr.bf16.mxu0 0
        %2081 = vmatpush2.bf16.msra.mxu0 0
        %2082 = vmatprep.subr.bf16.mxu0 0
        %2083 = vmatpush2.bf16.msra.mxu0 0
        %2084 = vmatprep.subr.bf16.mxu0 0
        %2085 = vmatpush2.bf16.msra.mxu0 0
        %2086 = vmatprep.subr.bf16.mxu0 0
        %2087 = vmatpush2.bf16.msra.mxu0 0
        %2088 = vmatprep.subr.bf16.mxu0 0
        %2089 = vmatpush2.bf16.msra.mxu0 0
        %2090 = vmatprep.subr.bf16.mxu0 0
        %2091 = vmatpush2.bf16.msra.mxu0 0
        %2092 = vmatprep.subr.bf16.mxu0 0
        %2093 = vmatpush2.bf16.msra.mxu0 0
        %2094 = vmatprep.subr.bf16.mxu0 0
        %2095 = vmatpush2.bf16.msra.mxu0 0
        %2096 = vmatprep.mubr.bf16.mxu0 0
        %2097 = vmatmul.mubr.bf16.gmra.mxu0 %v2059
        %v2098 = vpop.f32.mrf.mxu0
        %v2099 = vadd.f32 0.0, %v2098
        %v2100 = vpop.f32.mrf.mxu0
        %v2101 = vpop.f32.mrf.mxu0
        %v2102 = vpop.f32.mrf.mxu0
        %2103 = vdwg.mxu0
        %2105 = vrot.lane.b32.xlu0 %v2099, 64
        %v2106 = vpop.permute.xlu0 %2105
        %2108 = vst.msk [vmem:[#allocation2] sm:$0xff] %vm1106, %v2106
        %v2109 = vld [vmem:[#allocation2] sm:$0xff]
        %v2110 = vpack.c.bf16 %v2109, %v2109
        %s2111 = scalar_lea.vmem %s7, 64
        %v2112 = vld [vmem:[%s2111] sm:$0xf]
        %v2113 = vld [vmem:[%s2111 + $0x4] sm:$0xf]
        %v2114 = vld [vmem:[%s2111 + $0x8] sm:$0xf]
        %v2115 = vld [vmem:[%s2111 + $0xc] sm:$0xf]
        %v2116 = vld [vmem:[%s2111 + $0x10] sm:$0xf]
        %v2117 = vld [vmem:[%s2111 + $0x14] sm:$0xf]
        %v2118 = vld [vmem:[%s2111 + $0x18] sm:$0xf]
        %v2119 = vld [vmem:[%s2111 + $0x1c] sm:$0xf]
        %v2120 = vld [vmem:[%s2111 + $0x20] sm:$0xf]
        %v2121 = vld [vmem:[%s2111 + $0x24] sm:$0xf]
        %v2122 = vld [vmem:[%s2111 + $0x28] sm:$0xf]
        %v2123 = vld [vmem:[%s2111 + $0x2c] sm:$0xf]
        %v2124 = vld [vmem:[%s2111 + $0x30] sm:$0xf]
        %v2125 = vld [vmem:[%s2111 + $0x34] sm:$0xf]
        %v2126 = vld [vmem:[%s2111 + $0x38] sm:$0xf]
        %v2127 = vld [vmem:[%s2111 + $0x3c] sm:$0xf]
        %s2128 = scalar_lea.vmem %s8, 1
        %v2129 = vld [vmem:[%s2128] sm:$0x1]
        %v2131 = vlaneseq
        %v2132 = vshrl.u32 %v2131, 7
        %v2133 = vsub.s32 0, %v2132
        %v2134 = vrot.slane %v2129, %v2133
        %v2152 = vunpack.c.l.b16 %v2112
        %v2153 = vunpack.c.l.b16 %v2113
        %v2154 = vunpack.c.l.b16 %v2114
        %v2155 = vunpack.c.l.b16 %v2115
        %v2156 = vunpack.c.l.b16 %v2116
        %v2157 = vunpack.c.l.b16 %v2117
        %v2158 = vunpack.c.l.b16 %v2118
        %v2159 = vunpack.c.l.b16 %v2119
        %v2160 = vunpack.c.l.b16 %v2120
        %v2161 = vunpack.c.l.b16 %v2121
        %v2162 = vunpack.c.l.b16 %v2122
        %v2163 = vunpack.c.l.b16 %v2123
        %v2164 = vunpack.c.l.b16 %v2124
        %v2165 = vunpack.c.l.b16 %v2125
        %v2166 = vunpack.c.l.b16 %v2126
        %v2167 = vunpack.c.l.b16 %v2127
        %v2168 = vpack.c.b16 %v2153, %v2152
        %v2169 = vpack.c.b16 %v2155, %v2154
        %v2170 = vpack.c.b16 %v2157, %v2156
        %v2171 = vpack.c.b16 %v2159, %v2158
        %v2172 = vpack.c.b16 %v2161, %v2160
        %v2173 = vpack.c.b16 %v2163, %v2162
        %v2174 = vpack.c.b16 %v2165, %v2164
        %v2175 = vpack.c.b16 %v2167, %v2166
        %2184 = vmatprep.subr.bf16.mxu0 0
        %2185 = vmatpush1.bf16.msra.mxu0 %v2175
        %2186 = vmatprep.subr.bf16.mxu0 0
        %2187 = vmatpush1.bf16.msra.mxu0 %v2174
        %2188 = vmatprep.subr.bf16.mxu0 0
        %2189 = vmatpush1.bf16.msra.mxu0 %v2173
        %2190 = vmatprep.subr.bf16.mxu0 0
        %2191 = vmatpush1.bf16.msra.mxu0 %v2172
        %2192 = vmatprep.subr.bf16.mxu0 0
        %2193 = vmatpush1.bf16.msra.mxu0 %v2171
        %2194 = vmatprep.subr.bf16.mxu0 0
        %2195 = vmatpush1.bf16.msra.mxu0 %v2170
        %2196 = vmatprep.subr.bf16.mxu0 0
        %2197 = vmatpush1.bf16.msra.mxu0 %v2169
        %2198 = vmatprep.subr.bf16.mxu0 0
        %2199 = vmatpush1.bf16.msra.mxu0 %v2168
        %2200 = vmatprep.subr.bf16.mxu0 0
        %2201 = vmatpush2.bf16.msra.mxu0 0
        %2202 = vmatprep.subr.bf16.mxu0 0
        %2203 = vmatpush2.bf16.msra.mxu0 0
        %2204 = vmatprep.subr.bf16.mxu0 0
        %2205 = vmatpush2.bf16.msra.mxu0 0
        %2206 = vmatprep.subr.bf16.mxu0 0
        %2207 = vmatpush2.bf16.msra.mxu0 0
        %2208 = vmatprep.subr.bf16.mxu0 0
        %2209 = vmatpush2.bf16.msra.mxu0 0
        %2210 = vmatprep.subr.bf16.mxu0 0
        %2211 = vmatpush2.bf16.msra.mxu0 0
        %2212 = vmatprep.subr.bf16.mxu0 0
        %2213 = vmatpush2.bf16.msra.mxu0 0
        %2214 = vmatprep.subr.bf16.mxu0 0
        %2215 = vmatpush2.bf16.msra.mxu0 0
        %2216 = vmatprep.mubr.bf16.mxu0 0
        %2217 = vmatmul.mubr.bf16.gmra.mxu0 %v2110
        %v2218 = vpop.f32.mrf.mxu0
        %v2219 = vadd.f32 %v2134, %v2218
        %v2220 = vpop.f32.mrf.mxu0
        %v2221 = vpop.f32.mrf.mxu0
        %v2222 = vpop.f32.mrf.mxu0
        %2223 = vdwg.mxu0
        %v2224 = vadd.f32 %v1621, %v2219
        %s2225 = scalar_lea.vmem %s9, 1
        %v2226 = vld [vmem:[%s2225] sm:$0x1]
        %s2227 = scalar_lea.vmem %s10, 1
        %v2228 = vld [vmem:[%s2227] sm:$0x1]
        %2229 = vadd.xlane.f32.xlu0 %v2224
        %v2230 = vpop.xlane.xlu0 %2229
        %v2231 = vmul.f32 %v2230, %v588
        %v2232 = vsub.f32 %v2224, %v2231
        %v2233 = vmul.f32 %v2232, %v2232
        %2234 = vadd.xlane.f32.xlu0 %v2233
        %v2235 = vpop.xlane.xlu0 %2234
        %v2236 = vmul.f32 %v2235, %v588
        %v2237 = vadd.f32 %v2236, 1e-12
        %v2238 = vrsqrt.pop %v2237
        %v2239 = vmul.f32 %v2232, %v2238
        %v2241 = vlaneseq
        %v2242 = vshrl.u32 %v2241, 7
        %v2243 = vsub.s32 0, %v2242
        %v2244 = vrot.slane %v2226, %v2243
        %v2246 = vmul.f32 %v2239, %v2244
        %v2248 = vlaneseq
        %v2249 = vshrl.u32 %v2248, 7
        %v2250 = vsub.s32 0, %v2249
        %v2251 = vrot.slane %v2228, %v2250
        %v2253 = vadd.f32 %v2246, %v2251
        %v2254 = vpack.c.bf16 %v2253, %v2253
        %s2255 = scalar_lea.vmem [#allocation9], 128
        %v2256 = vld [vmem:[%s2255] sm:$0xff]
        %v2257 = vld [vmem:[%s2255 + $0x8] sm:$0xff]
        %v2258 = vld [vmem:[%s2255 + $0x10] sm:$0xff]
        %v2259 = vld [vmem:[%s2255 + $0x18] sm:$0xff]
        %v2260 = vld [vmem:[%s2255 + $0x20] sm:$0xff]
        %v2261 = vld [vmem:[%s2255 + $0x28] sm:$0xff]
        %v2262 = vld [vmem:[%s2255 + $0x30] sm:$0xff]
        %v2263 = vld [vmem:[%s2255 + $0x38] sm:$0xff]
        %v2264 = vld [vmem:[%s2255 + $0x40] sm:$0xff]
        %v2265 = vld [vmem:[%s2255 + $0x48] sm:$0xff]
        %v2266 = vld [vmem:[%s2255 + $0x50] sm:$0xff]
        %v2267 = vld [vmem:[%s2255 + $0x58] sm:$0xff]
        %v2268 = vld [vmem:[%s2255 + $0x60] sm:$0xff]
        %v2269 = vld [vmem:[%s2255 + $0x68] sm:$0xff]
        %v2270 = vld [vmem:[%s2255 + $0x70] sm:$0xff]
        %v2271 = vld [vmem:[%s2255 + $0x78] sm:$0xff]
        %s2272 = scalar_lea.vmem %s12, 2
        %v2273 = vld [vmem:[%s2272] sm:$0x3]
        %v2275 = vlaneseq
        %v2276 = vshrl.u32 %v2275, 7
        %v2277 = vsub.s32 0, %v2276
        %v2278 = vrot.slane %v2273, %v2277
        %v2279 = vlaneseq
        %v2280 = vshrl.u32 %v2279, 7
        %v2281 = vsub.s32 1, %v2280
        %v2282 = vrot.slane %v2273, %v2281
        %v2301 = vunpack.c.l.b16 %v2256
        %v2302 = vunpack.c.h.b16 %v2256
        %v2303 = vunpack.c.l.b16 %v2257
        %v2304 = vunpack.c.h.b16 %v2257
        %v2305 = vunpack.c.l.b16 %v2258
        %v2306 = vunpack.c.h.b16 %v2258
        %v2307 = vunpack.c.l.b16 %v2259
        %v2308 = vunpack.c.h.b16 %v2259
        %v2309 = vunpack.c.l.b16 %v2260
        %v2310 = vunpack.c.h.b16 %v2260
        %v2311 = vunpack.c.l.b16 %v2261
        %v2312 = vunpack.c.h.b16 %v2261
        %v2313 = vunpack.c.l.b16 %v2262
        %v2314 = vunpack.c.h.b16 %v2262
        %v2315 = vunpack.c.l.b16 %v2263
        %v2316 = vunpack.c.h.b16 %v2263
        %v2317 = vunpack.c.l.b16 %v2264
        %v2318 = vunpack.c.h.b16 %v2264
        %v2319 = vunpack.c.l.b16 %v2265
        %v2320 = vunpack.c.h.b16 %v2265
        %v2321 = vunpack.c.l.b16 %v2266
        %v2322 = vunpack.c.h.b16 %v2266
        %v2323 = vunpack.c.l.b16 %v2267
        %v2324 = vunpack.c.h.b16 %v2267
        %v2325 = vunpack.c.l.b16 %v2268
        %v2326 = vunpack.c.h.b16 %v2268
        %v2327 = vunpack.c.l.b16 %v2269
        %v2328 = vunpack.c.h.b16 %v2269
        %v2329 = vunpack.c.l.b16 %v2270
        %v2330 = vunpack.c.h.b16 %v2270
        %v2331 = vunpack.c.l.b16 %v2271
        %v2332 = vunpack.c.h.b16 %v2271
        %v2333 = vpack.c.b16 %v2303, %v2301
        %v2334 = vpack.c.b16 %v2304, %v2302
        %v2335 = vpack.c.b16 %v2307, %v2305
        %v2336 = vpack.c.b16 %v2308, %v2306
        %v2337 = vpack.c.b16 %v2311, %v2309
        %v2338 = vpack.c.b16 %v2312, %v2310
        %v2339 = vpack.c.b16 %v2315, %v2313
        %v2340 = vpack.c.b16 %v2316, %v2314
        %v2341 = vpack.c.b16 %v2319, %v2317
        %v2342 = vpack.c.b16 %v2320, %v2318
        %v2343 = vpack.c.b16 %v2323, %v2321
        %v2344 = vpack.c.b16 %v2324, %v2322
        %v2345 = vpack.c.b16 %v2327, %v2325
        %v2346 = vpack.c.b16 %v2328, %v2326
        %v2347 = vpack.c.b16 %v2331, %v2329
        %v2348 = vpack.c.b16 %v2332, %v2330
        %2365 = vmatprep.subr.bf16.mxu0 %v2348
        %2366 = vmatpush1.bf16.msra.mxu0 %v2347
        %2367 = vmatprep.subr.bf16.mxu0 %v2346
        %2368 = vmatpush1.bf16.msra.mxu0 %v2345
        %2369 = vmatprep.subr.bf16.mxu0 %v2344
        %2370 = vmatpush1.bf16.msra.mxu0 %v2343
        %2371 = vmatprep.subr.bf16.mxu0 %v2342
        %2372 = vmatpush1.bf16.msra.mxu0 %v2341
        %2373 = vmatprep.subr.bf16.mxu0 %v2340
        %2374 = vmatpush1.bf16.msra.mxu0 %v2339
        %2375 = vmatprep.subr.bf16.mxu0 %v2338
        %2376 = vmatpush1.bf16.msra.mxu0 %v2337
        %2377 = vmatprep.subr.bf16.mxu0 %v2336
        %2378 = vmatpush1.bf16.msra.mxu0 %v2335
        %2379 = vmatprep.subr.bf16.mxu0 %v2334
        %2380 = vmatpush1.bf16.msra.mxu0 %v2333
        %2381 = vmatprep.subr.bf16.mxu0 0
        %2382 = vmatpush2.bf16.msra.mxu0 0
        %2383 = vmatprep.subr.bf16.mxu0 0
        %2384 = vmatpush2.bf16.msra.mxu0 0
        %2385 = vmatprep.subr.bf16.mxu0 0
        %2386 = vmatpush2.bf16.msra.mxu0 0
        %2387 = vmatprep.subr.bf16.mxu0 0
        %2388 = vmatpush2.bf16.msra.mxu0 0
        %2389 = vmatprep.subr.bf16.mxu0 0
        %2390 = vmatpush2.bf16.msra.mxu0 0
        %2391 = vmatprep.subr.bf16.mxu0 0
        %2392 = vmatpush2.bf16.msra.mxu0 0
        %2393 = vmatprep.subr.bf16.mxu0 0
        %2394 = vmatpush2.bf16.msra.mxu0 0
        %2395 = vmatprep.subr.bf16.mxu0 0
        %2396 = vmatpush2.bf16.msra.mxu0 0
        %2397 = vmatprep.mubr.bf16.mxu0 0
        %2398 = vmatmul.mubr.bf16.gmra.mxu0 %v2254
        %v2399 = vpop.f32.mrf.mxu0
        %v2400 = vadd.f32 %v2278, %v2399
        %v2401 = vpop.f32.mrf.mxu0
        %v2402 = vadd.f32 %v2282, %v2401
        %v2403 = vpop.f32.mrf.mxu0
        %v2404 = vpop.f32.mrf.mxu0
        %2405 = vdwg.mxu0
        %v2406 = vmul.f32 %v2400, %v2400
        %v2407 = vmul.f32 %v2402, %v2402
        %v2408 = vmul.f32 %v2400, %v2406
        %v2409 = vmul.f32 %v2402, %v2407
        %v2410 = vmul.f32 %v2408, 0.044715
        %v2411 = vmul.f32 %v2409, 0.044715
        %v2412 = vadd.f32 %v2400, %v2410
        %v2413 = vadd.f32 %v2402, %v2411
        %v2414 = vmul.f32 %v2412, 0.7978846
        %v2415 = vmul.f32 %v2413, 0.7978846
        %v2416 = vtanh.pop %v2414
        %v2417 = vtanh.pop %v2415
        %v2418 = vadd.f32 %v2416, 1.0
        %v2419 = vadd.f32 %v2417, 1.0
        %v2420 = vmul.f32 %v2418, 0.5
        %v2421 = vmul.f32 %v2419, 0.5
        %v2422 = vmul.f32 %v2400, %v2420
        %v2423 = vmul.f32 %v2402, %v2421
        %v2424 = vpack.c.bf16 %v2422, %v2422
        %v2425 = vpack.c.bf16 %v2423, %v2423
        %s2426 = scalar_lea.vmem [#allocation11], 128
        %v2427 = vld [vmem:[%s2426] sm:$0xf]
        %v2428 = vld [vmem:[%s2426 + $0x4] sm:$0xf]
        %v2429 = vld [vmem:[%s2426 + $0x8] sm:$0xf]
        %v2430 = vld [vmem:[%s2426 + $0xc] sm:$0xf]
        %v2431 = vld [vmem:[%s2426 + $0x10] sm:$0xf]
        %v2432 = vld [vmem:[%s2426 + $0x14] sm:$0xf]
        %v2433 = vld [vmem:[%s2426 + $0x18] sm:$0xf]
        %v2434 = vld [vmem:[%s2426 + $0x1c] sm:$0xf]
        %v2435 = vld [vmem:[%s2426 + $0x20] sm:$0xf]
        %v2436 = vld [vmem:[%s2426 + $0x24] sm:$0xf]
        %v2437 = vld [vmem:[%s2426 + $0x28] sm:$0xf]
        %v2438 = vld [vmem:[%s2426 + $0x2c] sm:$0xf]
        %v2439 = vld [vmem:[%s2426 + $0x30] sm:$0xf]
        %v2440 = vld [vmem:[%s2426 + $0x34] sm:$0xf]
        %v2441 = vld [vmem:[%s2426 + $0x38] sm:$0xf]
        %v2442 = vld [vmem:[%s2426 + $0x3c] sm:$0xf]
        %v2443 = vld [vmem:[%s2426 + $0x40] sm:$0xf]
        %v2444 = vld [vmem:[%s2426 + $0x44] sm:$0xf]
        %v2445 = vld [vmem:[%s2426 + $0x48] sm:$0xf]
        %v2446 = vld [vmem:[%s2426 + $0x4c] sm:$0xf]
        %v2447 = vld [vmem:[%s2426 + $0x50] sm:$0xf]
        %v2448 = vld [vmem:[%s2426 + $0x54] sm:$0xf]
        %v2449 = vld [vmem:[%s2426 + $0x58] sm:$0xf]
        %v2450 = vld [vmem:[%s2426 + $0x5c] sm:$0xf]
        %v2451 = vld [vmem:[%s2426 + $0x60] sm:$0xf]
        %v2452 = vld [vmem:[%s2426 + $0x64] sm:$0xf]
        %v2453 = vld [vmem:[%s2426 + $0x68] sm:$0xf]
        %v2454 = vld [vmem:[%s2426 + $0x6c] sm:$0xf]
        %v2455 = vld [vmem:[%s2426 + $0x70] sm:$0xf]
        %v2456 = vld [vmem:[%s2426 + $0x74] sm:$0xf]
        %v2457 = vld [vmem:[%s2426 + $0x78] sm:$0xf]
        %v2458 = vld [vmem:[%s2426 + $0x7c] sm:$0xf]
        %s2459 = scalar_lea.vmem %s14, 1
        %v2460 = vld [vmem:[%s2459] sm:$0x1]
        %v2462 = vlaneseq
        %v2463 = vshrl.u32 %v2462, 7
        %v2464 = vsub.s32 0, %v2463
        %v2465 = vrot.slane %v2460, %v2464
        %v2499 = vunpack.c.l.b16 %v2427
        %v2500 = vunpack.c.l.b16 %v2428
        %v2501 = vunpack.c.l.b16 %v2429
        %v2502 = vunpack.c.l.b16 %v2430
        %v2503 = vunpack.c.l.b16 %v2431
        %v2504 = vunpack.c.l.b16 %v2432
        %v2505 = vunpack.c.l.b16 %v2433
        %v2506 = vunpack.c.l.b16 %v2434
        %v2507 = vunpack.c.l.b16 %v2435
        %v2508 = vunpack.c.l.b16 %v2436
        %v2509 = vunpack.c.l.b16 %v2437
        %v2510 = vunpack.c.l.b16 %v2438
        %v2511 = vunpack.c.l.b16 %v2439
        %v2512 = vunpack.c.l.b16 %v2440
        %v2513 = vunpack.c.l.b16 %v2441
        %v2514 = vunpack.c.l.b16 %v2442
        %v2515 = vunpack.c.l.b16 %v2443
        %v2516 = vunpack.c.l.b16 %v2444
        %v2517 = vunpack.c.l.b16 %v2445
        %v2518 = vunpack.c.l.b16 %v2446
        %v2519 = vunpack.c.l.b16 %v2447
        %v2520 = vunpack.c.l.b16 %v2448
        %v2521 = vunpack.c.l.b16 %v2449
        %v2522 = vunpack.c.l.b16 %v2450
        %v2523 = vunpack.c.l.b16 %v2451
        %v2524 = vunpack.c.l.b16 %v2452
        %v2525 = vunpack.c.l.b16 %v2453
        %v2526 = vunpack.c.l.b16 %v2454
        %v2527 = vunpack.c.l.b16 %v2455
        %v2528 = vunpack.c.l.b16 %v2456
        %v2529 = vunpack.c.l.b16 %v2457
        %v2530 = vunpack.c.l.b16 %v2458
        %v2531 = vpack.c.b16 %v2500, %v2499
        %v2532 = vpack.c.b16 %v2502, %v2501
        %v2533 = vpack.c.b16 %v2504, %v2503
        %v2534 = vpack.c.b16 %v2506, %v2505
        %v2535 = vpack.c.b16 %v2508, %v2507
        %v2536 = vpack.c.b16 %v2510, %v2509
        %v2537 = vpack.c.b16 %v2512, %v2511
        %v2538 = vpack.c.b16 %v2514, %v2513
        %v2539 = vpack.c.b16 %v2516, %v2515
        %v2540 = vpack.c.b16 %v2518, %v2517
        %v2541 = vpack.c.b16 %v2520, %v2519
        %v2542 = vpack.c.b16 %v2522, %v2521
        %v2543 = vpack.c.b16 %v2524, %v2523
        %v2544 = vpack.c.b16 %v2526, %v2525
        %v2545 = vpack.c.b16 %v2528, %v2527
        %v2546 = vpack.c.b16 %v2530, %v2529
        %2563 = vmatprep.subr.bf16.mxu0 0
        %2564 = vmatpush1.bf16.msra.mxu0 %v2538
        %2565 = vmatprep.subr.bf16.mxu0 0
        %2566 = vmatpush1.bf16.msra.mxu0 %v2537
        %2567 = vmatprep.subr.bf16.mxu0 0
        %2568 = vmatpush1.bf16.msra.mxu0 %v2536
        %2569 = vmatprep.subr.bf16.mxu0 0
        %2570 = vmatpush1.bf16.msra.mxu0 %v2535
        %2571 = vmatprep.subr.bf16.mxu0 0
        %2572 = vmatpush1.bf16.msra.mxu0 %v2534
        %2573 = vmatprep.subr.bf16.mxu0 0
        %2574 = vmatpush1.bf16.msra.mxu0 %v2533
        %2575 = vmatprep.subr.bf16.mxu0 0
        %2576 = vmatpush1.bf16.msra.mxu0 %v2532
        %2577 = vmatprep.subr.bf16.mxu0 0
        %2578 = vmatpush1.bf16.msra.mxu0 %v2531
        %2579 = vmatprep.subr.bf16.mxu0 0
        %2580 = vmatpush2.bf16.msra.mxu0 %v2546
        %2581 = vmatprep.subr.bf16.mxu0 0
        %2582 = vmatpush2.bf16.msra.mxu0 %v2545
        %2583 = vmatprep.subr.bf16.mxu0 0
        %2584 = vmatpush2.bf16.msra.mxu0 %v2544
        %2585 = vmatprep.subr.bf16.mxu0 0
        %2586 = vmatpush2.bf16.msra.mxu0 %v2543
        %2587 = vmatprep.subr.bf16.mxu0 0
        %2588 = vmatpush2.bf16.msra.mxu0 %v2542
        %2589 = vmatprep.subr.bf16.mxu0 0
        %2590 = vmatpush2.bf16.msra.mxu0 %v2541
        %2591 = vmatprep.subr.bf16.mxu0 0
        %2592 = vmatpush2.bf16.msra.mxu0 %v2540
        %2593 = vmatprep.subr.bf16.mxu0 0
        %2594 = vmatpush2.bf16.msra.mxu0 %v2539
        %2595 = vmatprep.mubr.bf16.mxu0 %v2425
        %2596 = vmatmul.mubr.bf16.gmra.mxu0 %v2424
        %v2597 = vpop.f32.mrf.mxu0
        %v2598 = vadd.f32 %v2465, %v2597
        %v2599 = vpop.f32.mrf.mxu0
        %v2600 = vpop.f32.mrf.mxu0
        %v2601 = vpop.f32.mrf.mxu0
        %2602 = vdwg.mxu0
        %v2603 = vadd.f32 %v2253, %v2598
        %s2604 = scalar_lea.vmem %s15, 1
        %v2605 = vld [vmem:[%s2604] sm:$0x1]
        %s2606 = scalar_lea.vmem %s16, 1
        %v2607 = vld [vmem:[%s2606] sm:$0x1]
        %2608 = vadd.xlane.f32.xlu0 %v2603
        %v2609 = vpop.xlane.xlu0 %2608
        %v2610 = vmul.f32 %v2609, %v588
        %v2611 = vsub.f32 %v2603, %v2610
        %v2612 = vmul.f32 %v2611, %v2611
        %2613 = vadd.xlane.f32.xlu0 %v2612
        %v2614 = vpop.xlane.xlu0 %2613
        %v2615 = vmul.f32 %v2614, %v588
        %v2616 = vadd.f32 %v2615, 1e-12
        %v2617 = vrsqrt.pop %v2616
        %v2618 = vmul.f32 %v2611, %v2617
        %v2620 = vlaneseq
        %v2621 = vshrl.u32 %v2620, 7
        %v2622 = vsub.s32 0, %v2621
        %v2623 = vrot.slane %v2605, %v2622
        %v2625 = vmul.f32 %v2618, %v2623
        %v2627 = vlaneseq
        %v2628 = vshrl.u32 %v2627, 7
        %v2629 = vsub.s32 0, %v2628
        %v2630 = vrot.slane %v2607, %v2629
        %v2632 = vadd.f32 %v2625, %v2630
        %2633 = vst [vmem:[#allocation3] sm:$0xff] %v2632
        %s2634 = smul.u32 %s39, 128
        %s2635 = sld [smem:[#allocation5 + %s2634]]
        %s2636 = scalar_lea.vmem [#allocation3], %s2635
        %v2637 = vld [vmem:[%s2636] sm:$0x1]
        %2638 = vst [vmem:[%s574] sm:$0x1] %v2637
        %s2639 = sadd.s32 %s2634, 1
        %s2640 = sld [smem:[#allocation5 + %s2639]]
        %s2641 = scalar_lea.vmem [#allocation3], %s2640
        %v2642 = vld [vmem:[%s2641] sm:$0x1]
        %2643 = vst [vmem:[%s574 + $0x1] sm:$0x1] %v2642
        %s2644 = sadd.s32 %s2634, 2
        %s2645 = sld [smem:[#allocation5 + %s2644]]
        %s2646 = scalar_lea.vmem [#allocation3], %s2645
        %v2647 = vld [vmem:[%s2646] sm:$0x1]
        %2648 = vst [vmem:[%s574 + $0x2] sm:$0x1] %v2647
        %s2649 = sadd.s32 %s2634, 3
        %s2650 = sld [smem:[#allocation5 + %s2649]]
        %s2651 = scalar_lea.vmem [#allocation3], %s2650
        %v2652 = vld [vmem:[%s2651] sm:$0x1]
        %2653 = vst [vmem:[%s574 + $0x3] sm:$0x1] %v2652
        %s2654 = sand.u32 %s393, 1
        %s2655 = scalar_lea.sflag [#allocation8], %s2654
        %s2656 = sand.u32 %s393, 1
        %s2657 = smul.addr %s2656, 4
        %s2658 = scalar_lea.vmem [#allocation12], %s2657
        // Predicated region
        $region97: #{bert_forward.1} parent=83 // pred_check
          %p2659 = pneg %p403
        $region98: #{bert_forward.1} parent=83 // pred_check_branch
          %2661 = sbr.rel (%p2659) target = $region100
        $region99: #{bert_forward.1} parent=83 // pred_region
          %s2663 = ssub.s32 64, 64
          %2664 = vsyncadd %s2655, %s2663
          %s2665 = smul.addr %s39, 64
          %s2666 = scalar_lea.hbm %s17, %s2665
          %s2668 = sshll.u32 %s2658, 4
          %s2669 = int_to_ptr.vmem [resolvable:$true] %s2668
          %2671 = dma.vmem_to_hbm [thread:$0]  %s2669, 64, %s2666, %s2655
        $region100: #{bert_forward.1} parent=83 // pred_fallthru
          _
      $region84: #{bert_forward.1} parent=5 // pred_fallthru
        _
      %p2672 = scmp.le.s32.totalorder 2, %s34
      // Predicated region
      $region101: #{bert_forward.1} parent=5 // pred_check
        %p2673 = pneg %p2672
      $region102: #{bert_forward.1} parent=5 // pred_check_branch
        %2675 = sbr.rel (%p2673) target = $region104
      $region103: #{bert_forward.1} parent=5 // pred_region
        %s2676 = ssub.s32 %s34, 2
        // Predicated region
        $region105: #{bert_forward.1} parent=103 // pred_check
          %p2677 = pneg %p409
        $region106: #{bert_forward.1} parent=103 // pred_check_branch
          %2679 = sbr.rel (%p2677) target = $region108
        $region107: #{bert_forward.1} parent=103 // pred_region
          %s2680 = sand.u32 %s394, 1
          %s2681 = scalar_lea.sflag [#allocation8], %s2680
          %s2682 = sand.u32 %s394, 1
          %s2683 = smul.addr %s2682, 4
          %s2684 = scalar_lea.vmem [#allocation12], %s2683
          %2685 = dma.done %s2681, 64
        $region108: #{bert_forward.1} parent=103 // pred_fallthru
          _
      $region104: #{bert_forward.1} parent=5 // pred_fallthru
        _
    $region6: #{bert_forward.1} parent=1 // loop_footer
      %s38 = sadd.s32 1, %s34
    $region7: #{bert_forward.1} parent=1 // loop_footer_branch
      %33 = sbr.rel target = $region3
    $region8: #{bert_forward.1} parent=1 // loop_exit
      _
    %2686 = vsyncpa [#allocation7], 1
    %s2687 = scalar_lea.sflag [#allocation7], 1
    %2688 = vsyncpa %s2687, 1
    %2689 = vsyncpa [#allocation10], 1
    %2690 = vsyncpa [#allocation8], 1
    %s2691 = scalar_lea.sflag [#allocation8], 1
    %2692 = vsyncpa %s2691, 1

</llo_original>
